<compile_context>
chip_gen: v7x
topology: tpu7x:2x2x1
jax: 0.10.0
libtpu: 0.0.40
codegen_flags: <defaults>
</compile_context>

<pallas_src>
import jax
import jax.numpy as jnp
from jax.experimental import pallas as pl
from jax.experimental.pallas import tpu as pltpu

N_LATENT = 100
N_CLASSES = 10
IMG_SHAPE = (1, 28, 28)
IMG_FLAT = 1 * 28 * 28      # 784
OUT_PAD = 896               # 7 * 128 -> lane-dense output slab
BN_EPS = 0.8                # nn.BatchNorm1d(out_feat, 0.8) -> eps = 0.8
LRELU_SLOPE = 0.2


def _leaky_relu(x):
    return jnp.where(x > 0, x, LRELU_SLOPE * x)


def _batchnorm(x, gamma, beta):
    # Training-mode BatchNorm1d: biased batch statistics, eps = 0.8. f32 math.
    mu = jnp.mean(x, axis=0, keepdims=True)
    var = jnp.mean((x - mu) * (x - mu), axis=0, keepdims=True)
    return (x - mu) * jax.lax.rsqrt(var + BN_EPS) * gamma + beta


def generator_kernel(
    labels_ref,                       # SMEM (B,)   int32
    noise_ref,                        # VMEM (B, 100) f32
    lut_ref,                          # VMEM (10, 128) f32 = emb @ W1[:10] + b1
    w1n_ref,                          # VMEM (100, 128) bf16 = W1[10:]
    w2_ref, b2_ref, g2_ref, be2_ref,  # (128,256) bf16, (1,256) f32 x3
    w3_ref, b3_ref, g3_ref, be3_ref,  # (256,512) bf16, (1,512) f32 x3
    w4_ref, b4_ref, g4_ref, be4_ref,  # (512,1024) bf16, (1,1024) f32 x3
    w5_ref, b5_ref,                   # (1024,896) bf16 (zero-padded), (1,896) f32
    out_ref,                          # VMEM (B, 896) f32
):
    noise = noise_ref[...]            # (B, 100) f32
    B = noise.shape[0]

    # One-hot(labels) built from SMEM scalar reads + broadcasted_iota compares.
    row_iota = jax.lax.broadcasted_iota(jnp.int32, (B, N_CLASSES), 0)
    cls_iota = jax.lax.broadcasted_iota(jnp.int32, (B, N_CLASSES), 1)
    label_mat = jnp.zeros((B, N_CLASSES), jnp.int32)
    for b in range(B):                # B is small and static
        label_mat = jnp.where(row_iota == b, labels_ref[b], label_mat)
    onehot = (cls_iota == label_mat).astype(jnp.float32)          # (B, 10)

    # Block 1 (embedding + concat folded into the first Linear, bias in LUT):
    #   x = onehot @ (emb @ W1[:10] + b1)  +  noise @ W1[10:]
    x = jnp.dot(onehot, lut_ref[...], preferred_element_type=jnp.float32)
    x = x + jnp.dot(noise.astype(jnp.bfloat16), w1n_ref[...],
                    preferred_element_type=jnp.float32)
    x = _leaky_relu(x)                                            # (B, 128) f32

    # Block 2: Linear(128, 256) + BN + LeakyReLU
    x = jnp.dot(x.astype(jnp.bfloat16), w2_ref[...],
                preferred_element_type=jnp.float32) + b2_ref[...]
    x = _leaky_relu(_batchnorm(x, g2_ref[...], be2_ref[...]))

    # Block 3: Linear(256, 512) + BN + LeakyReLU
    x = jnp.dot(x.astype(jnp.bfloat16), w3_ref[...],
                preferred_element_type=jnp.float32) + b3_ref[...]
    x = _leaky_relu(_batchnorm(x, g3_ref[...], be3_ref[...]))

    # Block 4: Linear(512, 1024) + BN + LeakyReLU
    x = jnp.dot(x.astype(jnp.bfloat16), w4_ref[...],
                preferred_element_type=jnp.float32) + b4_ref[...]
    x = _leaky_relu(_batchnorm(x, g4_ref[...], be4_ref[...]))

    # Output head: Linear(1024, 784 -> 896 lane-padded) + Tanh.
    # Padded weight/bias columns are zero, so pad lanes are inert tanh(0)=0.
    x = jnp.dot(x.astype(jnp.bfloat16), w5_ref[...],
                preferred_element_type=jnp.float32) + b5_ref[...]
    out_ref[...] = jnp.tanh(x)


def init_params(key):
    """Deterministic synthetic parameters with the module's shapes (f32)."""
    dims = [N_LATENT + N_CLASSES, 128, 256, 512, 1024, IMG_FLAT]
    keys = jax.random.split(key, 16)
    p = {}
    p["emb"] = jax.random.normal(keys[0], (N_CLASSES, N_CLASSES), jnp.float32)

    def linear(kw, fan_in, fan_out):
        lim = 1.0 / jnp.sqrt(jnp.float32(fan_in))
        w = jax.random.uniform(kw, (fan_in, fan_out), jnp.float32, -lim, lim)
        b = jax.random.uniform(jax.random.fold_in(kw, 1), (1, fan_out),
                               jnp.float32, -lim, lim)
        return w, b

    p["w1"], p["b1"] = linear(keys[1], dims[0], dims[1])
    p["w2"], p["b2"] = linear(keys[2], dims[1], dims[2])
    p["w3"], p["b3"] = linear(keys[3], dims[2], dims[3])
    p["w4"], p["b4"] = linear(keys[4], dims[3], dims[4])
    p["w5"], p["b5"] = linear(keys[5], dims[4], dims[5])

    # BatchNorm affine params (PyTorch init: weight=1, bias=0).
    for name, d in (("2", 256), ("3", 512), ("4", 1024)):
        p["g" + name] = jnp.ones((1, d), jnp.float32)
        p["be" + name] = jnp.zeros((1, d), jnp.float32)
    return p


def prepare_kernel_params(p):
    """One-time fold / bf16 cast / lane-pad. Reuse the result across calls so
    weights are stored (and DMAed) as bf16 every generation."""
    kp = {}
    # Fold Embedding + first 10 rows of W1 + b1 into a small f32 LUT (10x128).
    kp["lut"] = p["emb"] @ p["w1"][:N_CLASSES, :] + p["b1"]
    kp["w1n"] = p["w1"][N_CLASSES:, :].astype(jnp.bfloat16)       # (100, 128)
    for i in ("2", "3", "4"):
        kp["w" + i] = p["w" + i].astype(jnp.bfloat16)
        kp["b" + i] = p["b" + i]
        kp["g" + i] = p["g" + i]
        kp["be" + i] = p["be" + i]
    pad = OUT_PAD - IMG_FLAT
    kp["w5"] = jnp.pad(p["w5"], ((0, 0), (0, pad))).astype(jnp.bfloat16)
    kp["b5"] = jnp.pad(p["b5"], ((0, 0), (0, pad)))
    return kp


@jax.jit
def generator_forward(noise, labels, kp):
    B = noise.shape[0]
    labels1d = labels.astype(jnp.int32).reshape(B)

    args_in = (
        labels1d, noise, kp["lut"], kp["w1n"],
        kp["w2"], kp["b2"], kp["g2"], kp["be2"],
        kp["w3"], kp["b3"], kp["g3"], kp["be3"],
        kp["w4"], kp["b4"], kp["g4"], kp["be4"],
        kp["w5"], kp["b5"],
    )
    in_specs = ([pl.BlockSpec(memory_space=pltpu.MemorySpace.SMEM)]
                + [pl.BlockSpec(memory_space=pltpu.MemorySpace.VMEM)]
                * (len(args_in) - 1))
    # ~3.2 MiB of bf16 weights + tiny activations: single grid-less invocation.
    # TODO(synk): for large batches, tile the batch axis (parallel grid dim for
    # v7x's two TCs) with a two-pass BatchNorm so batch stats stay exact.
    out = pl.pallas_call(
        generator_kernel,
        out_shape=jax.ShapeDtypeStruct((B, OUT_PAD), jnp.float32),
        in_specs=in_specs,
        out_specs=pl.BlockSpec(memory_space=pltpu.MemorySpace.VMEM),
        compiler_params=pltpu.CompilerParams(vmem_limit_bytes=32 << 20),
    )(*args_in)
    # Glue: drop lane padding, view(B, *img_shape) -> NCHW image.
    return out[:, :IMG_FLAT].reshape(B, *IMG_SHAPE)


if __name__ == "__main__":
    key = jax.random.PRNGKey(0)
    k_param, k_noise, k_label = jax.random.split(key, 3)

    B = 8  # small batch (BatchNorm needs > 1 sample)
    params = init_params(k_param)
    kparams = prepare_kernel_params(params)   # one-time bf16/fold/pad prep
    noise = jax.random.normal(k_noise, (B, N_LATENT), jnp.float32)
    labels = jax.random.randint(k_label, (B,), 0, N_CLASSES, jnp.int32)

    img = generator_forward(noise, labels, kparams)
    jax.block_until_ready(img)

    assert img.shape == (B, 1, 28, 28), img.shape
    assert img.dtype == jnp.float32
    assert bool(jnp.all(jnp.isfinite(img)))
    print("KERNEL_OK")
</pallas_src>

<mosaic_0001>
module attributes {stable_mosaic.version = 11 : i64} {
  func.func @generator_kernel(%arg0: memref<8xi32, #tpu.memory_space<smem>>, %arg1: memref<8x100xf32, #tpu.memory_space<vmem>>, %arg2: memref<10x128xf32, #tpu.memory_space<vmem>>, %arg3: memref<100x128xbf16, #tpu.memory_space<vmem>>, %arg4: memref<128x256xbf16, #tpu.memory_space<vmem>>, %arg5: memref<1x256xf32, #tpu.memory_space<vmem>>, %arg6: memref<1x256xf32, #tpu.memory_space<vmem>>, %arg7: memref<1x256xf32, #tpu.memory_space<vmem>>, %arg8: memref<256x512xbf16, #tpu.memory_space<vmem>>, %arg9: memref<1x512xf32, #tpu.memory_space<vmem>>, %arg10: memref<1x512xf32, #tpu.memory_space<vmem>>, %arg11: memref<1x512xf32, #tpu.memory_space<vmem>>, %arg12: memref<512x1024xbf16, #tpu.memory_space<vmem>>, %arg13: memref<1x1024xf32, #tpu.memory_space<vmem>>, %arg14: memref<1x1024xf32, #tpu.memory_space<vmem>>, %arg15: memref<1x1024xf32, #tpu.memory_space<vmem>>, %arg16: memref<1024x896xbf16, #tpu.memory_space<vmem>>, %arg17: memref<1x896xf32, #tpu.memory_space<vmem>>, %arg18: memref<8x896xf32, #tpu.memory_space<vmem>>) attributes {dimension_semantics = [], scalar_prefetch = 0 : i64, scratch_operands = 0 : i64, tpu.core_type = #tpu.core_type<tc>} {
    %c0 = arith.constant 0 : index
    %c0_0 = arith.constant 0 : index
    %0 = vector.load %arg1[%c0, %c0_0] : memref<8x100xf32, #tpu.memory_space<vmem>>, vector<8x100xf32>
    %1 = tpu.iota {dimensions = array<i32: 0>} : vector<8x10xi32>
    %2 = tpu.iota {dimensions = array<i32: 1>} : vector<8x10xi32>
    %c0_i32 = arith.constant 0 : i32
    %3 = vector.broadcast %c0_i32 : i32 to vector<8x10xi32>
    %c0_i32_1 = arith.constant 0 : i32
    %4 = vector.broadcast %c0_i32_1 : i32 to vector<8x10xi32>
    %5 = arith.cmpi eq, %1, %4 : vector<8x10xi32>
    %c0_2 = arith.constant 0 : index
    %6 = memref.load %arg0[%c0_2] : memref<8xi32, #tpu.memory_space<smem>>
    %7 = vector.broadcast %6 : i32 to vector<8x10xi32>
    %8 = arith.select %5, %7, %3 : vector<8x10xi1>, vector<8x10xi32>
    %c1_i32 = arith.constant 1 : i32
    %9 = vector.broadcast %c1_i32 : i32 to vector<8x10xi32>
    %10 = arith.cmpi eq, %1, %9 : vector<8x10xi32>
    %c1 = arith.constant 1 : index
    %11 = memref.load %arg0[%c1] : memref<8xi32, #tpu.memory_space<smem>>
    %12 = vector.broadcast %11 : i32 to vector<8x10xi32>
    %13 = arith.select %10, %12, %8 : vector<8x10xi1>, vector<8x10xi32>
    %c2_i32 = arith.constant 2 : i32
    %14 = vector.broadcast %c2_i32 : i32 to vector<8x10xi32>
    %15 = arith.cmpi eq, %1, %14 : vector<8x10xi32>
    %c2 = arith.constant 2 : index
    %16 = memref.load %arg0[%c2] : memref<8xi32, #tpu.memory_space<smem>>
    %17 = vector.broadcast %16 : i32 to vector<8x10xi32>
    %18 = arith.select %15, %17, %13 : vector<8x10xi1>, vector<8x10xi32>
    %c3_i32 = arith.constant 3 : i32
    %19 = vector.broadcast %c3_i32 : i32 to vector<8x10xi32>
    %20 = arith.cmpi eq, %1, %19 : vector<8x10xi32>
    %c3 = arith.constant 3 : index
    %21 = memref.load %arg0[%c3] : memref<8xi32, #tpu.memory_space<smem>>
    %22 = vector.broadcast %21 : i32 to vector<8x10xi32>
    %23 = arith.select %20, %22, %18 : vector<8x10xi1>, vector<8x10xi32>
    %c4_i32 = arith.constant 4 : i32
    %24 = vector.broadcast %c4_i32 : i32 to vector<8x10xi32>
    %25 = arith.cmpi eq, %1, %24 : vector<8x10xi32>
    %c4 = arith.constant 4 : index
    %26 = memref.load %arg0[%c4] : memref<8xi32, #tpu.memory_space<smem>>
    %27 = vector.broadcast %26 : i32 to vector<8x10xi32>
    %28 = arith.select %25, %27, %23 : vector<8x10xi1>, vector<8x10xi32>
    %c5_i32 = arith.constant 5 : i32
    %29 = vector.broadcast %c5_i32 : i32 to vector<8x10xi32>
    %30 = arith.cmpi eq, %1, %29 : vector<8x10xi32>
    %c5 = arith.constant 5 : index
    %31 = memref.load %arg0[%c5] : memref<8xi32, #tpu.memory_space<smem>>
    %32 = vector.broadcast %31 : i32 to vector<8x10xi32>
    %33 = arith.select %30, %32, %28 : vector<8x10xi1>, vector<8x10xi32>
    %c6_i32 = arith.constant 6 : i32
    %34 = vector.broadcast %c6_i32 : i32 to vector<8x10xi32>
    %35 = arith.cmpi eq, %1, %34 : vector<8x10xi32>
    %c6 = arith.constant 6 : index
    %36 = memref.load %arg0[%c6] : memref<8xi32, #tpu.memory_space<smem>>
    %37 = vector.broadcast %36 : i32 to vector<8x10xi32>
    %38 = arith.select %35, %37, %33 : vector<8x10xi1>, vector<8x10xi32>
    %c7_i32 = arith.constant 7 : i32
    %39 = vector.broadcast %c7_i32 : i32 to vector<8x10xi32>
    %40 = arith.cmpi eq, %1, %39 : vector<8x10xi32>
    %c7 = arith.constant 7 : index
    %41 = memref.load %arg0[%c7] : memref<8xi32, #tpu.memory_space<smem>>
    %42 = vector.broadcast %41 : i32 to vector<8x10xi32>
    %43 = arith.select %40, %42, %38 : vector<8x10xi1>, vector<8x10xi32>
    %44 = arith.cmpi eq, %2, %43 : vector<8x10xi32>
    %45 = arith.extui %44 : vector<8x10xi1> to vector<8x10xi32>
    %46 = arith.sitofp %45 : vector<8x10xi32> to vector<8x10xf32>
    %c0_3 = arith.constant 0 : index
    %c0_4 = arith.constant 0 : index
    %47 = vector.load %arg2[%c0_3, %c0_4] : memref<10x128xf32, #tpu.memory_space<vmem>>, vector<10x128xf32>
    %cst = arith.constant dense<0.000000e+00> : vector<8x128xf32>
    %48 = tpu.matmul %46, %47, %cst {dimension_numbers = #tpu.dot_dimension_numbers<[1], [0], [0], [1], [0, 0, 1, 1], [], []>} : vector<8x10xf32>, vector<10x128xf32>, vector<8x128xf32> -> vector<8x128xf32>
    %49 = arith.truncf %0 : vector<8x100xf32> to vector<8x100xbf16>
    %c0_5 = arith.constant 0 : index
    %c0_6 = arith.constant 0 : index
    %50 = vector.load %arg3[%c0_5, %c0_6] : memref<100x128xbf16, #tpu.memory_space<vmem>>, vector<100x128xbf16>
    %cst_7 = arith.constant dense<0.000000e+00> : vector<8x128xf32>
    %51 = tpu.matmul %49, %50, %cst_7 {dimension_numbers = #tpu.dot_dimension_numbers<[1], [0], [0], [1], [0, 0, 1, 1], [], []>} : vector<8x100xbf16>, vector<100x128xbf16>, vector<8x128xf32> -> vector<8x128xf32>
    %52 = arith.addf %48, %51 : vector<8x128xf32>
    %cst_8 = arith.constant 0.000000e+00 : f32
    %53 = vector.broadcast %cst_8 : f32 to vector<8x128xf32>
    %54 = arith.cmpf ogt, %52, %53 : vector<8x128xf32>
    %cst_9 = arith.constant 2.000000e-01 : f32
    %55 = vector.broadcast %cst_9 : f32 to vector<8x128xf32>
    %56 = arith.mulf %55, %52 : vector<8x128xf32>
    %57 = arith.select %54, %52, %56 : vector<8x128xi1>, vector<8x128xf32>
    %58 = arith.truncf %57 : vector<8x128xf32> to vector<8x128xbf16>
    %c0_10 = arith.constant 0 : index
    %c0_11 = arith.constant 0 : index
    %59 = vector.load %arg4[%c0_10, %c0_11] : memref<128x256xbf16, #tpu.memory_space<vmem>>, vector<128x256xbf16>
    %cst_12 = arith.constant dense<0.000000e+00> : vector<8x256xf32>
    %60 = tpu.matmul %58, %59, %cst_12 {dimension_numbers = #tpu.dot_dimension_numbers<[1], [0], [0], [1], [0, 0, 1, 1], [], []>} : vector<8x128xbf16>, vector<128x256xbf16>, vector<8x256xf32> -> vector<8x256xf32>
    %c0_13 = arith.constant 0 : index
    %c0_14 = arith.constant 0 : index
    %61 = vector.load %arg5[%c0_13, %c0_14] : memref<1x256xf32, #tpu.memory_space<vmem>>, vector<1x256xf32>
    %62 = vector.broadcast %61 : vector<1x256xf32> to vector<8x256xf32>
    %63 = arith.addf %60, %62 : vector<8x256xf32>
    %c0_15 = arith.constant 0 : index
    %c0_16 = arith.constant 0 : index
    %64 = vector.load %arg6[%c0_15, %c0_16] : memref<1x256xf32, #tpu.memory_space<vmem>>, vector<1x256xf32>
    %c0_17 = arith.constant 0 : index
    %c0_18 = arith.constant 0 : index
    %65 = vector.load %arg7[%c0_17, %c0_18] : memref<1x256xf32, #tpu.memory_space<vmem>>, vector<1x256xf32>
    %cst_19 = arith.constant dense<0.000000e+00> : vector<256xf32>
    %66 = vector.multi_reduction <add>, %63, %cst_19 [0] : vector<8x256xf32> to vector<256xf32>
    %67 = vector.shape_cast %66 : vector<256xf32> to vector<1x256xf32>
    %cst_20 = arith.constant 8.000000e+00 : f32
    %68 = vector.broadcast %cst_20 : f32 to vector<1x256xf32>
    %69 = arith.divf %67, %68 : vector<1x256xf32>
    %70 = vector.broadcast %69 : vector<1x256xf32> to vector<8x256xf32>
    %71 = arith.subf %63, %70 : vector<8x256xf32>
    %72 = vector.broadcast %69 : vector<1x256xf32> to vector<8x256xf32>
    %73 = arith.subf %63, %72 : vector<8x256xf32>
    %74 = arith.mulf %71, %73 : vector<8x256xf32>
    %cst_21 = arith.constant dense<0.000000e+00> : vector<256xf32>
    %75 = vector.multi_reduction <add>, %74, %cst_21 [0] : vector<8x256xf32> to vector<256xf32>
    %76 = vector.shape_cast %75 : vector<256xf32> to vector<1x256xf32>
    %cst_22 = arith.constant 8.000000e+00 : f32
    %77 = vector.broadcast %cst_22 : f32 to vector<1x256xf32>
    %78 = arith.divf %76, %77 : vector<1x256xf32>
    %79 = vector.broadcast %69 : vector<1x256xf32> to vector<8x256xf32>
    %80 = arith.subf %63, %79 : vector<8x256xf32>
    %cst_23 = arith.constant 8.000000e-01 : f32
    %81 = vector.broadcast %cst_23 : f32 to vector<1x256xf32>
    %82 = arith.addf %78, %81 : vector<1x256xf32>
    %83 = math.rsqrt %82 : vector<1x256xf32>
    %84 = vector.broadcast %83 : vector<1x256xf32> to vector<8x256xf32>
    %85 = arith.mulf %80, %84 : vector<8x256xf32>
    %86 = vector.broadcast %64 : vector<1x256xf32> to vector<8x256xf32>
    %87 = arith.mulf %85, %86 : vector<8x256xf32>
    %88 = vector.broadcast %65 : vector<1x256xf32> to vector<8x256xf32>
    %89 = arith.addf %87, %88 : vector<8x256xf32>
    %cst_24 = arith.constant 0.000000e+00 : f32
    %90 = vector.broadcast %cst_24 : f32 to vector<8x256xf32>
    %91 = arith.cmpf ogt, %89, %90 : vector<8x256xf32>
    %cst_25 = arith.constant 2.000000e-01 : f32
    %92 = vector.broadcast %cst_25 : f32 to vector<8x256xf32>
    %93 = arith.mulf %92, %89 : vector<8x256xf32>
    %94 = arith.select %91, %89, %93 : vector<8x256xi1>, vector<8x256xf32>
    %95 = arith.truncf %94 : vector<8x256xf32> to vector<8x256xbf16>
    %c0_26 = arith.constant 0 : index
    %c0_27 = arith.constant 0 : index
    %96 = vector.load %arg8[%c0_26, %c0_27] : memref<256x512xbf16, #tpu.memory_space<vmem>>, vector<256x512xbf16>
    %cst_28 = arith.constant dense<0.000000e+00> : vector<8x512xf32>
    %97 = tpu.matmul %95, %96, %cst_28 {dimension_numbers = #tpu.dot_dimension_numbers<[1], [0], [0], [1], [0, 0, 1, 1], [], []>} : vector<8x256xbf16>, vector<256x512xbf16>, vector<8x512xf32> -> vector<8x512xf32>
    %c0_29 = arith.constant 0 : index
    %c0_30 = arith.constant 0 : index
    %98 = vector.load %arg9[%c0_29, %c0_30] : memref<1x512xf32, #tpu.memory_space<vmem>>, vector<1x512xf32>
    %99 = vector.broadcast %98 : vector<1x512xf32> to vector<8x512xf32>
    %100 = arith.addf %97, %99 : vector<8x512xf32>
    %c0_31 = arith.constant 0 : index
    %c0_32 = arith.constant 0 : index
    %101 = vector.load %arg10[%c0_31, %c0_32] : memref<1x512xf32, #tpu.memory_space<vmem>>, vector<1x512xf32>
    %c0_33 = arith.constant 0 : index
    %c0_34 = arith.constant 0 : index
    %102 = vector.load %arg11[%c0_33, %c0_34] : memref<1x512xf32, #tpu.memory_space<vmem>>, vector<1x512xf32>
    %cst_35 = arith.constant dense<0.000000e+00> : vector<512xf32>
    %103 = vector.multi_reduction <add>, %100, %cst_35 [0] : vector<8x512xf32> to vector<512xf32>
    %104 = vector.shape_cast %103 : vector<512xf32> to vector<1x512xf32>
    %cst_36 = arith.constant 8.000000e+00 : f32
    %105 = vector.broadcast %cst_36 : f32 to vector<1x512xf32>
    %106 = arith.divf %104, %105 : vector<1x512xf32>
    %107 = vector.broadcast %106 : vector<1x512xf32> to vector<8x512xf32>
    %108 = arith.subf %100, %107 : vector<8x512xf32>
    %109 = vector.broadcast %106 : vector<1x512xf32> to vector<8x512xf32>
    %110 = arith.subf %100, %109 : vector<8x512xf32>
    %111 = arith.mulf %108, %110 : vector<8x512xf32>
    %cst_37 = arith.constant dense<0.000000e+00> : vector<512xf32>
    %112 = vector.multi_reduction <add>, %111, %cst_37 [0] : vector<8x512xf32> to vector<512xf32>
    %113 = vector.shape_cast %112 : vector<512xf32> to vector<1x512xf32>
    %cst_38 = arith.constant 8.000000e+00 : f32
    %114 = vector.broadcast %cst_38 : f32 to vector<1x512xf32>
    %115 = arith.divf %113, %114 : vector<1x512xf32>
    %116 = vector.broadcast %106 : vector<1x512xf32> to vector<8x512xf32>
    %117 = arith.subf %100, %116 : vector<8x512xf32>
    %cst_39 = arith.constant 8.000000e-01 : f32
    %118 = vector.broadcast %cst_39 : f32 to vector<1x512xf32>
    %119 = arith.addf %115, %118 : vector<1x512xf32>
    %120 = math.rsqrt %119 : vector<1x512xf32>
    %121 = vector.broadcast %120 : vector<1x512xf32> to vector<8x512xf32>
    %122 = arith.mulf %117, %121 : vector<8x512xf32>
    %123 = vector.broadcast %101 : vector<1x512xf32> to vector<8x512xf32>
    %124 = arith.mulf %122, %123 : vector<8x512xf32>
    %125 = vector.broadcast %102 : vector<1x512xf32> to vector<8x512xf32>
    %126 = arith.addf %124, %125 : vector<8x512xf32>
    %cst_40 = arith.constant 0.000000e+00 : f32
    %127 = vector.broadcast %cst_40 : f32 to vector<8x512xf32>
    %128 = arith.cmpf ogt, %126, %127 : vector<8x512xf32>
    %cst_41 = arith.constant 2.000000e-01 : f32
    %129 = vector.broadcast %cst_41 : f32 to vector<8x512xf32>
    %130 = arith.mulf %129, %126 : vector<8x512xf32>
    %131 = arith.select %128, %126, %130 : vector<8x512xi1>, vector<8x512xf32>
    %132 = arith.truncf %131 : vector<8x512xf32> to vector<8x512xbf16>
    %c0_42 = arith.constant 0 : index
    %c0_43 = arith.constant 0 : index
    %133 = vector.load %arg12[%c0_42, %c0_43] : memref<512x1024xbf16, #tpu.memory_space<vmem>>, vector<512x1024xbf16>
    %cst_44 = arith.constant dense<0.000000e+00> : vector<8x1024xf32>
    %134 = tpu.matmul %132, %133, %cst_44 {dimension_numbers = #tpu.dot_dimension_numbers<[1], [0], [0], [1], [0, 0, 1, 1], [], []>} : vector<8x512xbf16>, vector<512x1024xbf16>, vector<8x1024xf32> -> vector<8x1024xf32>
    %c0_45 = arith.constant 0 : index
    %c0_46 = arith.constant 0 : index
    %135 = vector.load %arg13[%c0_45, %c0_46] : memref<1x1024xf32, #tpu.memory_space<vmem>>, vector<1x1024xf32>
    %136 = vector.broadcast %135 : vector<1x1024xf32> to vector<8x1024xf32>
    %137 = arith.addf %134, %136 : vector<8x1024xf32>
    %c0_47 = arith.constant 0 : index
    %c0_48 = arith.constant 0 : index
    %138 = vector.load %arg14[%c0_47, %c0_48] : memref<1x1024xf32, #tpu.memory_space<vmem>>, vector<1x1024xf32>
    %c0_49 = arith.constant 0 : index
    %c0_50 = arith.constant 0 : index
    %139 = vector.load %arg15[%c0_49, %c0_50] : memref<1x1024xf32, #tpu.memory_space<vmem>>, vector<1x1024xf32>
    %cst_51 = arith.constant dense<0.000000e+00> : vector<1024xf32>
    %140 = vector.multi_reduction <add>, %137, %cst_51 [0] : vector<8x1024xf32> to vector<1024xf32>
    %141 = vector.shape_cast %140 : vector<1024xf32> to vector<1x1024xf32>
    %cst_52 = arith.constant 8.000000e+00 : f32
    %142 = vector.broadcast %cst_52 : f32 to vector<1x1024xf32>
    %143 = arith.divf %141, %142 : vector<1x1024xf32>
    %144 = vector.broadcast %143 : vector<1x1024xf32> to vector<8x1024xf32>
    %145 = arith.subf %137, %144 : vector<8x1024xf32>
    %146 = vector.broadcast %143 : vector<1x1024xf32> to vector<8x1024xf32>
    %147 = arith.subf %137, %146 : vector<8x1024xf32>
    %148 = arith.mulf %145, %147 : vector<8x1024xf32>
    %cst_53 = arith.constant dense<0.000000e+00> : vector<1024xf32>
    %149 = vector.multi_reduction <add>, %148, %cst_53 [0] : vector<8x1024xf32> to vector<1024xf32>
    %150 = vector.shape_cast %149 : vector<1024xf32> to vector<1x1024xf32>
    %cst_54 = arith.constant 8.000000e+00 : f32
    %151 = vector.broadcast %cst_54 : f32 to vector<1x1024xf32>
    %152 = arith.divf %150, %151 : vector<1x1024xf32>
    %153 = vector.broadcast %143 : vector<1x1024xf32> to vector<8x1024xf32>
    %154 = arith.subf %137, %153 : vector<8x1024xf32>
    %cst_55 = arith.constant 8.000000e-01 : f32
    %155 = vector.broadcast %cst_55 : f32 to vector<1x1024xf32>
    %156 = arith.addf %152, %155 : vector<1x1024xf32>
    %157 = math.rsqrt %156 : vector<1x1024xf32>
    %158 = vector.broadcast %157 : vector<1x1024xf32> to vector<8x1024xf32>
    %159 = arith.mulf %154, %158 : vector<8x1024xf32>
    %160 = vector.broadcast %138 : vector<1x1024xf32> to vector<8x1024xf32>
    %161 = arith.mulf %159, %160 : vector<8x1024xf32>
    %162 = vector.broadcast %139 : vector<1x1024xf32> to vector<8x1024xf32>
    %163 = arith.addf %161, %162 : vector<8x1024xf32>
    %cst_56 = arith.constant 0.000000e+00 : f32
    %164 = vector.broadcast %cst_56 : f32 to vector<8x1024xf32>
    %165 = arith.cmpf ogt, %163, %164 : vector<8x1024xf32>
    %cst_57 = arith.constant 2.000000e-01 : f32
    %166 = vector.broadcast %cst_57 : f32 to vector<8x1024xf32>
    %167 = arith.mulf %166, %163 : vector<8x1024xf32>
    %168 = arith.select %165, %163, %167 : vector<8x1024xi1>, vector<8x1024xf32>
    %169 = arith.truncf %168 : vector<8x1024xf32> to vector<8x1024xbf16>
    %c0_58 = arith.constant 0 : index
    %c0_59 = arith.constant 0 : index
    %170 = vector.load %arg16[%c0_58, %c0_59] : memref<1024x896xbf16, #tpu.memory_space<vmem>>, vector<1024x896xbf16>
    %cst_60 = arith.constant dense<0.000000e+00> : vector<8x896xf32>
    %171 = tpu.matmul %169, %170, %cst_60 {dimension_numbers = #tpu.dot_dimension_numbers<[1], [0], [0], [1], [0, 0, 1, 1], [], []>} : vector<8x1024xbf16>, vector<1024x896xbf16>, vector<8x896xf32> -> vector<8x896xf32>
    %c0_61 = arith.constant 0 : index
    %c0_62 = arith.constant 0 : index
    %172 = vector.load %arg17[%c0_61, %c0_62] : memref<1x896xf32, #tpu.memory_space<vmem>>, vector<1x896xf32>
    %173 = vector.broadcast %172 : vector<1x896xf32> to vector<8x896xf32>
    %174 = arith.addf %171, %173 : vector<8x896xf32>
    %175 = math.tanh %174 : vector<8x896xf32>
    %c0_63 = arith.constant 0 : index
    %c0_64 = arith.constant 0 : index
    %176 = vector.load %arg18[%c0_63, %c0_64] : memref<8x896xf32, #tpu.memory_space<vmem>>, vector<8x896xf32>
    tpu.vector_store %arg18[%c0_63, %c0_64], %175 {strides = array<i32>} : memref<8x896xf32, #tpu.memory_space<vmem>>, vector<8x896xf32>,
    return
  }
}

</mosaic_0001>

<llo_original>
// kernel: generator_forward.1
$region0: #{generator_forward.1}
  #allocation0 [shape = 'u32[]', space=smem, size = 0x4, offset = 0x4, fixed_abs, tag = 'smem constant byte address 0x4 - core index']
  #allocation1 [shape = 'u32[144,128]{1,0:T(1,128)}', space=vmem, size = 0x12000, scoped, tag = 'internal scratch']
  %s0 = inlined_call_operand.hbm [shape: s32[8], index: 0, kind: input, shape index: {}]
  %s1 = inlined_call_operand.hbm [shape: f32[8,100], index: 1, kind: input, shape index: {}]
  %s2 = inlined_call_operand.hbm [shape: f32[10,128], index: 2, kind: input, shape index: {}]
  %s3 = inlined_call_operand.hbm [shape: bf16[100,128], index: 3, kind: input, shape index: {}]
  %s4 = inlined_call_operand.hbm [shape: bf16[128,256], index: 4, kind: input, shape index: {}]
  %s5 = inlined_call_operand.hbm [shape: f32[1,256], index: 5, kind: input, shape index: {}]
  %s6 = inlined_call_operand.hbm [shape: f32[1,256], index: 6, kind: input, shape index: {}]
  %s7 = inlined_call_operand.hbm [shape: f32[1,256], index: 7, kind: input, shape index: {}]
  %s8 = inlined_call_operand.hbm [shape: bf16[256,512], index: 8, kind: input, shape index: {}]
  %s9 = inlined_call_operand.hbm [shape: f32[1,512], index: 9, kind: input, shape index: {}]
  %s10 = inlined_call_operand.hbm [shape: f32[1,512], index: 10, kind: input, shape index: {}]
  %s11 = inlined_call_operand.hbm [shape: f32[1,512], index: 11, kind: input, shape index: {}]
  %s12 = inlined_call_operand.hbm [shape: bf16[512,1024], index: 12, kind: input, shape index: {}]
  %s13 = inlined_call_operand.hbm [shape: f32[1,1024], index: 13, kind: input, shape index: {}]
  %s14 = inlined_call_operand.hbm [shape: f32[1,1024], index: 14, kind: input, shape index: {}]
  %s15 = inlined_call_operand.hbm [shape: f32[1,1024], index: 15, kind: input, shape index: {}]
  %s16 = inlined_call_operand.hbm [shape: bf16[1024,896], index: 16, kind: input, shape index: {}]
  %s17 = inlined_call_operand.hbm [shape: f32[1,896], index: 17, kind: input, shape index: {}]
  %s18 = inlined_call_operand.vmem [shape: f32[8,896], index: 18, kind: output, shape index: {}]
  %s19 = sld [smem:[#allocation0]]
  $region154: #{generator_forward.1} parent=0
    _
  %s21 = ssub.s32 1, %s19
  %s22 = scalar_select 0, %s21, %s19
  $region1: #{generator_forward.1} parent=0
    #allocation2 [shape = 'u8[512]{0}', space=smem, size = 0x200, scoped, tag = 'input window, operand 0, single buffered']
    #allocation3 [shape = 's32[1]{0}', space=sflag, size = 0x4, scoped, tag = 'scoped memory for generator_forward.1']
    #allocation4 [shape = 's32[1]{0}', space=sflag, size = 0x4, scoped, tag = 'scoped memory for generator_forward.1']
    #allocation5 [shape = 'u8[4096]{0}', space=vmem, size = 0x1000, scoped, tag = 'input window, operand 1, single buffered']
    #allocation6 [shape = 'u8[8192]{0}', space=vmem, size = 0x2000, scoped, tag = 'input window, operand 2, single buffered']
    #allocation7 [shape = 's32[1]{0}', space=sflag, size = 0x4, scoped, tag = 'scoped memory for generator_forward.1']
    #allocation8 [shape = 'u8[26624]{0}', space=vmem, size = 0x6800, scoped, tag = 'input window, operand 3, single buffered']
    #allocation9 [shape = 'u8[65536]{0}', space=vmem, size = 0x10000, scoped, tag = 'input window, operand 4, single buffered']
    #allocation10 [shape = 's32[1]{0}', space=sflag, size = 0x4, scoped, tag = 'scoped memory for generator_forward.1']
    #allocation11 [shape = 'u8[1024]{0}', space=vmem, size = 0x400, scoped, tag = 'input window, operand 5, single buffered']
    #allocation12 [shape = 'u8[1024]{0}', space=vmem, size = 0x400, scoped, tag = 'input window, operand 6, single buffered']
    #allocation13 [shape = 's32[1]{0}', space=sflag, size = 0x4, scoped, tag = 'scoped memory for generator_forward.1']
    #allocation14 [shape = 'u8[1024]{0}', space=vmem, size = 0x400, scoped, tag = 'input window, operand 7, single buffered']
    #allocation15 [shape = 'u8[262144]{0}', space=vmem, size = 0x40000, scoped, tag = 'input window, operand 8, single buffered']
    #allocation16 [shape = 's32[1]{0}', space=sflag, size = 0x4, scoped, tag = 'scoped memory for generator_forward.1']
    #allocation17 [shape = 'u8[2048]{0}', space=vmem, size = 0x800, scoped, tag = 'input window, operand 9, single buffered']
    #allocation18 [shape = 'u8[2048]{0}', space=vmem, size = 0x800, scoped, tag = 'input window, operand 10, single buffered']
    #allocation19 [shape = 's32[1]{0}', space=sflag, size = 0x4, scoped, tag = 'scoped memory for generator_forward.1']
    #allocation20 [shape = 'u8[2048]{0}', space=vmem, size = 0x800, scoped, tag = 'input window, operand 11, single buffered']
    #allocation21 [shape = 'u8[1048576]{0}', space=vmem, size = 0x100000, scoped, tag = 'input window, operand 12, single buffered']
    #allocation22 [shape = 's32[1]{0}', space=sflag, size = 0x4, scoped, tag = 'scoped memory for generator_forward.1']
    #allocation23 [shape = 'u8[4096]{0}', space=vmem, size = 0x1000, scoped, tag = 'input window, operand 13, single buffered']
    #allocation24 [shape = 'u8[4096]{0}', space=vmem, size = 0x1000, scoped, tag = 'input window, operand 14, single buffered']
    #allocation25 [shape = 's32[1]{0}', space=sflag, size = 0x4, scoped, tag = 'scoped memory for generator_forward.1']
    #allocation26 [shape = 'u8[4096]{0}', space=vmem, size = 0x1000, scoped, tag = 'input window, operand 15, single buffered']
    #allocation27 [shape = 'u8[1835008]{0}', space=vmem, size = 0x1c0000, scoped, tag = 'input window, operand 16, single buffered']
    #allocation28 [shape = 's32[1]{0}', space=sflag, size = 0x4, scoped, tag = 'scoped memory for generator_forward.1']
    #allocation29 [shape = 'u8[3584]{0}', space=vmem, size = 0x1000, scoped, tag = 'input window, operand 17, single buffered']
    %23 = vsyncpa [#allocation4], 0
    %24 = vsyncpa [#allocation3], 0
    %25 = vsyncpa [#allocation7], 0
    %26 = vsyncpa [#allocation10], 0
    %27 = vsyncpa [#allocation13], 0
    %28 = vsyncpa [#allocation16], 0
    %29 = vsyncpa [#allocation19], 0
    %30 = vsyncpa [#allocation22], 0
    %31 = vsyncpa [#allocation25], 0
    %32 = vsyncpa [#allocation28], 0
    // Predicated region
    $region2: #{generator_forward.1} parent=1 // pred_check
      _
    $region3: #{generator_forward.1} parent=1 // pred_check_branch
      %34 = sbr.rel (0) target = $region5
    $region4: #{generator_forward.1} parent=1 // pred_region
      %s36 = ssub.s32 16, 16
      %37 = vsyncadd [#allocation4], %s36
      %40 = dma.hbm_to_smem %s0, 16, [#allocation2], [#allocation4]
    $region5: #{generator_forward.1} parent=1 // pred_fallthru
      _
    // Predicated region
    $region6: #{generator_forward.1} parent=1 // pred_check
      _
    $region7: #{generator_forward.1} parent=1 // pred_check_branch
      %42 = sbr.rel (0) target = $region9
    $region8: #{generator_forward.1} parent=1 // pred_region
      %s44 = ssub.s32 128, 128
      %45 = vsyncadd [#allocation3], %s44
      %s47 = sshll.u32 [#allocation5], 4
      %s48 = int_to_ptr.vmem [resolvable:$true] %s47
      %50 = dma.hbm_to_vmem [thread:$0]  %s1, 128, %s48, [#allocation3]
    $region9: #{generator_forward.1} parent=1 // pred_fallthru
      _
    // Predicated region
    $region10: #{generator_forward.1} parent=1 // pred_check
      _
    $region11: #{generator_forward.1} parent=1 // pred_check_branch
      %52 = sbr.rel (0) target = $region13
    $region12: #{generator_forward.1} parent=1 // pred_region
      %s54 = ssub.s32 256, 256
      %55 = vsyncadd [#allocation7], %s54
      %s56 = sshll.u32 [#allocation6], 4
      %s57 = int_to_ptr.vmem [resolvable:$true] %s56
      %62 = dma.hbm_to_vmem [thread:$0]  %s2, 256, %s57, [#allocation7], 128, 128, 8
    $region13: #{generator_forward.1} parent=1 // pred_fallthru
      _
    // Predicated region
    $region14: #{generator_forward.1} parent=1 // pred_check
      _
    $region15: #{generator_forward.1} parent=1 // pred_check_branch
      %64 = sbr.rel (0) target = $region17
    $region16: #{generator_forward.1} parent=1 // pred_region
      %s66 = ssub.s32 832, 832
      %67 = vsyncadd [#allocation7], %s66
      %s68 = sshll.u32 [#allocation8], 4
      %s69 = int_to_ptr.vmem [resolvable:$true] %s68
      %74 = dma.hbm_to_vmem [thread:$0]  %s3, 832, %s69, [#allocation7], 64, 64, 4
    $region17: #{generator_forward.1} parent=1 // pred_fallthru
      _
    // Predicated region
    $region18: #{generator_forward.1} parent=1 // pred_check
      _
    $region19: #{generator_forward.1} parent=1 // pred_check_branch
      %76 = sbr.rel (0) target = $region21
    $region20: #{generator_forward.1} parent=1 // pred_region
      %s78 = ssub.s32 2048, 2048
      %79 = vsyncadd [#allocation10], %s78
      %s80 = sshll.u32 [#allocation9], 4
      %s81 = int_to_ptr.vmem [resolvable:$true] %s80
      %86 = dma.hbm_to_vmem [thread:$0]  %s4, 2048, %s81, [#allocation10], 128, 128, 8
    $region21: #{generator_forward.1} parent=1 // pred_fallthru
      _
    // Predicated region
    $region22: #{generator_forward.1} parent=1 // pred_check
      _
    $region23: #{generator_forward.1} parent=1 // pred_check_branch
      %88 = sbr.rel (0) target = $region25
    $region24: #{generator_forward.1} parent=1 // pred_region
      %s90 = ssub.s32 32, 32
      %91 = vsyncadd [#allocation10], %s90
      %s93 = sshll.u32 [#allocation11], 4
      %s94 = int_to_ptr.vmem [resolvable:$true] %s93
      %96 = dma.hbm_to_vmem [thread:$0]  %s5, 32, %s94, [#allocation10]
    $region25: #{generator_forward.1} parent=1 // pred_fallthru
      _
    // Predicated region
    $region26: #{generator_forward.1} parent=1 // pred_check
      _
    $region27: #{generator_forward.1} parent=1 // pred_check_branch
      %98 = sbr.rel (0) target = $region29
    $region28: #{generator_forward.1} parent=1 // pred_region
      %s100 = ssub.s32 32, 32
      %101 = vsyncadd [#allocation13], %s100
      %s103 = sshll.u32 [#allocation12], 4
      %s104 = int_to_ptr.vmem [resolvable:$true] %s103
      %106 = dma.hbm_to_vmem [thread:$0]  %s6, 32, %s104, [#allocation13]
    $region29: #{generator_forward.1} parent=1 // pred_fallthru
      _
    // Predicated region
    $region30: #{generator_forward.1} parent=1 // pred_check
      _
    $region31: #{generator_forward.1} parent=1 // pred_check_branch
      %108 = sbr.rel (0) target = $region33
    $region32: #{generator_forward.1} parent=1 // pred_region
      %s110 = ssub.s32 32, 32
      %111 = vsyncadd [#allocation13], %s110
      %s113 = sshll.u32 [#allocation14], 4
      %s114 = int_to_ptr.vmem [resolvable:$true] %s113
      %116 = dma.hbm_to_vmem [thread:$0]  %s7, 32, %s114, [#allocation13]
    $region33: #{generator_forward.1} parent=1 // pred_fallthru
      _
    // Predicated region
    $region34: #{generator_forward.1} parent=1 // pred_check
      _
    $region35: #{generator_forward.1} parent=1 // pred_check_branch
      %118 = sbr.rel (0) target = $region37
    $region36: #{generator_forward.1} parent=1 // pred_region
      %s120 = ssub.s32 8192, 8192
      %121 = vsyncadd [#allocation16], %s120
      %s122 = sshll.u32 [#allocation15], 4
      %s123 = int_to_ptr.vmem [resolvable:$true] %s122
      %128 = dma.hbm_to_vmem [thread:$0]  %s8, 8192, %s123, [#allocation16], 256, 256, 16
    $region37: #{generator_forward.1} parent=1 // pred_fallthru
      _
    // Predicated region
    $region38: #{generator_forward.1} parent=1 // pred_check
      _
    $region39: #{generator_forward.1} parent=1 // pred_check_branch
      %130 = sbr.rel (0) target = $region41
    $region40: #{generator_forward.1} parent=1 // pred_region
      %s132 = ssub.s32 64, 64
      %133 = vsyncadd [#allocation16], %s132
      %s135 = sshll.u32 [#allocation17], 4
      %s136 = int_to_ptr.vmem [resolvable:$true] %s135
      %138 = dma.hbm_to_vmem [thread:$0]  %s9, 64, %s136, [#allocation16]
    $region41: #{generator_forward.1} parent=1 // pred_fallthru
      _
    // Predicated region
    $region42: #{generator_forward.1} parent=1 // pred_check
      _
    $region43: #{generator_forward.1} parent=1 // pred_check_branch
      %140 = sbr.rel (0) target = $region45
    $region44: #{generator_forward.1} parent=1 // pred_region
      %s142 = ssub.s32 64, 64
      %143 = vsyncadd [#allocation19], %s142
      %s145 = sshll.u32 [#allocation18], 4
      %s146 = int_to_ptr.vmem [resolvable:$true] %s145
      %148 = dma.hbm_to_vmem [thread:$0]  %s10, 64, %s146, [#allocation19]
    $region45: #{generator_forward.1} parent=1 // pred_fallthru
      _
    // Predicated region
    $region46: #{generator_forward.1} parent=1 // pred_check
      _
    $region47: #{generator_forward.1} parent=1 // pred_check_branch
      %150 = sbr.rel (0) target = $region49
    $region48: #{generator_forward.1} parent=1 // pred_region
      %s152 = ssub.s32 64, 64
      %153 = vsyncadd [#allocation19], %s152
      %s155 = sshll.u32 [#allocation20], 4
      %s156 = int_to_ptr.vmem [resolvable:$true] %s155
      %158 = dma.hbm_to_vmem [thread:$0]  %s11, 64, %s156, [#allocation19]
    $region49: #{generator_forward.1} parent=1 // pred_fallthru
      _
    // Predicated region
    $region50: #{generator_forward.1} parent=1 // pred_check
      _
    $region51: #{generator_forward.1} parent=1 // pred_check_branch
      %160 = sbr.rel (0) target = $region53
    $region52: #{generator_forward.1} parent=1 // pred_region
      %s162 = ssub.s32 32768, 32768
      %163 = vsyncadd [#allocation22], %s162
      %s164 = sshll.u32 [#allocation21], 4
      %s165 = int_to_ptr.vmem [resolvable:$true] %s164
      %170 = dma.hbm_to_vmem [thread:$0]  %s12, 32768, %s165, [#allocation22], 512, 512, 32
    $region53: #{generator_forward.1} parent=1 // pred_fallthru
      _
    // Predicated region
    $region54: #{generator_forward.1} parent=1 // pred_check
      _
    $region55: #{generator_forward.1} parent=1 // pred_check_branch
      %172 = sbr.rel (0) target = $region57
    $region56: #{generator_forward.1} parent=1 // pred_region
      %s174 = ssub.s32 128, 128
      %175 = vsyncadd [#allocation22], %s174
      %s177 = sshll.u32 [#allocation23], 4
      %s178 = int_to_ptr.vmem [resolvable:$true] %s177
      %180 = dma.hbm_to_vmem [thread:$0]  %s13, 128, %s178, [#allocation22]
    $region57: #{generator_forward.1} parent=1 // pred_fallthru
      _
    // Predicated region
    $region58: #{generator_forward.1} parent=1 // pred_check
      _
    $region59: #{generator_forward.1} parent=1 // pred_check_branch
      %182 = sbr.rel (0) target = $region61
    $region60: #{generator_forward.1} parent=1 // pred_region
      %s184 = ssub.s32 128, 128
      %185 = vsyncadd [#allocation25], %s184
      %s187 = sshll.u32 [#allocation24], 4
      %s188 = int_to_ptr.vmem [resolvable:$true] %s187
      %190 = dma.hbm_to_vmem [thread:$0]  %s14, 128, %s188, [#allocation25]
    $region61: #{generator_forward.1} parent=1 // pred_fallthru
      _
    // Predicated region
    $region62: #{generator_forward.1} parent=1 // pred_check
      _
    $region63: #{generator_forward.1} parent=1 // pred_check_branch
      %192 = sbr.rel (0) target = $region65
    $region64: #{generator_forward.1} parent=1 // pred_region
      %s194 = ssub.s32 128, 128
      %195 = vsyncadd [#allocation25], %s194
      %s197 = sshll.u32 [#allocation26], 4
      %s198 = int_to_ptr.vmem [resolvable:$true] %s197
      %200 = dma.hbm_to_vmem [thread:$0]  %s15, 128, %s198, [#allocation25]
    $region65: #{generator_forward.1} parent=1 // pred_fallthru
      _
    // Predicated region
    $region66: #{generator_forward.1} parent=1 // pred_check
      _
    $region67: #{generator_forward.1} parent=1 // pred_check_branch
      %202 = sbr.rel (0) target = $region69
    $region68: #{generator_forward.1} parent=1 // pred_region
      %s204 = ssub.s32 57344, 57344
      %205 = vsyncadd [#allocation28], %s204
      %s206 = sshll.u32 [#allocation27], 4
      %s207 = int_to_ptr.vmem [resolvable:$true] %s206
      %212 = dma.hbm_to_vmem [thread:$0]  %s16, 57344, %s207, [#allocation28], 448, 448, 28
    $region69: #{generator_forward.1} parent=1 // pred_fallthru
      _
    // Predicated region
    $region70: #{generator_forward.1} parent=1 // pred_check
      _
    $region71: #{generator_forward.1} parent=1 // pred_check_branch
      %214 = sbr.rel (0) target = $region73
    $region72: #{generator_forward.1} parent=1 // pred_region
      %s216 = ssub.s32 112, 112
      %217 = vsyncadd [#allocation28], %s216
      %s219 = sshll.u32 [#allocation29], 4
      %s220 = int_to_ptr.vmem [resolvable:$true] %s219
      %222 = dma.hbm_to_vmem [thread:$0]  %s17, 112, %s220, [#allocation28]
    $region73: #{generator_forward.1} parent=1 // pred_fallthru
      _
    // Predicated region
    $region74: #{generator_forward.1} parent=1 // pred_check
      _
    $region75: #{generator_forward.1} parent=1 // pred_check_branch
      %224 = sbr.rel (0) target = $region77
    $region76: #{generator_forward.1} parent=1 // pred_region
      %225 = dma.done [#allocation4], 16
    $region77: #{generator_forward.1} parent=1 // pred_fallthru
      _
    // Predicated region
    $region78: #{generator_forward.1} parent=1 // pred_check
      _
    $region79: #{generator_forward.1} parent=1 // pred_check_branch
      %227 = sbr.rel (0) target = $region81
    $region80: #{generator_forward.1} parent=1 // pred_region
      %228 = dma.done [#allocation3], 128
    $region81: #{generator_forward.1} parent=1 // pred_fallthru
      _
    // Predicated region
    $region82: #{generator_forward.1} parent=1 // pred_check
      _
    $region83: #{generator_forward.1} parent=1 // pred_check_branch
      %230 = sbr.rel (0) target = $region85
    $region84: #{generator_forward.1} parent=1 // pred_region
      %231 = dma.done [#allocation7], 256
    $region85: #{generator_forward.1} parent=1 // pred_fallthru
      _
    // Predicated region
    $region86: #{generator_forward.1} parent=1 // pred_check
      _
    $region87: #{generator_forward.1} parent=1 // pred_check_branch
      %233 = sbr.rel (0) target = $region89
    $region88: #{generator_forward.1} parent=1 // pred_region
      %234 = dma.done [#allocation7], 832
    $region89: #{generator_forward.1} parent=1 // pred_fallthru
      _
    // Predicated region
    $region90: #{generator_forward.1} parent=1 // pred_check
      _
    $region91: #{generator_forward.1} parent=1 // pred_check_branch
      %236 = sbr.rel (0) target = $region93
    $region92: #{generator_forward.1} parent=1 // pred_region
      %237 = dma.done [#allocation10], 2048
    $region93: #{generator_forward.1} parent=1 // pred_fallthru
      _
    // Predicated region
    $region94: #{generator_forward.1} parent=1 // pred_check
      _
    $region95: #{generator_forward.1} parent=1 // pred_check_branch
      %239 = sbr.rel (0) target = $region97
    $region96: #{generator_forward.1} parent=1 // pred_region
      %240 = dma.done [#allocation10], 32
    $region97: #{generator_forward.1} parent=1 // pred_fallthru
      _
    // Predicated region
    $region98: #{generator_forward.1} parent=1 // pred_check
      _
    $region99: #{generator_forward.1} parent=1 // pred_check_branch
      %242 = sbr.rel (0) target = $region101
    $region100: #{generator_forward.1} parent=1 // pred_region
      %243 = dma.done [#allocation13], 32
    $region101: #{generator_forward.1} parent=1 // pred_fallthru
      _
    // Predicated region
    $region102: #{generator_forward.1} parent=1 // pred_check
      _
    $region103: #{generator_forward.1} parent=1 // pred_check_branch
      %245 = sbr.rel (0) target = $region105
    $region104: #{generator_forward.1} parent=1 // pred_region
      %246 = dma.done [#allocation13], 32
    $region105: #{generator_forward.1} parent=1 // pred_fallthru
      _
    // Predicated region
    $region106: #{generator_forward.1} parent=1 // pred_check
      _
    $region107: #{generator_forward.1} parent=1 // pred_check_branch
      %248 = sbr.rel (0) target = $region109
    $region108: #{generator_forward.1} parent=1 // pred_region
      %249 = dma.done [#allocation16], 8192
    $region109: #{generator_forward.1} parent=1 // pred_fallthru
      _
    // Predicated region
    $region110: #{generator_forward.1} parent=1 // pred_check
      _
    $region111: #{generator_forward.1} parent=1 // pred_check_branch
      %251 = sbr.rel (0) target = $region113
    $region112: #{generator_forward.1} parent=1 // pred_region
      %252 = dma.done [#allocation16], 64
    $region113: #{generator_forward.1} parent=1 // pred_fallthru
      _
    // Predicated region
    $region114: #{generator_forward.1} parent=1 // pred_check
      _
    $region115: #{generator_forward.1} parent=1 // pred_check_branch
      %254 = sbr.rel (0) target = $region117
    $region116: #{generator_forward.1} parent=1 // pred_region
      %255 = dma.done [#allocation19], 64
    $region117: #{generator_forward.1} parent=1 // pred_fallthru
      _
    // Predicated region
    $region118: #{generator_forward.1} parent=1 // pred_check
      _
    $region119: #{generator_forward.1} parent=1 // pred_check_branch
      %257 = sbr.rel (0) target = $region121
    $region120: #{generator_forward.1} parent=1 // pred_region
      %258 = dma.done [#allocation19], 64
    $region121: #{generator_forward.1} parent=1 // pred_fallthru
      _
    // Predicated region
    $region122: #{generator_forward.1} parent=1 // pred_check
      _
    $region123: #{generator_forward.1} parent=1 // pred_check_branch
      %260 = sbr.rel (0) target = $region125
    $region124: #{generator_forward.1} parent=1 // pred_region
      %261 = dma.done [#allocation22], 32768
    $region125: #{generator_forward.1} parent=1 // pred_fallthru
      _
    // Predicated region
    $region126: #{generator_forward.1} parent=1 // pred_check
      _
    $region127: #{generator_forward.1} parent=1 // pred_check_branch
      %263 = sbr.rel (0) target = $region129
    $region128: #{generator_forward.1} parent=1 // pred_region
      %264 = dma.done [#allocation22], 128
    $region129: #{generator_forward.1} parent=1 // pred_fallthru
      _
    // Predicated region
    $region130: #{generator_forward.1} parent=1 // pred_check
      _
    $region131: #{generator_forward.1} parent=1 // pred_check_branch
      %266 = sbr.rel (0) target = $region133
    $region132: #{generator_forward.1} parent=1 // pred_region
      %267 = dma.done [#allocation25], 128
    $region133: #{generator_forward.1} parent=1 // pred_fallthru
      _
    // Predicated region
    $region134: #{generator_forward.1} parent=1 // pred_check
      _
    $region135: #{generator_forward.1} parent=1 // pred_check_branch
      %269 = sbr.rel (0) target = $region137
    $region136: #{generator_forward.1} parent=1 // pred_region
      %270 = dma.done [#allocation25], 128
    $region137: #{generator_forward.1} parent=1 // pred_fallthru
      _
    // Predicated region
    $region138: #{generator_forward.1} parent=1 // pred_check
      _
    $region139: #{generator_forward.1} parent=1 // pred_check_branch
      %272 = sbr.rel (0) target = $region141
    $region140: #{generator_forward.1} parent=1 // pred_region
      %273 = dma.done [#allocation28], 57344
    $region141: #{generator_forward.1} parent=1 // pred_fallthru
      _
    // Predicated region
    $region142: #{generator_forward.1} parent=1 // pred_check
      _
    $region143: #{generator_forward.1} parent=1 // pred_check_branch
      %275 = sbr.rel (0) target = $region145
    $region144: #{generator_forward.1} parent=1 // pred_region
      %276 = dma.done [#allocation28], 112
    $region145: #{generator_forward.1} parent=1 // pred_fallthru
      _
    %277 = sfence
    %v279 = vld [vmem:[#allocation5] sm:$0xff]
    %v280 = vlaneseq
    %v281 = vshrl.u32 %v280, 7
    %v282 = vlaneseq
    %v283 = vand.u32 %v282, 127
    %vm284 = vcmp.eq.s32.totalorder %v281, 0
    %s285 = sld [smem:[#allocation2]]
    %v286 = vstv %s285
    %v287 = vsel %vm284, %v286, 0
    %vm288 = vcmp.eq.s32.totalorder %v281, 1
    %s289 = sld [smem:[#allocation2 + $0x1]]
    %v290 = vstv %s289
    %v291 = vsel %vm288, %v290, %v287
    %vm292 = vcmp.eq.s32.totalorder %v281, 2
    %s293 = sld [smem:[#allocation2 + $0x2]]
    %v294 = vstv %s293
    %v295 = vsel %vm292, %v294, %v291
    %vm296 = vcmp.eq.s32.totalorder %v281, 3
    %s297 = sld [smem:[#allocation2 + $0x3]]
    %v298 = vstv %s297
    %v299 = vsel %vm296, %v298, %v295
    %vm300 = vcmp.eq.s32.totalorder %v281, 4
    %s301 = sld [smem:[#allocation2 + $0x4]]
    %v302 = vstv %s301
    %v303 = vsel %vm300, %v302, %v299
    %vm304 = vcmp.eq.s32.totalorder %v281, 5
    %s305 = sld [smem:[#allocation2 + $0x5]]
    %v306 = vstv %s305
    %v307 = vsel %vm304, %v306, %v303
    %vm308 = vcmp.eq.s32.totalorder %v281, 6
    %s309 = sld [smem:[#allocation2 + $0x6]]
    %v310 = vstv %s309
    %v311 = vsel %vm308, %v310, %v307
    %vm312 = vcmp.eq.s32.totalorder %v281, 7
    %s313 = sld [smem:[#allocation2 + $0x7]]
    %v314 = vstv %s313
    %v315 = vsel %vm312, %v314, %v311
    %vm316 = vcmp.eq.s32.totalorder %v283, %v315
    %v317 = vsel %vm316, 1, 0
    %v318 = vcvt.s32.f32 %v317
    %v319 = vld [vmem:[#allocation6] sm:$0xff]
    %v320 = vld [vmem:[#allocation6 + $0x8] sm:$0x3]
    %v321 = vpack.c.bf16 %v279, %v279
    %v322 = vld [vmem:[#allocation8] sm:$0xf]
    %v323 = vld [vmem:[#allocation8 + $0x4] sm:$0xf]
    %v324 = vld [vmem:[#allocation8 + $0x8] sm:$0xf]
    %v325 = vld [vmem:[#allocation8 + $0xc] sm:$0xf]
    %v326 = vld [vmem:[#allocation8 + $0x10] sm:$0xf]
    %v327 = vld [vmem:[#allocation8 + $0x14] sm:$0xf]
    %v328 = vld [vmem:[#allocation8 + $0x18] sm:$0xf]
    %v329 = vld [vmem:[#allocation8 + $0x1c] sm:$0xf]
    %v330 = vld [vmem:[#allocation8 + $0x20] sm:$0xf]
    %v331 = vld [vmem:[#allocation8 + $0x24] sm:$0xf]
    %v332 = vld [vmem:[#allocation8 + $0x28] sm:$0xf]
    %v333 = vld [vmem:[#allocation8 + $0x2c] sm:$0xf]
    %v334 = vld [vmem:[#allocation8 + $0x30] sm:$0x3]
    %v348 = vunpack.c.l.b16 %v322
    %v349 = vunpack.c.l.b16 %v323
    %v350 = vunpack.c.l.b16 %v324
    %v351 = vunpack.c.l.b16 %v325
    %v352 = vunpack.c.l.b16 %v326
    %v353 = vunpack.c.l.b16 %v327
    %v354 = vunpack.c.l.b16 %v328
    %v355 = vunpack.c.l.b16 %v329
    %v356 = vunpack.c.l.b16 %v330
    %v357 = vunpack.c.l.b16 %v331
    %v358 = vunpack.c.l.b16 %v332
    %v359 = vunpack.c.l.b16 %v333
    %v360 = vunpack.c.l.b16 %v334
    %v361 = vpack.c.b16 %v349, %v348
    %v362 = vpack.c.b16 %v351, %v350
    %v363 = vpack.c.b16 %v353, %v352
    %v364 = vpack.c.b16 %v355, %v354
    %v365 = vpack.c.b16 %v357, %v356
    %v366 = vpack.c.b16 %v359, %v358
    %v367 = vpack.c.b16 %v360, %v360
    %vm374 = vcmask 818176
    %v376 = vsel %vm374, %v321, 0
    %vm378 = vcmask 1041408
    %v380 = vsel %vm378, %v367, 0
    %382 = vmatprep.subr.bf16.mxu0 0
    %383 = vmatpush1.bf16.msra.mxu0 %v361
    %384 = vmatprep.subr.bf16.mxu0 0
    %385 = vmatpush1.bf16.msra.mxu0 %v362
    %386 = vmatprep.subr.bf16.mxu0 0
    %387 = vmatpush1.bf16.msra.mxu0 %v363
    %388 = vmatprep.subr.bf16.mxu0 0
    %389 = vmatpush1.bf16.msra.mxu0 %v364
    %390 = vmatprep.subr.bf16.mxu0 0
    %391 = vmatpush1.bf16.msra.mxu0 %v365
    %392 = vmatprep.subr.bf16.mxu0 0
    %393 = vmatpush1.bf16.msra.mxu0 %v366
    %394 = vmatprep.subr.bf16.mxu0 0
    %395 = vmatpush1.bf16.msra.mxu0 %v380
    %396 = vmatprep.subr.bf16.mxu0 0
    %397 = vmatpush1.bf16.msra.mxu0 0
    %398 = vmatprep.subr.bf16.mxu0 0
    %399 = vmatpush1.bf16.msra.mxu0 0
    %400 = vmatprep.subr.bf16.mxu0 0
    %401 = vmatpush1.bf16.msra.mxu0 0
    %402 = vmatprep.subr.bf16.mxu0 0
    %403 = vmatpush1.bf16.msra.mxu0 0
    %404 = vmatprep.subr.bf16.mxu0 0
    %405 = vmatpush1.bf16.msra.mxu0 0
    %406 = vmatprep.subr.bf16.mxu0 0
    %407 = vmatpush1.bf16.msra.mxu0 0
    %408 = vmatprep.subr.bf16.mxu0 0
    %409 = vmatpush1.bf16.msra.mxu0 0
    %410 = vmatprep.subr.bf16.mxu0 0
    %411 = vmatpush1.bf16.msra.mxu0 0
    %412 = vmatprep.subr.bf16.mxu0 0
    %413 = vmatpush1.bf16.msra.mxu0 0
    %414 = vmatprep.mubr.bf16.mxu0 0
    %415 = vmatmul.mubr.bf16.gmra.mrb[0].mxu0 %v376
    %v416 = vpop.f32.mrb[0].mxu0
    %v417 = vadd.f32 0.0, %v416
    %v418 = vpop.f32.mrb[0].mxu0
    %v419 = vpop.f32.mrb[0].mxu0
    %v420 = vpop.f32.mrb[0].mxu0
    %421 = vdwg.mxu0
    %vm422 = vcmask 80896
    %v424 = vsel %vm422, %v318, 0
    %v427 = vsel %vm378, %v320, 0
    %429 = vmatprep.subr.mxu0 0.0
    %430 = vmatpush1.msra.mxu0 %v319
    %431 = vmatprep.subr.mxu0 0.0
    %432 = vmatpush1.msra.mxu0 %v427
    %433 = vmatprep.subr.mxu0 0.0
    %434 = vmatpush1.msra.mxu0 0.0
    %435 = vmatprep.subr.mxu0 0.0
    %436 = vmatpush1.msra.mxu0 0.0
    %437 = vmatprep.subr.mxu0 0.0
    %438 = vmatpush1.msra.mxu0 0.0
    %439 = vmatprep.subr.mxu0 0.0
    %440 = vmatpush1.msra.mxu0 0.0
    %441 = vmatprep.subr.mxu0 0.0
    %442 = vmatpush1.msra.mxu0 0.0
    %443 = vmatprep.subr.mxu0 0.0
    %444 = vmatpush1.msra.mxu0 0.0
    %445 = vmatprep.subr.mxu0 0.0
    %446 = vmatpush1.msra.mxu0 0.0
    %447 = vmatprep.subr.mxu0 0.0
    %448 = vmatpush1.msra.mxu0 0.0
    %449 = vmatprep.subr.mxu0 0.0
    %450 = vmatpush1.msra.mxu0 0.0
    %451 = vmatprep.subr.mxu0 0.0
    %452 = vmatpush1.msra.mxu0 0.0
    %453 = vmatprep.subr.mxu0 0.0
    %454 = vmatpush1.msra.mxu0 0.0
    %455 = vmatprep.subr.mxu0 0.0
    %456 = vmatpush1.msra.mxu0 0.0
    %457 = vmatprep.subr.mxu0 0.0
    %458 = vmatpush1.msra.mxu0 0.0
    %459 = vmatprep.subr.mxu0 0.0
    %460 = vmatpush1.msra.mxu0 0.0
    %461 = vmatprep.subr.mxu0 0.0
    %462 = vmatpush1.msra.mxu0 0.0
    %463 = vmatprep.subr.mxu0 0.0
    %464 = vmatpush1.msra.mxu0 0.0
    %465 = vmatprep.subr.mxu0 0.0
    %466 = vmatpush1.msra.mxu0 0.0
    %467 = vmatprep.subr.mxu0 0.0
    %468 = vmatpush1.msra.mxu0 0.0
    %469 = vmatprep.subr.mxu0 0.0
    %470 = vmatpush1.msra.mxu0 0.0
    %471 = vmatprep.subr.mxu0 0.0
    %472 = vmatpush1.msra.mxu0 0.0
    %473 = vmatprep.subr.mxu0 0.0
    %474 = vmatpush1.msra.mxu0 0.0
    %475 = vmatprep.subr.mxu0 0.0
    %476 = vmatpush1.msra.mxu0 0.0
    %477 = vmatprep.subr.mxu0 0.0
    %478 = vmatpush1.msra.mxu0 0.0
    %479 = vmatprep.subr.mxu0 0.0
    %480 = vmatpush1.msra.mxu0 0.0
    %481 = vmatprep.subr.mxu0 0.0
    %482 = vmatpush1.msra.mxu0 0.0
    %483 = vmatprep.subr.mxu0 0.0
    %484 = vmatpush1.msra.mxu0 0.0
    %485 = vmatprep.subr.mxu0 0.0
    %486 = vmatpush1.msra.mxu0 0.0
    %487 = vmatprep.subr.mxu0 0.0
    %488 = vmatpush1.msra.mxu0 0.0
    %489 = vmatprep.subr.mxu0 0.0
    %490 = vmatpush1.msra.mxu0 0.0
    %491 = vmatprep.subr.mxu0 0.0
    %492 = vmatpush1.msra.mxu0 0.0
    %493 = vmatprep.mubr.f32.mxu0 0.0
    %494 = vmatmul.mubr.f32.gmra.mrb[0].mxu0 %v424
    %v495 = vpop.f32.mrb[0].mxu0
    %v496 = vadd.f32 %v417, %v495
    %v497 = vpop.f32.mrb[0].mxu0
    %498 = vdwg.mxu0
    %vm499 = vcmp.gt.f32.partialorder %v496, 0.0
    %v500 = vmul.f32 %v496, 0.2
    %v501 = vsel %vm499, %v496, %v500
    %v502 = vpack.c.bf16 %v501, %v501
    %v503 = vld [vmem:[#allocation9] sm:$0xff]
    %v504 = vld [vmem:[#allocation9 + $0x8] sm:$0xff]
    %v505 = vld [vmem:[#allocation9 + $0x10] sm:$0xff]
    %v506 = vld [vmem:[#allocation9 + $0x18] sm:$0xff]
    %v507 = vld [vmem:[#allocation9 + $0x20] sm:$0xff]
    %v508 = vld [vmem:[#allocation9 + $0x28] sm:$0xff]
    %v509 = vld [vmem:[#allocation9 + $0x30] sm:$0xff]
    %v510 = vld [vmem:[#allocation9 + $0x38] sm:$0xff]
    %v511 = vld [vmem:[#allocation9 + $0x40] sm:$0xff]
    %v512 = vld [vmem:[#allocation9 + $0x48] sm:$0xff]
    %v513 = vld [vmem:[#allocation9 + $0x50] sm:$0xff]
    %v514 = vld [vmem:[#allocation9 + $0x58] sm:$0xff]
    %v515 = vld [vmem:[#allocation9 + $0x60] sm:$0xff]
    %v516 = vld [vmem:[#allocation9 + $0x68] sm:$0xff]
    %v517 = vld [vmem:[#allocation9 + $0x70] sm:$0xff]
    %v518 = vld [vmem:[#allocation9 + $0x78] sm:$0xff]
    %v519 = vld [vmem:[#allocation11] sm:$0x3]
    %v521 = vlaneseq
    %v522 = vshrl.u32 %v521, 7
    %v523 = vsub.s32 0, %v522
    %v524 = vrot.slane %v519, %v523
    %v525 = vlaneseq
    %v526 = vshrl.u32 %v525, 7
    %v527 = vsub.s32 1, %v526
    %v528 = vrot.slane %v519, %v527
    %v547 = vunpack.c.l.b16 %v503
    %v548 = vunpack.c.h.b16 %v503
    %v549 = vunpack.c.l.b16 %v504
    %v550 = vunpack.c.h.b16 %v504
    %v551 = vunpack.c.l.b16 %v505
    %v552 = vunpack.c.h.b16 %v505
    %v553 = vunpack.c.l.b16 %v506
    %v554 = vunpack.c.h.b16 %v506
    %v555 = vunpack.c.l.b16 %v507
    %v556 = vunpack.c.h.b16 %v507
    %v557 = vunpack.c.l.b16 %v508
    %v558 = vunpack.c.h.b16 %v508
    %v559 = vunpack.c.l.b16 %v509
    %v560 = vunpack.c.h.b16 %v509
    %v561 = vunpack.c.l.b16 %v510
    %v562 = vunpack.c.h.b16 %v510
    %v563 = vunpack.c.l.b16 %v511
    %v564 = vunpack.c.h.b16 %v511
    %v565 = vunpack.c.l.b16 %v512
    %v566 = vunpack.c.h.b16 %v512
    %v567 = vunpack.c.l.b16 %v513
    %v568 = vunpack.c.h.b16 %v513
    %v569 = vunpack.c.l.b16 %v514
    %v570 = vunpack.c.h.b16 %v514
    %v571 = vunpack.c.l.b16 %v515
    %v572 = vunpack.c.h.b16 %v515
    %v573 = vunpack.c.l.b16 %v516
    %v574 = vunpack.c.h.b16 %v516
    %v575 = vunpack.c.l.b16 %v517
    %v576 = vunpack.c.h.b16 %v517
    %v577 = vunpack.c.l.b16 %v518
    %v578 = vunpack.c.h.b16 %v518
    %v579 = vpack.c.b16 %v549, %v547
    %v580 = vpack.c.b16 %v550, %v548
    %v581 = vpack.c.b16 %v553, %v551
    %v582 = vpack.c.b16 %v554, %v552
    %v583 = vpack.c.b16 %v557, %v555
    %v584 = vpack.c.b16 %v558, %v556
    %v585 = vpack.c.b16 %v561, %v559
    %v586 = vpack.c.b16 %v562, %v560
    %v587 = vpack.c.b16 %v565, %v563
    %v588 = vpack.c.b16 %v566, %v564
    %v589 = vpack.c.b16 %v569, %v567
    %v590 = vpack.c.b16 %v570, %v568
    %v591 = vpack.c.b16 %v573, %v571
    %v592 = vpack.c.b16 %v574, %v572
    %v593 = vpack.c.b16 %v577, %v575
    %v594 = vpack.c.b16 %v578, %v576
    %611 = vmatprep.subr.bf16.mxu0 %v580
    %612 = vmatpush1.bf16.msra.mxu0 %v579
    %613 = vmatprep.subr.bf16.mxu0 %v582
    %614 = vmatpush1.bf16.msra.mxu0 %v581
    %615 = vmatprep.subr.bf16.mxu0 %v584
    %616 = vmatpush1.bf16.msra.mxu0 %v583
    %617 = vmatprep.subr.bf16.mxu0 %v586
    %618 = vmatpush1.bf16.msra.mxu0 %v585
    %619 = vmatprep.subr.bf16.mxu0 %v588
    %620 = vmatpush1.bf16.msra.mxu0 %v587
    %621 = vmatprep.subr.bf16.mxu0 %v590
    %622 = vmatpush1.bf16.msra.mxu0 %v589
    %623 = vmatprep.subr.bf16.mxu0 %v592
    %624 = vmatpush1.bf16.msra.mxu0 %v591
    %625 = vmatprep.subr.bf16.mxu0 %v594
    %626 = vmatpush1.bf16.msra.mxu0 %v593
    %627 = vmatprep.subr.bf16.mxu0 0
    %628 = vmatpush1.bf16.msra.mxu0 0
    %629 = vmatprep.subr.bf16.mxu0 0
    %630 = vmatpush1.bf16.msra.mxu0 0
    %631 = vmatprep.subr.bf16.mxu0 0
    %632 = vmatpush1.bf16.msra.mxu0 0
    %633 = vmatprep.subr.bf16.mxu0 0
    %634 = vmatpush1.bf16.msra.mxu0 0
    %635 = vmatprep.subr.bf16.mxu0 0
    %636 = vmatpush1.bf16.msra.mxu0 0
    %637 = vmatprep.subr.bf16.mxu0 0
    %638 = vmatpush1.bf16.msra.mxu0 0
    %639 = vmatprep.subr.bf16.mxu0 0
    %640 = vmatpush1.bf16.msra.mxu0 0
    %641 = vmatprep.subr.bf16.mxu0 0
    %642 = vmatpush1.bf16.msra.mxu0 0
    %643 = vmatprep.mubr.bf16.mxu0 0
    %644 = vmatmul.mubr.bf16.gmra.mrb[0].mxu0 %v502
    %v645 = vpop.f32.mrb[0].mxu0
    %v646 = vadd.f32 %v524, %v645
    %v647 = vpop.f32.mrb[0].mxu0
    %v648 = vadd.f32 %v528, %v647
    %v649 = vpop.f32.mrb[0].mxu0
    %v650 = vpop.f32.mrb[0].mxu0
    %651 = vdwg.mxu0
    %v652 = vld [vmem:[#allocation12] sm:$0x3]
    %v653 = vld [vmem:[#allocation14] sm:$0x3]
    %v654 = vrot.slane %v646, 4
    %v655 = vadd.f32 %v646, %v654
    %v656 = vrot.slane %v655, 2
    %v657 = vadd.f32 %v655, %v656
    %v658 = vrot.slane %v657, 1
    %v659 = vadd.f32 %v657, %v658
    %v660 = vrot.slane %v648, 4
    %v661 = vadd.f32 %v648, %v660
    %v662 = vrot.slane %v661, 2
    %v663 = vadd.f32 %v661, %v662
    %v664 = vrot.slane %v663, 1
    %v665 = vadd.f32 %v663, %v664
    %v666 = vrcp.pop 8.0
    %v667 = vmul.f32 %v659, %v666
    %v668 = vmul.f32 %v665, %v666
    %v669 = vsub.f32 %v646, %v667
    %v670 = vsub.f32 %v648, %v668
    %v671 = vmul.f32 %v669, %v669
    %v672 = vmul.f32 %v670, %v670
    %v673 = vrot.slane %v671, 4
    %v674 = vadd.f32 %v671, %v673
    %v675 = vrot.slane %v674, 2
    %v676 = vadd.f32 %v674, %v675
    %v677 = vrot.slane %v676, 1
    %v678 = vadd.f32 %v676, %v677
    %v679 = vrot.slane %v672, 4
    %v680 = vadd.f32 %v672, %v679
    %v681 = vrot.slane %v680, 2
    %v682 = vadd.f32 %v680, %v681
    %v683 = vrot.slane %v682, 1
    %v684 = vadd.f32 %v682, %v683
    %v685 = vmul.f32 %v678, %v666
    %v686 = vmul.f32 %v684, %v666
    %v687 = vadd.f32 %v685, 0.8
    %v688 = vadd.f32 %v686, 0.8
    %v689 = vrsqrt.pop %v687
    %v690 = vrsqrt.pop %v688
    %v691 = vmul.f32 %v669, %v689
    %v692 = vmul.f32 %v670, %v690
    %v694 = vlaneseq
    %v695 = vshrl.u32 %v694, 7
    %v696 = vsub.s32 0, %v695
    %v697 = vrot.slane %v652, %v696
    %v698 = vlaneseq
    %v699 = vshrl.u32 %v698, 7
    %v700 = vsub.s32 1, %v699
    %v701 = vrot.slane %v652, %v700
    %v704 = vmul.f32 %v691, %v697
    %v705 = vmul.f32 %v692, %v701
    %v707 = vlaneseq
    %v708 = vshrl.u32 %v707, 7
    %v709 = vsub.s32 0, %v708
    %v710 = vrot.slane %v653, %v709
    %v711 = vlaneseq
    %v712 = vshrl.u32 %v711, 7
    %v713 = vsub.s32 1, %v712
    %v714 = vrot.slane %v653, %v713
    %v717 = vadd.f32 %v704, %v710
    %v718 = vadd.f32 %v705, %v714
    %vm719 = vcmp.gt.f32.partialorder %v717, 0.0
    %vm720 = vcmp.gt.f32.partialorder %v718, 0.0
    %v721 = vmul.f32 %v717, 0.2
    %v722 = vmul.f32 %v718, 0.2
    %v723 = vsel %vm719, %v717, %v721
    %v724 = vsel %vm720, %v718, %v722
    %v725 = vpack.c.bf16 %v723, %v723
    %v726 = vpack.c.bf16 %v724, %v724
    %v727 = vld [vmem:[#allocation15] sm:$0xff]
    %v728 = vld [vmem:[#allocation15 + $0x8] sm:$0xff]
    %v729 = vld [vmem:[#allocation15 + $0x10] sm:$0xff]
    %v730 = vld [vmem:[#allocation15 + $0x18] sm:$0xff]
    %v731 = vld [vmem:[#allocation15 + $0x20] sm:$0xff]
    %v732 = vld [vmem:[#allocation15 + $0x28] sm:$0xff]
    %v733 = vld [vmem:[#allocation15 + $0x30] sm:$0xff]
    %v734 = vld [vmem:[#allocation15 + $0x38] sm:$0xff]
    %v735 = vld [vmem:[#allocation15 + $0x40] sm:$0xff]
    %v736 = vld [vmem:[#allocation15 + $0x48] sm:$0xff]
    %v737 = vld [vmem:[#allocation15 + $0x50] sm:$0xff]
    %v738 = vld [vmem:[#allocation15 + $0x58] sm:$0xff]
    %v739 = vld [vmem:[#allocation15 + $0x60] sm:$0xff]
    %v740 = vld [vmem:[#allocation15 + $0x68] sm:$0xff]
    %v741 = vld [vmem:[#allocation15 + $0x70] sm:$0xff]
    %v742 = vld [vmem:[#allocation15 + $0x78] sm:$0xff]
    %v743 = vld [vmem:[#allocation15 + $0x80] sm:$0xff]
    %v744 = vld [vmem:[#allocation15 + $0x88] sm:$0xff]
    %v745 = vld [vmem:[#allocation15 + $0x90] sm:$0xff]
    %v746 = vld [vmem:[#allocation15 + $0x98] sm:$0xff]
    %v747 = vld [vmem:[#allocation15 + $0xa0] sm:$0xff]
    %v748 = vld [vmem:[#allocation15 + $0xa8] sm:$0xff]
    %v749 = vld [vmem:[#allocation15 + $0xb0] sm:$0xff]
    %v750 = vld [vmem:[#allocation15 + $0xb8] sm:$0xff]
    %v751 = vld [vmem:[#allocation15 + $0xc0] sm:$0xff]
    %v752 = vld [vmem:[#allocation15 + $0xc8] sm:$0xff]
    %v753 = vld [vmem:[#allocation15 + $0xd0] sm:$0xff]
    %v754 = vld [vmem:[#allocation15 + $0xd8] sm:$0xff]
    %v755 = vld [vmem:[#allocation15 + $0xe0] sm:$0xff]
    %v756 = vld [vmem:[#allocation15 + $0xe8] sm:$0xff]
    %v757 = vld [vmem:[#allocation15 + $0xf0] sm:$0xff]
    %v758 = vld [vmem:[#allocation15 + $0xf8] sm:$0xff]
    %v759 = vld [vmem:[#allocation15 + $0x100] sm:$0xff]
    %v760 = vld [vmem:[#allocation15 + $0x108] sm:$0xff]
    %v761 = vld [vmem:[#allocation15 + $0x110] sm:$0xff]
    %v762 = vld [vmem:[#allocation15 + $0x118] sm:$0xff]
    %v763 = vld [vmem:[#allocation15 + $0x120] sm:$0xff]
    %v764 = vld [vmem:[#allocation15 + $0x128] sm:$0xff]
    %v765 = vld [vmem:[#allocation15 + $0x130] sm:$0xff]
    %v766 = vld [vmem:[#allocation15 + $0x138] sm:$0xff]
    %v767 = vld [vmem:[#allocation15 + $0x140] sm:$0xff]
    %v768 = vld [vmem:[#allocation15 + $0x148] sm:$0xff]
    %v769 = vld [vmem:[#allocation15 + $0x150] sm:$0xff]
    %v770 = vld [vmem:[#allocation15 + $0x158] sm:$0xff]
    %v771 = vld [vmem:[#allocation15 + $0x160] sm:$0xff]
    %v772 = vld [vmem:[#allocation15 + $0x168] sm:$0xff]
    %v773 = vld [vmem:[#allocation15 + $0x170] sm:$0xff]
    %v774 = vld [vmem:[#allocation15 + $0x178] sm:$0xff]
    %v775 = vld [vmem:[#allocation15 + $0x180] sm:$0xff]
    %v776 = vld [vmem:[#allocation15 + $0x188] sm:$0xff]
    %v777 = vld [vmem:[#allocation15 + $0x190] sm:$0xff]
    %v778 = vld [vmem:[#allocation15 + $0x198] sm:$0xff]
    %v779 = vld [vmem:[#allocation15 + $0x1a0] sm:$0xff]
    %v780 = vld [vmem:[#allocation15 + $0x1a8] sm:$0xff]
    %v781 = vld [vmem:[#allocation15 + $0x1b0] sm:$0xff]
    %v782 = vld [vmem:[#allocation15 + $0x1b8] sm:$0xff]
    %v783 = vld [vmem:[#allocation15 + $0x1c0] sm:$0xff]
    %v784 = vld [vmem:[#allocation15 + $0x1c8] sm:$0xff]
    %v785 = vld [vmem:[#allocation15 + $0x1d0] sm:$0xff]
    %v786 = vld [vmem:[#allocation15 + $0x1d8] sm:$0xff]
    %v787 = vld [vmem:[#allocation15 + $0x1e0] sm:$0xff]
    %v788 = vld [vmem:[#allocation15 + $0x1e8] sm:$0xff]
    %v789 = vld [vmem:[#allocation15 + $0x1f0] sm:$0xff]
    %v790 = vld [vmem:[#allocation15 + $0x1f8] sm:$0xff]
    %v791 = vld [vmem:[#allocation17] sm:$0xf]
    %v793 = vlaneseq
    %v794 = vshrl.u32 %v793, 7
    %v795 = vsub.s32 0, %v794
    %v796 = vrot.slane %v791, %v795
    %v797 = vlaneseq
    %v798 = vshrl.u32 %v797, 7
    %v799 = vsub.s32 1, %v798
    %v800 = vrot.slane %v791, %v799
    %v801 = vlaneseq
    %v802 = vshrl.u32 %v801, 7
    %v803 = vsub.s32 2, %v802
    %v804 = vrot.slane %v791, %v803
    %v805 = vlaneseq
    %v806 = vshrl.u32 %v805, 7
    %v807 = vsub.s32 3, %v806
    %v808 = vrot.slane %v791, %v807
    %v877 = vunpack.c.l.b16 %v727
    %v878 = vunpack.c.h.b16 %v727
    %v879 = vunpack.c.l.b16 %v728
    %v880 = vunpack.c.h.b16 %v728
    %v881 = vunpack.c.l.b16 %v729
    %v882 = vunpack.c.h.b16 %v729
    %v883 = vunpack.c.l.b16 %v730
    %v884 = vunpack.c.h.b16 %v730
    %v885 = vunpack.c.l.b16 %v731
    %v886 = vunpack.c.h.b16 %v731
    %v887 = vunpack.c.l.b16 %v732
    %v888 = vunpack.c.h.b16 %v732
    %v889 = vunpack.c.l.b16 %v733
    %v890 = vunpack.c.h.b16 %v733
    %v891 = vunpack.c.l.b16 %v734
    %v892 = vunpack.c.h.b16 %v734
    %v893 = vunpack.c.l.b16 %v735
    %v894 = vunpack.c.h.b16 %v735
    %v895 = vunpack.c.l.b16 %v736
    %v896 = vunpack.c.h.b16 %v736
    %v897 = vunpack.c.l.b16 %v737
    %v898 = vunpack.c.h.b16 %v737
    %v899 = vunpack.c.l.b16 %v738
    %v900 = vunpack.c.h.b16 %v738
    %v901 = vunpack.c.l.b16 %v739
    %v902 = vunpack.c.h.b16 %v739
    %v903 = vunpack.c.l.b16 %v740
    %v904 = vunpack.c.h.b16 %v740
    %v905 = vunpack.c.l.b16 %v741
    %v906 = vunpack.c.h.b16 %v741
    %v907 = vunpack.c.l.b16 %v742
    %v908 = vunpack.c.h.b16 %v742
    %v909 = vunpack.c.l.b16 %v743
    %v910 = vunpack.c.h.b16 %v743
    %v911 = vunpack.c.l.b16 %v744
    %v912 = vunpack.c.h.b16 %v744
    %v913 = vunpack.c.l.b16 %v745
    %v914 = vunpack.c.h.b16 %v745
    %v915 = vunpack.c.l.b16 %v746
    %v916 = vunpack.c.h.b16 %v746
    %v917 = vunpack.c.l.b16 %v747
    %v918 = vunpack.c.h.b16 %v747
    %v919 = vunpack.c.l.b16 %v748
    %v920 = vunpack.c.h.b16 %v748
    %v921 = vunpack.c.l.b16 %v749
    %v922 = vunpack.c.h.b16 %v749
    %v923 = vunpack.c.l.b16 %v750
    %v924 = vunpack.c.h.b16 %v750
    %v925 = vunpack.c.l.b16 %v751
    %v926 = vunpack.c.h.b16 %v751
    %v927 = vunpack.c.l.b16 %v752
    %v928 = vunpack.c.h.b16 %v752
    %v929 = vunpack.c.l.b16 %v753
    %v930 = vunpack.c.h.b16 %v753
    %v931 = vunpack.c.l.b16 %v754
    %v932 = vunpack.c.h.b16 %v754
    %v933 = vunpack.c.l.b16 %v755
    %v934 = vunpack.c.h.b16 %v755
    %v935 = vunpack.c.l.b16 %v756
    %v936 = vunpack.c.h.b16 %v756
    %v937 = vunpack.c.l.b16 %v757
    %v938 = vunpack.c.h.b16 %v757
    %v939 = vunpack.c.l.b16 %v758
    %v940 = vunpack.c.h.b16 %v758
    %v941 = vunpack.c.l.b16 %v759
    %v942 = vunpack.c.h.b16 %v759
    %v943 = vunpack.c.l.b16 %v760
    %v944 = vunpack.c.h.b16 %v760
    %v945 = vunpack.c.l.b16 %v761
    %v946 = vunpack.c.h.b16 %v761
    %v947 = vunpack.c.l.b16 %v762
    %v948 = vunpack.c.h.b16 %v762
    %v949 = vunpack.c.l.b16 %v763
    %v950 = vunpack.c.h.b16 %v763
    %v951 = vunpack.c.l.b16 %v764
    %v952 = vunpack.c.h.b16 %v764
    %v953 = vunpack.c.l.b16 %v765
    %v954 = vunpack.c.h.b16 %v765
    %v955 = vunpack.c.l.b16 %v766
    %v956 = vunpack.c.h.b16 %v766
    %v957 = vunpack.c.l.b16 %v767
    %v958 = vunpack.c.h.b16 %v767
    %v959 = vunpack.c.l.b16 %v768
    %v960 = vunpack.c.h.b16 %v768
    %v961 = vunpack.c.l.b16 %v769
    %v962 = vunpack.c.h.b16 %v769
    %v963 = vunpack.c.l.b16 %v770
    %v964 = vunpack.c.h.b16 %v770
    %v965 = vunpack.c.l.b16 %v771
    %v966 = vunpack.c.h.b16 %v771
    %v967 = vunpack.c.l.b16 %v772
    %v968 = vunpack.c.h.b16 %v772
    %v969 = vunpack.c.l.b16 %v773
    %v970 = vunpack.c.h.b16 %v773
    %v971 = vunpack.c.l.b16 %v774
    %v972 = vunpack.c.h.b16 %v774
    %v973 = vunpack.c.l.b16 %v775
    %v974 = vunpack.c.h.b16 %v775
    %v975 = vunpack.c.l.b16 %v776
    %v976 = vunpack.c.h.b16 %v776
    %v977 = vunpack.c.l.b16 %v777
    %v978 = vunpack.c.h.b16 %v777
    %v979 = vunpack.c.l.b16 %v778
    %v980 = vunpack.c.h.b16 %v778
    %v981 = vunpack.c.l.b16 %v779
    %v982 = vunpack.c.h.b16 %v779
    %v983 = vunpack.c.l.b16 %v780
    %v984 = vunpack.c.h.b16 %v780
    %v985 = vunpack.c.l.b16 %v781
    %v986 = vunpack.c.h.b16 %v781
    %v987 = vunpack.c.l.b16 %v782
    %v988 = vunpack.c.h.b16 %v782
    %v989 = vunpack.c.l.b16 %v783
    %v990 = vunpack.c.h.b16 %v783
    %v991 = vunpack.c.l.b16 %v784
    %v992 = vunpack.c.h.b16 %v784
    %v993 = vunpack.c.l.b16 %v785
    %v994 = vunpack.c.h.b16 %v785
    %v995 = vunpack.c.l.b16 %v786
    %v996 = vunpack.c.h.b16 %v786
    %v997 = vunpack.c.l.b16 %v787
    %v998 = vunpack.c.h.b16 %v787
    %v999 = vunpack.c.l.b16 %v788
    %v1000 = vunpack.c.h.b16 %v788
    %v1001 = vunpack.c.l.b16 %v789
    %v1002 = vunpack.c.h.b16 %v789
    %v1003 = vunpack.c.l.b16 %v790
    %v1004 = vunpack.c.h.b16 %v790
    %v1005 = vpack.c.b16 %v881, %v877
    %v1006 = vpack.c.b16 %v882, %v878
    %v1007 = vpack.c.b16 %v883, %v879
    %v1008 = vpack.c.b16 %v884, %v880
    %v1009 = vpack.c.b16 %v889, %v885
    %v1010 = vpack.c.b16 %v890, %v886
    %v1011 = vpack.c.b16 %v891, %v887
    %v1012 = vpack.c.b16 %v892, %v888
    %v1013 = vpack.c.b16 %v897, %v893
    %v1014 = vpack.c.b16 %v898, %v894
    %v1015 = vpack.c.b16 %v899, %v895
    %v1016 = vpack.c.b16 %v900, %v896
    %v1017 = vpack.c.b16 %v905, %v901
    %v1018 = vpack.c.b16 %v906, %v902
    %v1019 = vpack.c.b16 %v907, %v903
    %v1020 = vpack.c.b16 %v908, %v904
    %v1021 = vpack.c.b16 %v913, %v909
    %v1022 = vpack.c.b16 %v914, %v910
    %v1023 = vpack.c.b16 %v915, %v911
    %v1024 = vpack.c.b16 %v916, %v912
    %v1025 = vpack.c.b16 %v921, %v917
    %v1026 = vpack.c.b16 %v922, %v918
    %v1027 = vpack.c.b16 %v923, %v919
    %v1028 = vpack.c.b16 %v924, %v920
    %v1029 = vpack.c.b16 %v929, %v925
    %v1030 = vpack.c.b16 %v930, %v926
    %v1031 = vpack.c.b16 %v931, %v927
    %v1032 = vpack.c.b16 %v932, %v928
    %v1033 = vpack.c.b16 %v937, %v933
    %v1034 = vpack.c.b16 %v938, %v934
    %v1035 = vpack.c.b16 %v939, %v935
    %v1036 = vpack.c.b16 %v940, %v936
    %v1037 = vpack.c.b16 %v945, %v941
    %v1038 = vpack.c.b16 %v946, %v942
    %v1039 = vpack.c.b16 %v947, %v943
    %v1040 = vpack.c.b16 %v948, %v944
    %v1041 = vpack.c.b16 %v953, %v949
    %v1042 = vpack.c.b16 %v954, %v950
    %v1043 = vpack.c.b16 %v955, %v951
    %v1044 = vpack.c.b16 %v956, %v952
    %v1045 = vpack.c.b16 %v961, %v957
    %v1046 = vpack.c.b16 %v962, %v958
    %v1047 = vpack.c.b16 %v963, %v959
    %v1048 = vpack.c.b16 %v964, %v960
    %v1049 = vpack.c.b16 %v969, %v965
    %v1050 = vpack.c.b16 %v970, %v966
    %v1051 = vpack.c.b16 %v971, %v967
    %v1052 = vpack.c.b16 %v972, %v968
    %v1053 = vpack.c.b16 %v977, %v973
    %v1054 = vpack.c.b16 %v978, %v974
    %v1055 = vpack.c.b16 %v979, %v975
    %v1056 = vpack.c.b16 %v980, %v976
    %v1057 = vpack.c.b16 %v985, %v981
    %v1058 = vpack.c.b16 %v986, %v982
    %v1059 = vpack.c.b16 %v987, %v983
    %v1060 = vpack.c.b16 %v988, %v984
    %v1061 = vpack.c.b16 %v993, %v989
    %v1062 = vpack.c.b16 %v994, %v990
    %v1063 = vpack.c.b16 %v995, %v991
    %v1064 = vpack.c.b16 %v996, %v992
    %v1065 = vpack.c.b16 %v1001, %v997
    %v1066 = vpack.c.b16 %v1002, %v998
    %v1067 = vpack.c.b16 %v1003, %v999
    %v1068 = vpack.c.b16 %v1004, %v1000
    %1133 = vmatprep.subr.bf16.mxu0 %v1006
    %1134 = vmatpush1.bf16.msra.mxu0 %v1005
    %1135 = vmatprep.subr.bf16.mxu0 %v1010
    %1136 = vmatpush1.bf16.msra.mxu0 %v1009
    %1137 = vmatprep.subr.bf16.mxu0 %v1014
    %1138 = vmatpush1.bf16.msra.mxu0 %v1013
    %1139 = vmatprep.subr.bf16.mxu0 %v1018
    %1140 = vmatpush1.bf16.msra.mxu0 %v1017
    %1141 = vmatprep.subr.bf16.mxu0 %v1022
    %1142 = vmatpush1.bf16.msra.mxu0 %v1021
    %1143 = vmatprep.subr.bf16.mxu0 %v1026
    %1144 = vmatpush1.bf16.msra.mxu0 %v1025
    %1145 = vmatprep.subr.bf16.mxu0 %v1030
    %1146 = vmatpush1.bf16.msra.mxu0 %v1029
    %1147 = vmatprep.subr.bf16.mxu0 %v1034
    %1148 = vmatpush1.bf16.msra.mxu0 %v1033
    %1149 = vmatprep.subr.bf16.mxu0 %v1038
    %1150 = vmatpush1.bf16.msra.mxu0 %v1037
    %1151 = vmatprep.subr.bf16.mxu0 %v1042
    %1152 = vmatpush1.bf16.msra.mxu0 %v1041
    %1153 = vmatprep.subr.bf16.mxu0 %v1046
    %1154 = vmatpush1.bf16.msra.mxu0 %v1045
    %1155 = vmatprep.subr.bf16.mxu0 %v1050
    %1156 = vmatpush1.bf16.msra.mxu0 %v1049
    %1157 = vmatprep.subr.bf16.mxu0 %v1054
    %1158 = vmatpush1.bf16.msra.mxu0 %v1053
    %1159 = vmatprep.subr.bf16.mxu0 %v1058
    %1160 = vmatpush1.bf16.msra.mxu0 %v1057
    %1161 = vmatprep.subr.bf16.mxu0 %v1062
    %1162 = vmatpush1.bf16.msra.mxu0 %v1061
    %1163 = vmatprep.subr.bf16.mxu0 %v1066
    %1164 = vmatpush1.bf16.msra.mxu0 %v1065
    %1165 = vmatprep.mubr.bf16.mxu0 %v726
    %1166 = vmatmul.mubr.bf16.gmra.mrb[0].mxu0 %v725
    %v1167 = vpop.f32.mrb[0].mxu0
    %v1168 = vadd.f32 %v796, %v1167
    %v1169 = vpop.f32.mrb[0].mxu0
    %v1170 = vadd.f32 %v800, %v1169
    %v1171 = vpop.f32.mrb[0].mxu0
    %v1172 = vpop.f32.mrb[0].mxu0
    %1173 = vdwg.mxu0
    %1174 = vmatprep.subr.bf16.mxu0 %v1008
    %1175 = vmatpush1.bf16.msra.mxu0 %v1007
    %1176 = vmatprep.subr.bf16.mxu0 %v1012
    %1177 = vmatpush1.bf16.msra.mxu0 %v1011
    %1178 = vmatprep.subr.bf16.mxu0 %v1016
    %1179 = vmatpush1.bf16.msra.mxu0 %v1015
    %1180 = vmatprep.subr.bf16.mxu0 %v1020
    %1181 = vmatpush1.bf16.msra.mxu0 %v1019
    %1182 = vmatprep.subr.bf16.mxu0 %v1024
    %1183 = vmatpush1.bf16.msra.mxu0 %v1023
    %1184 = vmatprep.subr.bf16.mxu0 %v1028
    %1185 = vmatpush1.bf16.msra.mxu0 %v1027
    %1186 = vmatprep.subr.bf16.mxu0 %v1032
    %1187 = vmatpush1.bf16.msra.mxu0 %v1031
    %1188 = vmatprep.subr.bf16.mxu0 %v1036
    %1189 = vmatpush1.bf16.msra.mxu0 %v1035
    %1190 = vmatprep.subr.bf16.mxu0 %v1040
    %1191 = vmatpush1.bf16.msra.mxu0 %v1039
    %1192 = vmatprep.subr.bf16.mxu0 %v1044
    %1193 = vmatpush1.bf16.msra.mxu0 %v1043
    %1194 = vmatprep.subr.bf16.mxu0 %v1048
    %1195 = vmatpush1.bf16.msra.mxu0 %v1047
    %1196 = vmatprep.subr.bf16.mxu0 %v1052
    %1197 = vmatpush1.bf16.msra.mxu0 %v1051
    %1198 = vmatprep.subr.bf16.mxu0 %v1056
    %1199 = vmatpush1.bf16.msra.mxu0 %v1055
    %1200 = vmatprep.subr.bf16.mxu0 %v1060
    %1201 = vmatpush1.bf16.msra.mxu0 %v1059
    %1202 = vmatprep.subr.bf16.mxu0 %v1064
    %1203 = vmatpush1.bf16.msra.mxu0 %v1063
    %1204 = vmatprep.subr.bf16.mxu0 %v1068
    %1205 = vmatpush1.bf16.msra.mxu0 %v1067
    %1206 = vmatprep.mubr.bf16.mxu0 %v726
    %1207 = vmatmul.mubr.bf16.gmra.mrb[0].mxu0 %v725
    %v1208 = vpop.f32.mrb[0].mxu0
    %v1209 = vadd.f32 %v804, %v1208
    %v1210 = vpop.f32.mrb[0].mxu0
    %v1211 = vadd.f32 %v808, %v1210
    %v1212 = vpop.f32.mrb[0].mxu0
    %v1213 = vpop.f32.mrb[0].mxu0
    %1214 = vdwg.mxu0
    %v1215 = vld [vmem:[#allocation18] sm:$0xf]
    %v1216 = vld [vmem:[#allocation20] sm:$0xf]
    %v1217 = vrot.slane %v1168, 4
    %v1218 = vadd.f32 %v1168, %v1217
    %v1219 = vrot.slane %v1218, 2
    %v1220 = vadd.f32 %v1218, %v1219
    %v1221 = vrot.slane %v1220, 1
    %v1222 = vadd.f32 %v1220, %v1221
    %v1223 = vrot.slane %v1170, 4
    %v1224 = vadd.f32 %v1170, %v1223
    %v1225 = vrot.slane %v1224, 2
    %v1226 = vadd.f32 %v1224, %v1225
    %v1227 = vrot.slane %v1226, 1
    %v1228 = vadd.f32 %v1226, %v1227
    %v1229 = vrot.slane %v1209, 4
    %v1230 = vadd.f32 %v1209, %v1229
    %v1231 = vrot.slane %v1230, 2
    %v1232 = vadd.f32 %v1230, %v1231
    %v1233 = vrot.slane %v1232, 1
    %v1234 = vadd.f32 %v1232, %v1233
    %v1235 = vrot.slane %v1211, 4
    %v1236 = vadd.f32 %v1211, %v1235
    %v1237 = vrot.slane %v1236, 2
    %v1238 = vadd.f32 %v1236, %v1237
    %v1239 = vrot.slane %v1238, 1
    %v1240 = vadd.f32 %v1238, %v1239
    %v1241 = vmul.f32 %v1222, %v666
    %v1242 = vmul.f32 %v1228, %v666
    %v1243 = vmul.f32 %v1234, %v666
    %v1244 = vmul.f32 %v1240, %v666
    %v1245 = vsub.f32 %v1168, %v1241
    %v1246 = vsub.f32 %v1170, %v1242
    %v1247 = vsub.f32 %v1209, %v1243
    %v1248 = vsub.f32 %v1211, %v1244
    %v1249 = vmul.f32 %v1245, %v1245
    %v1250 = vmul.f32 %v1246, %v1246
    %v1251 = vmul.f32 %v1247, %v1247
    %v1252 = vmul.f32 %v1248, %v1248
    %v1253 = vrot.slane %v1249, 4
    %v1254 = vadd.f32 %v1249, %v1253
    %v1255 = vrot.slane %v1254, 2
    %v1256 = vadd.f32 %v1254, %v1255
    %v1257 = vrot.slane %v1256, 1
    %v1258 = vadd.f32 %v1256, %v1257
    %v1259 = vrot.slane %v1250, 4
    %v1260 = vadd.f32 %v1250, %v1259
    %v1261 = vrot.slane %v1260, 2
    %v1262 = vadd.f32 %v1260, %v1261
    %v1263 = vrot.slane %v1262, 1
    %v1264 = vadd.f32 %v1262, %v1263
    %v1265 = vrot.slane %v1251, 4
    %v1266 = vadd.f32 %v1251, %v1265
    %v1267 = vrot.slane %v1266, 2
    %v1268 = vadd.f32 %v1266, %v1267
    %v1269 = vrot.slane %v1268, 1
    %v1270 = vadd.f32 %v1268, %v1269
    %v1271 = vrot.slane %v1252, 4
    %v1272 = vadd.f32 %v1252, %v1271
    %v1273 = vrot.slane %v1272, 2
    %v1274 = vadd.f32 %v1272, %v1273
    %v1275 = vrot.slane %v1274, 1
    %v1276 = vadd.f32 %v1274, %v1275
    %v1277 = vmul.f32 %v1258, %v666
    %v1278 = vmul.f32 %v1264, %v666
    %v1279 = vmul.f32 %v1270, %v666
    %v1280 = vmul.f32 %v1276, %v666
    %v1281 = vadd.f32 %v1277, 0.8
    %v1282 = vadd.f32 %v1278, 0.8
    %v1283 = vadd.f32 %v1279, 0.8
    %v1284 = vadd.f32 %v1280, 0.8
    %v1285 = vrsqrt.pop %v1281
    %v1286 = vrsqrt.pop %v1282
    %v1287 = vrsqrt.pop %v1283
    %v1288 = vrsqrt.pop %v1284
    %v1289 = vmul.f32 %v1245, %v1285
    %v1290 = vmul.f32 %v1246, %v1286
    %v1291 = vmul.f32 %v1247, %v1287
    %v1292 = vmul.f32 %v1248, %v1288
    %v1294 = vlaneseq
    %v1295 = vshrl.u32 %v1294, 7
    %v1296 = vsub.s32 0, %v1295
    %v1297 = vrot.slane %v1215, %v1296
    %v1298 = vlaneseq
    %v1299 = vshrl.u32 %v1298, 7
    %v1300 = vsub.s32 1, %v1299
    %v1301 = vrot.slane %v1215, %v1300
    %v1302 = vlaneseq
    %v1303 = vshrl.u32 %v1302, 7
    %v1304 = vsub.s32 2, %v1303
    %v1305 = vrot.slane %v1215, %v1304
    %v1306 = vlaneseq
    %v1307 = vshrl.u32 %v1306, 7
    %v1308 = vsub.s32 3, %v1307
    %v1309 = vrot.slane %v1215, %v1308
    %v1314 = vmul.f32 %v1289, %v1297
    %v1315 = vmul.f32 %v1290, %v1301
    %v1316 = vmul.f32 %v1291, %v1305
    %v1317 = vmul.f32 %v1292, %v1309
    %v1319 = vlaneseq
    %v1320 = vshrl.u32 %v1319, 7
    %v1321 = vsub.s32 0, %v1320
    %v1322 = vrot.slane %v1216, %v1321
    %v1323 = vlaneseq
    %v1324 = vshrl.u32 %v1323, 7
    %v1325 = vsub.s32 1, %v1324
    %v1326 = vrot.slane %v1216, %v1325
    %v1327 = vlaneseq
    %v1328 = vshrl.u32 %v1327, 7
    %v1329 = vsub.s32 2, %v1328
    %v1330 = vrot.slane %v1216, %v1329
    %v1331 = vlaneseq
    %v1332 = vshrl.u32 %v1331, 7
    %v1333 = vsub.s32 3, %v1332
    %v1334 = vrot.slane %v1216, %v1333
    %v1339 = vadd.f32 %v1314, %v1322
    %v1340 = vadd.f32 %v1315, %v1326
    %v1341 = vadd.f32 %v1316, %v1330
    %v1342 = vadd.f32 %v1317, %v1334
    %vm1343 = vcmp.gt.f32.partialorder %v1339, 0.0
    %vm1344 = vcmp.gt.f32.partialorder %v1340, 0.0
    %vm1345 = vcmp.gt.f32.partialorder %v1341, 0.0
    %vm1346 = vcmp.gt.f32.partialorder %v1342, 0.0
    %v1347 = vmul.f32 %v1339, 0.2
    %v1348 = vmul.f32 %v1340, 0.2
    %v1349 = vmul.f32 %v1341, 0.2
    %v1350 = vmul.f32 %v1342, 0.2
    %v1351 = vsel %vm1343, %v1339, %v1347
    %v1352 = vsel %vm1344, %v1340, %v1348
    %v1353 = vsel %vm1345, %v1341, %v1349
    %v1354 = vsel %vm1346, %v1342, %v1350
    %v1355 = vpack.c.bf16 %v1351, %v1351
    %v1356 = vpack.c.bf16 %v1352, %v1352
    %v1357 = vpack.c.bf16 %v1353, %v1353
    %v1358 = vpack.c.bf16 %v1354, %v1354
    %v1359 = vld [vmem:[#allocation21] sm:$0xff]
    %v1360 = vld [vmem:[#allocation21 + $0x8] sm:$0xff]
    %v1361 = vld [vmem:[#allocation21 + $0x10] sm:$0xff]
    %v1362 = vld [vmem:[#allocation21 + $0x18] sm:$0xff]
    %v1363 = vld [vmem:[#allocation21 + $0x20] sm:$0xff]
    %v1364 = vld [vmem:[#allocation21 + $0x28] sm:$0xff]
    %v1365 = vld [vmem:[#allocation21 + $0x30] sm:$0xff]
    %v1366 = vld [vmem:[#allocation21 + $0x38] sm:$0xff]
    %v1367 = vld [vmem:[#allocation21 + $0x40] sm:$0xff]
    %v1368 = vld [vmem:[#allocation21 + $0x48] sm:$0xff]
    %v1369 = vld [vmem:[#allocation21 + $0x50] sm:$0xff]
    %v1370 = vld [vmem:[#allocation21 + $0x58] sm:$0xff]
    %v1371 = vld [vmem:[#allocation21 + $0x60] sm:$0xff]
    %v1372 = vld [vmem:[#allocation21 + $0x68] sm:$0xff]
    %v1373 = vld [vmem:[#allocation21 + $0x70] sm:$0xff]
    %v1374 = vld [vmem:[#allocation21 + $0x78] sm:$0xff]
    %v1375 = vld [vmem:[#allocation21 + $0x80] sm:$0xff]
    %v1376 = vld [vmem:[#allocation21 + $0x88] sm:$0xff]
    %v1377 = vld [vmem:[#allocation21 + $0x90] sm:$0xff]
    %v1378 = vld [vmem:[#allocation21 + $0x98] sm:$0xff]
    %v1379 = vld [vmem:[#allocation21 + $0xa0] sm:$0xff]
    %v1380 = vld [vmem:[#allocation21 + $0xa8] sm:$0xff]
    %v1381 = vld [vmem:[#allocation21 + $0xb0] sm:$0xff]
    %v1382 = vld [vmem:[#allocation21 + $0xb8] sm:$0xff]
    %v1383 = vld [vmem:[#allocation21 + $0xc0] sm:$0xff]
    %v1384 = vld [vmem:[#allocation21 + $0xc8] sm:$0xff]
    %v1385 = vld [vmem:[#allocation21 + $0xd0] sm:$0xff]
    %v1386 = vld [vmem:[#allocation21 + $0xd8] sm:$0xff]
    %v1387 = vld [vmem:[#allocation21 + $0xe0] sm:$0xff]
    %v1388 = vld [vmem:[#allocation21 + $0xe8] sm:$0xff]
    %v1389 = vld [vmem:[#allocation21 + $0xf0] sm:$0xff]
    %v1390 = vld [vmem:[#allocation21 + $0xf8] sm:$0xff]
    %v1391 = vld [vmem:[#allocation21 + $0x100] sm:$0xff]
    %v1392 = vld [vmem:[#allocation21 + $0x108] sm:$0xff]
    %v1393 = vld [vmem:[#allocation21 + $0x110] sm:$0xff]
    %v1394 = vld [vmem:[#allocation21 + $0x118] sm:$0xff]
    %v1395 = vld [vmem:[#allocation21 + $0x120] sm:$0xff]
    %v1396 = vld [vmem:[#allocation21 + $0x128] sm:$0xff]
    %v1397 = vld [vmem:[#allocation21 + $0x130] sm:$0xff]
    %v1398 = vld [vmem:[#allocation21 + $0x138] sm:$0xff]
    %v1399 = vld [vmem:[#allocation21 + $0x140] sm:$0xff]
    %v1400 = vld [vmem:[#allocation21 + $0x148] sm:$0xff]
    %v1401 = vld [vmem:[#allocation21 + $0x150] sm:$0xff]
    %v1402 = vld [vmem:[#allocation21 + $0x158] sm:$0xff]
    %v1403 = vld [vmem:[#allocation21 + $0x160] sm:$0xff]
    %v1404 = vld [vmem:[#allocation21 + $0x168] sm:$0xff]
    %v1405 = vld [vmem:[#allocation21 + $0x170] sm:$0xff]
    %v1406 = vld [vmem:[#allocation21 + $0x178] sm:$0xff]
    %v1407 = vld [vmem:[#allocation21 + $0x180] sm:$0xff]
    %v1408 = vld [vmem:[#allocation21 + $0x188] sm:$0xff]
    %v1409 = vld [vmem:[#allocation21 + $0x190] sm:$0xff]
    %v1410 = vld [vmem:[#allocation21 + $0x198] sm:$0xff]
    %v1411 = vld [vmem:[#allocation21 + $0x1a0] sm:$0xff]
    %v1412 = vld [vmem:[#allocation21 + $0x1a8] sm:$0xff]
    %v1413 = vld [vmem:[#allocation21 + $0x1b0] sm:$0xff]
    %v1414 = vld [vmem:[#allocation21 + $0x1b8] sm:$0xff]
    %v1415 = vld [vmem:[#allocation21 + $0x1c0] sm:$0xff]
    %v1416 = vld [vmem:[#allocation21 + $0x1c8] sm:$0xff]
    %v1417 = vld [vmem:[#allocation21 + $0x1d0] sm:$0xff]
    %v1418 = vld [vmem:[#allocation21 + $0x1d8] sm:$0xff]
    %v1419 = vld [vmem:[#allocation21 + $0x1e0] sm:$0xff]
    %v1420 = vld [vmem:[#allocation21 + $0x1e8] sm:$0xff]
    %v1421 = vld [vmem:[#allocation21 + $0x1f0] sm:$0xff]
    %v1422 = vld [vmem:[#allocation21 + $0x1f8] sm:$0xff]
    %v1423 = vld [vmem:[#allocation21 + $0x200] sm:$0xff]
    %v1424 = vld [vmem:[#allocation21 + $0x208] sm:$0xff]
    %v1425 = vld [vmem:[#allocation21 + $0x210] sm:$0xff]
    %v1426 = vld [vmem:[#allocation21 + $0x218] sm:$0xff]
    %v1427 = vld [vmem:[#allocation21 + $0x220] sm:$0xff]
    %v1428 = vld [vmem:[#allocation21 + $0x228] sm:$0xff]
    %v1429 = vld [vmem:[#allocation21 + $0x230] sm:$0xff]
    %v1430 = vld [vmem:[#allocation21 + $0x238] sm:$0xff]
    %v1431 = vld [vmem:[#allocation21 + $0x240] sm:$0xff]
    %v1432 = vld [vmem:[#allocation21 + $0x248] sm:$0xff]
    %v1433 = vld [vmem:[#allocation21 + $0x250] sm:$0xff]
    %v1434 = vld [vmem:[#allocation21 + $0x258] sm:$0xff]
    %v1435 = vld [vmem:[#allocation21 + $0x260] sm:$0xff]
    %v1436 = vld [vmem:[#allocation21 + $0x268] sm:$0xff]
    %v1437 = vld [vmem:[#allocation21 + $0x270] sm:$0xff]
    %v1438 = vld [vmem:[#allocation21 + $0x278] sm:$0xff]
    %v1439 = vld [vmem:[#allocation21 + $0x280] sm:$0xff]
    %v1440 = vld [vmem:[#allocation21 + $0x288] sm:$0xff]
    %v1441 = vld [vmem:[#allocation21 + $0x290] sm:$0xff]
    %v1442 = vld [vmem:[#allocation21 + $0x298] sm:$0xff]
    %v1443 = vld [vmem:[#allocation21 + $0x2a0] sm:$0xff]
    %v1444 = vld [vmem:[#allocation21 + $0x2a8] sm:$0xff]
    %v1445 = vld [vmem:[#allocation21 + $0x2b0] sm:$0xff]
    %v1446 = vld [vmem:[#allocation21 + $0x2b8] sm:$0xff]
    %v1447 = vld [vmem:[#allocation21 + $0x2c0] sm:$0xff]
    %v1448 = vld [vmem:[#allocation21 + $0x2c8] sm:$0xff]
    %v1449 = vld [vmem:[#allocation21 + $0x2d0] sm:$0xff]
    %v1450 = vld [vmem:[#allocation21 + $0x2d8] sm:$0xff]
    %v1451 = vld [vmem:[#allocation21 + $0x2e0] sm:$0xff]
    %v1452 = vld [vmem:[#allocation21 + $0x2e8] sm:$0xff]
    %v1453 = vld [vmem:[#allocation21 + $0x2f0] sm:$0xff]
    %v1454 = vld [vmem:[#allocation21 + $0x2f8] sm:$0xff]
    %v1455 = vld [vmem:[#allocation21 + $0x300] sm:$0xff]
    %v1456 = vld [vmem:[#allocation21 + $0x308] sm:$0xff]
    %v1457 = vld [vmem:[#allocation21 + $0x310] sm:$0xff]
    %v1458 = vld [vmem:[#allocation21 + $0x318] sm:$0xff]
    %v1459 = vld [vmem:[#allocation21 + $0x320] sm:$0xff]
    %v1460 = vld [vmem:[#allocation21 + $0x328] sm:$0xff]
    %v1461 = vld [vmem:[#allocation21 + $0x330] sm:$0xff]
    %v1462 = vld [vmem:[#allocation21 + $0x338] sm:$0xff]
    %v1463 = vld [vmem:[#allocation21 + $0x340] sm:$0xff]
    %v1464 = vld [vmem:[#allocation21 + $0x348] sm:$0xff]
    %v1465 = vld [vmem:[#allocation21 + $0x350] sm:$0xff]
    %v1466 = vld [vmem:[#allocation21 + $0x358] sm:$0xff]
    %v1467 = vld [vmem:[#allocation21 + $0x360] sm:$0xff]
    %v1468 = vld [vmem:[#allocation21 + $0x368] sm:$0xff]
    %v1469 = vld [vmem:[#allocation21 + $0x370] sm:$0xff]
    %v1470 = vld [vmem:[#allocation21 + $0x378] sm:$0xff]
    %v1471 = vld [vmem:[#allocation21 + $0x380] sm:$0xff]
    %v1472 = vld [vmem:[#allocation21 + $0x388] sm:$0xff]
    %v1473 = vld [vmem:[#allocation21 + $0x390] sm:$0xff]
    %v1474 = vld [vmem:[#allocation21 + $0x398] sm:$0xff]
    %v1475 = vld [vmem:[#allocation21 + $0x3a0] sm:$0xff]
    %v1476 = vld [vmem:[#allocation21 + $0x3a8] sm:$0xff]
    %v1477 = vld [vmem:[#allocation21 + $0x3b0] sm:$0xff]
    %v1478 = vld [vmem:[#allocation21 + $0x3b8] sm:$0xff]
    %v1479 = vld [vmem:[#allocation21 + $0x3c0] sm:$0xff]
    %v1480 = vld [vmem:[#allocation21 + $0x3c8] sm:$0xff]
    %v1481 = vld [vmem:[#allocation21 + $0x3d0] sm:$0xff]
    %v1482 = vld [vmem:[#allocation21 + $0x3d8] sm:$0xff]
    %v1483 = vld [vmem:[#allocation21 + $0x3e0] sm:$0xff]
    %v1484 = vld [vmem:[#allocation21 + $0x3e8] sm:$0xff]
    %v1485 = vld [vmem:[#allocation21 + $0x3f0] sm:$0xff]
    %v1486 = vld [vmem:[#allocation21 + $0x3f8] sm:$0xff]
    %v1487 = vld [vmem:[#allocation21 + $0x400] sm:$0xff]
    %v1488 = vld [vmem:[#allocation21 + $0x408] sm:$0xff]
    %v1489 = vld [vmem:[#allocation21 + $0x410] sm:$0xff]
    %v1490 = vld [vmem:[#allocation21 + $0x418] sm:$0xff]
    %v1491 = vld [vmem:[#allocation21 + $0x420] sm:$0xff]
    %v1492 = vld [vmem:[#allocation21 + $0x428] sm:$0xff]
    %v1493 = vld [vmem:[#allocation21 + $0x430] sm:$0xff]
    %v1494 = vld [vmem:[#allocation21 + $0x438] sm:$0xff]
    %v1495 = vld [vmem:[#allocation21 + $0x440] sm:$0xff]
    %v1496 = vld [vmem:[#allocation21 + $0x448] sm:$0xff]
    %v1497 = vld [vmem:[#allocation21 + $0x450] sm:$0xff]
    %v1498 = vld [vmem:[#allocation21 + $0x458] sm:$0xff]
    %v1499 = vld [vmem:[#allocation21 + $0x460] sm:$0xff]
    %v1500 = vld [vmem:[#allocation21 + $0x468] sm:$0xff]
    %v1501 = vld [vmem:[#allocation21 + $0x470] sm:$0xff]
    %v1502 = vld [vmem:[#allocation21 + $0x478] sm:$0xff]
    %v1503 = vld [vmem:[#allocation21 + $0x480] sm:$0xff]
    %v1504 = vld [vmem:[#allocation21 + $0x488] sm:$0xff]
    %v1505 = vld [vmem:[#allocation21 + $0x490] sm:$0xff]
    %v1506 = vld [vmem:[#allocation21 + $0x498] sm:$0xff]
    %v1507 = vld [vmem:[#allocation21 + $0x4a0] sm:$0xff]
    %v1508 = vld [vmem:[#allocation21 + $0x4a8] sm:$0xff]
    %v1509 = vld [vmem:[#allocation21 + $0x4b0] sm:$0xff]
    %v1510 = vld [vmem:[#allocation21 + $0x4b8] sm:$0xff]
    %v1511 = vld [vmem:[#allocation21 + $0x4c0] sm:$0xff]
    %v1512 = vld [vmem:[#allocation21 + $0x4c8] sm:$0xff]
    %v1513 = vld [vmem:[#allocation21 + $0x4d0] sm:$0xff]
    %v1514 = vld [vmem:[#allocation21 + $0x4d8] sm:$0xff]
    %v1515 = vld [vmem:[#allocation21 + $0x4e0] sm:$0xff]
    %v1516 = vld [vmem:[#allocation21 + $0x4e8] sm:$0xff]
    %v1517 = vld [vmem:[#allocation21 + $0x4f0] sm:$0xff]
    %v1518 = vld [vmem:[#allocation21 + $0x4f8] sm:$0xff]
    %v1519 = vld [vmem:[#allocation21 + $0x500] sm:$0xff]
    %v1520 = vld [vmem:[#allocation21 + $0x508] sm:$0xff]
    %v1521 = vld [vmem:[#allocation21 + $0x510] sm:$0xff]
    %v1522 = vld [vmem:[#allocation21 + $0x518] sm:$0xff]
    %v1523 = vld [vmem:[#allocation21 + $0x520] sm:$0xff]
    %v1524 = vld [vmem:[#allocation21 + $0x528] sm:$0xff]
    %v1525 = vld [vmem:[#allocation21 + $0x530] sm:$0xff]
    %v1526 = vld [vmem:[#allocation21 + $0x538] sm:$0xff]
    %v1527 = vld [vmem:[#allocation21 + $0x540] sm:$0xff]
    %v1528 = vld [vmem:[#allocation21 + $0x548] sm:$0xff]
    %v1529 = vld [vmem:[#allocation21 + $0x550] sm:$0xff]
    %v1530 = vld [vmem:[#allocation21 + $0x558] sm:$0xff]
    %v1531 = vld [vmem:[#allocation21 + $0x560] sm:$0xff]
    %v1532 = vld [vmem:[#allocation21 + $0x568] sm:$0xff]
    %v1533 = vld [vmem:[#allocation21 + $0x570] sm:$0xff]
    %v1534 = vld [vmem:[#allocation21 + $0x578] sm:$0xff]
    %v1535 = vld [vmem:[#allocation21 + $0x580] sm:$0xff]
    %v1536 = vld [vmem:[#allocation21 + $0x588] sm:$0xff]
    %v1537 = vld [vmem:[#allocation21 + $0x590] sm:$0xff]
    %v1538 = vld [vmem:[#allocation21 + $0x598] sm:$0xff]
    %v1539 = vld [vmem:[#allocation21 + $0x5a0] sm:$0xff]
    %v1540 = vld [vmem:[#allocation21 + $0x5a8] sm:$0xff]
    %v1541 = vld [vmem:[#allocation21 + $0x5b0] sm:$0xff]
    %v1542 = vld [vmem:[#allocation21 + $0x5b8] sm:$0xff]
    %v1543 = vld [vmem:[#allocation21 + $0x5c0] sm:$0xff]
    %v1544 = vld [vmem:[#allocation21 + $0x5c8] sm:$0xff]
    %v1545 = vld [vmem:[#allocation21 + $0x5d0] sm:$0xff]
    %v1546 = vld [vmem:[#allocation21 + $0x5d8] sm:$0xff]
    %v1547 = vld [vmem:[#allocation21 + $0x5e0] sm:$0xff]
    %v1548 = vld [vmem:[#allocation21 + $0x5e8] sm:$0xff]
    %v1549 = vld [vmem:[#allocation21 + $0x5f0] sm:$0xff]
    %v1550 = vld [vmem:[#allocation21 + $0x5f8] sm:$0xff]
    %v1551 = vld [vmem:[#allocation21 + $0x600] sm:$0xff]
    %v1552 = vld [vmem:[#allocation21 + $0x608] sm:$0xff]
    %v1553 = vld [vmem:[#allocation21 + $0x610] sm:$0xff]
    %v1554 = vld [vmem:[#allocation21 + $0x618] sm:$0xff]
    %v1555 = vld [vmem:[#allocation21 + $0x620] sm:$0xff]
    %v1556 = vld [vmem:[#allocation21 + $0x628] sm:$0xff]
    %v1557 = vld [vmem:[#allocation21 + $0x630] sm:$0xff]
    %v1558 = vld [vmem:[#allocation21 + $0x638] sm:$0xff]
    %v1559 = vld [vmem:[#allocation21 + $0x640] sm:$0xff]
    %v1560 = vld [vmem:[#allocation21 + $0x648] sm:$0xff]
    %v1561 = vld [vmem:[#allocation21 + $0x650] sm:$0xff]
    %v1562 = vld [vmem:[#allocation21 + $0x658] sm:$0xff]
    %v1563 = vld [vmem:[#allocation21 + $0x660] sm:$0xff]
    %v1564 = vld [vmem:[#allocation21 + $0x668] sm:$0xff]
    %v1565 = vld [vmem:[#allocation21 + $0x670] sm:$0xff]
    %v1566 = vld [vmem:[#allocation21 + $0x678] sm:$0xff]
    %v1567 = vld [vmem:[#allocation21 + $0x680] sm:$0xff]
    %v1568 = vld [vmem:[#allocation21 + $0x688] sm:$0xff]
    %v1569 = vld [vmem:[#allocation21 + $0x690] sm:$0xff]
    %v1570 = vld [vmem:[#allocation21 + $0x698] sm:$0xff]
    %v1571 = vld [vmem:[#allocation21 + $0x6a0] sm:$0xff]
    %v1572 = vld [vmem:[#allocation21 + $0x6a8] sm:$0xff]
    %v1573 = vld [vmem:[#allocation21 + $0x6b0] sm:$0xff]
    %v1574 = vld [vmem:[#allocation21 + $0x6b8] sm:$0xff]
    %v1575 = vld [vmem:[#allocation21 + $0x6c0] sm:$0xff]
    %v1576 = vld [vmem:[#allocation21 + $0x6c8] sm:$0xff]
    %v1577 = vld [vmem:[#allocation21 + $0x6d0] sm:$0xff]
    %v1578 = vld [vmem:[#allocation21 + $0x6d8] sm:$0xff]
    %v1579 = vld [vmem:[#allocation21 + $0x6e0] sm:$0xff]
    %v1580 = vld [vmem:[#allocation21 + $0x6e8] sm:$0xff]
    %v1581 = vld [vmem:[#allocation21 + $0x6f0] sm:$0xff]
    %v1582 = vld [vmem:[#allocation21 + $0x6f8] sm:$0xff]
    %v1583 = vld [vmem:[#allocation21 + $0x700] sm:$0xff]
    %v1584 = vld [vmem:[#allocation21 + $0x708] sm:$0xff]
    %v1585 = vld [vmem:[#allocation21 + $0x710] sm:$0xff]
    %v1586 = vld [vmem:[#allocation21 + $0x718] sm:$0xff]
    %v1587 = vld [vmem:[#allocation21 + $0x720] sm:$0xff]
    %v1588 = vld [vmem:[#allocation21 + $0x728] sm:$0xff]
    %v1589 = vld [vmem:[#allocation21 + $0x730] sm:$0xff]
    %v1590 = vld [vmem:[#allocation21 + $0x738] sm:$0xff]
    %v1591 = vld [vmem:[#allocation21 + $0x740] sm:$0xff]
    %v1592 = vld [vmem:[#allocation21 + $0x748] sm:$0xff]
    %v1593 = vld [vmem:[#allocation21 + $0x750] sm:$0xff]
    %v1594 = vld [vmem:[#allocation21 + $0x758] sm:$0xff]
    %v1595 = vld [vmem:[#allocation21 + $0x760] sm:$0xff]
    %v1596 = vld [vmem:[#allocation21 + $0x768] sm:$0xff]
    %v1597 = vld [vmem:[#allocation21 + $0x770] sm:$0xff]
    %v1598 = vld [vmem:[#allocation21 + $0x778] sm:$0xff]
    %v1599 = vld [vmem:[#allocation21 + $0x780] sm:$0xff]
    %v1600 = vld [vmem:[#allocation21 + $0x788] sm:$0xff]
    %v1601 = vld [vmem:[#allocation21 + $0x790] sm:$0xff]
    %v1602 = vld [vmem:[#allocation21 + $0x798] sm:$0xff]
    %v1603 = vld [vmem:[#allocation21 + $0x7a0] sm:$0xff]
    %v1604 = vld [vmem:[#allocation21 + $0x7a8] sm:$0xff]
    %v1605 = vld [vmem:[#allocation21 + $0x7b0] sm:$0xff]
    %v1606 = vld [vmem:[#allocation21 + $0x7b8] sm:$0xff]
    %v1607 = vld [vmem:[#allocation21 + $0x7c0] sm:$0xff]
    %v1608 = vld [vmem:[#allocation21 + $0x7c8] sm:$0xff]
    %v1609 = vld [vmem:[#allocation21 + $0x7d0] sm:$0xff]
    %v1610 = vld [vmem:[#allocation21 + $0x7d8] sm:$0xff]
    %v1611 = vld [vmem:[#allocation21 + $0x7e0] sm:$0xff]
    %v1612 = vld [vmem:[#allocation21 + $0x7e8] sm:$0xff]
    %v1613 = vld [vmem:[#allocation21 + $0x7f0] sm:$0xff]
    %v1614 = vld [vmem:[#allocation21 + $0x7f8] sm:$0xff]
    %v1615 = vld [vmem:[#allocation23] sm:$0xff]
    %v1617 = vlaneseq
    %v1618 = vshrl.u32 %v1617, 7
    %v1619 = vsub.s32 0, %v1618
    %v1620 = vrot.slane %v1615, %v1619
    %v1621 = vlaneseq
    %v1622 = vshrl.u32 %v1621, 7
    %v1623 = vsub.s32 1, %v1622
    %v1624 = vrot.slane %v1615, %v1623
    %v1625 = vlaneseq
    %v1626 = vshrl.u32 %v1625, 7
    %v1627 = vsub.s32 2, %v1626
    %v1628 = vrot.slane %v1615, %v1627
    %v1629 = vlaneseq
    %v1630 = vshrl.u32 %v1629, 7
    %v1631 = vsub.s32 3, %v1630
    %v1632 = vrot.slane %v1615, %v1631
    %v1633 = vlaneseq
    %v1634 = vshrl.u32 %v1633, 7
    %v1635 = vsub.s32 4, %v1634
    %v1636 = vrot.slane %v1615, %v1635
    %v1637 = vlaneseq
    %v1638 = vshrl.u32 %v1637, 7
    %v1639 = vsub.s32 5, %v1638
    %v1640 = vrot.slane %v1615, %v1639
    %v1641 = vlaneseq
    %v1642 = vshrl.u32 %v1641, 7
    %v1643 = vsub.s32 6, %v1642
    %v1644 = vrot.slane %v1615, %v1643
    %v1645 = vlaneseq
    %v1646 = vshrl.u32 %v1645, 7
    %v1647 = vsub.s32 7, %v1646
    %v1648 = vrot.slane %v1615, %v1647
    %v1913 = vunpack.c.l.b16 %v1359
    %v1914 = vunpack.c.h.b16 %v1359
    %v1915 = vunpack.c.l.b16 %v1360
    %v1916 = vunpack.c.h.b16 %v1360
    %v1917 = vunpack.c.l.b16 %v1361
    %v1918 = vunpack.c.h.b16 %v1361
    %v1919 = vunpack.c.l.b16 %v1362
    %v1920 = vunpack.c.h.b16 %v1362
    %v1921 = vunpack.c.l.b16 %v1363
    %v1922 = vunpack.c.h.b16 %v1363
    %v1923 = vunpack.c.l.b16 %v1364
    %v1924 = vunpack.c.h.b16 %v1364
    %v1925 = vunpack.c.l.b16 %v1365
    %v1926 = vunpack.c.h.b16 %v1365
    %v1927 = vunpack.c.l.b16 %v1366
    %v1928 = vunpack.c.h.b16 %v1366
    %v1929 = vunpack.c.l.b16 %v1367
    %v1930 = vunpack.c.h.b16 %v1367
    %v1931 = vunpack.c.l.b16 %v1368
    %v1932 = vunpack.c.h.b16 %v1368
    %v1933 = vunpack.c.l.b16 %v1369
    %v1934 = vunpack.c.h.b16 %v1369
    %v1935 = vunpack.c.l.b16 %v1370
    %v1936 = vunpack.c.h.b16 %v1370
    %v1937 = vunpack.c.l.b16 %v1371
    %v1938 = vunpack.c.h.b16 %v1371
    %v1939 = vunpack.c.l.b16 %v1372
    %v1940 = vunpack.c.h.b16 %v1372
    %v1941 = vunpack.c.l.b16 %v1373
    %v1942 = vunpack.c.h.b16 %v1373
    %v1943 = vunpack.c.l.b16 %v1374
    %v1944 = vunpack.c.h.b16 %v1374
    %v1945 = vunpack.c.l.b16 %v1375
    %v1946 = vunpack.c.h.b16 %v1375
    %v1947 = vunpack.c.l.b16 %v1376
    %v1948 = vunpack.c.h.b16 %v1376
    %v1949 = vunpack.c.l.b16 %v1377
    %v1950 = vunpack.c.h.b16 %v1377
    %v1951 = vunpack.c.l.b16 %v1378
    %v1952 = vunpack.c.h.b16 %v1378
    %v1953 = vunpack.c.l.b16 %v1379
    %v1954 = vunpack.c.h.b16 %v1379
    %v1955 = vunpack.c.l.b16 %v1380
    %v1956 = vunpack.c.h.b16 %v1380
    %v1957 = vunpack.c.l.b16 %v1381
    %v1958 = vunpack.c.h.b16 %v1381
    %v1959 = vunpack.c.l.b16 %v1382
    %v1960 = vunpack.c.h.b16 %v1382
    %v1961 = vunpack.c.l.b16 %v1383
    %v1962 = vunpack.c.h.b16 %v1383
    %v1963 = vunpack.c.l.b16 %v1384
    %v1964 = vunpack.c.h.b16 %v1384
    %v1965 = vunpack.c.l.b16 %v1385
    %v1966 = vunpack.c.h.b16 %v1385
    %v1967 = vunpack.c.l.b16 %v1386
    %v1968 = vunpack.c.h.b16 %v1386
    %v1969 = vunpack.c.l.b16 %v1387
    %v1970 = vunpack.c.h.b16 %v1387
    %v1971 = vunpack.c.l.b16 %v1388
    %v1972 = vunpack.c.h.b16 %v1388
    %v1973 = vunpack.c.l.b16 %v1389
    %v1974 = vunpack.c.h.b16 %v1389
    %v1975 = vunpack.c.l.b16 %v1390
    %v1976 = vunpack.c.h.b16 %v1390
    %v1977 = vunpack.c.l.b16 %v1391
    %v1978 = vunpack.c.h.b16 %v1391
    %v1979 = vunpack.c.l.b16 %v1392
    %v1980 = vunpack.c.h.b16 %v1392
    %v1981 = vunpack.c.l.b16 %v1393
    %v1982 = vunpack.c.h.b16 %v1393
    %v1983 = vunpack.c.l.b16 %v1394
    %v1984 = vunpack.c.h.b16 %v1394
    %v1985 = vunpack.c.l.b16 %v1395
    %v1986 = vunpack.c.h.b16 %v1395
    %v1987 = vunpack.c.l.b16 %v1396
    %v1988 = vunpack.c.h.b16 %v1396
    %v1989 = vunpack.c.l.b16 %v1397
    %v1990 = vunpack.c.h.b16 %v1397
    %v1991 = vunpack.c.l.b16 %v1398
    %v1992 = vunpack.c.h.b16 %v1398
    %v1993 = vunpack.c.l.b16 %v1399
    %v1994 = vunpack.c.h.b16 %v1399
    %v1995 = vunpack.c.l.b16 %v1400
    %v1996 = vunpack.c.h.b16 %v1400
    %v1997 = vunpack.c.l.b16 %v1401
    %v1998 = vunpack.c.h.b16 %v1401
    %v1999 = vunpack.c.l.b16 %v1402
    %v2000 = vunpack.c.h.b16 %v1402
    %v2001 = vunpack.c.l.b16 %v1403
    %v2002 = vunpack.c.h.b16 %v1403
    %v2003 = vunpack.c.l.b16 %v1404
    %v2004 = vunpack.c.h.b16 %v1404
    %v2005 = vunpack.c.l.b16 %v1405
    %v2006 = vunpack.c.h.b16 %v1405
    %v2007 = vunpack.c.l.b16 %v1406
    %v2008 = vunpack.c.h.b16 %v1406
    %v2009 = vunpack.c.l.b16 %v1407
    %v2010 = vunpack.c.h.b16 %v1407
    %v2011 = vunpack.c.l.b16 %v1408
    %v2012 = vunpack.c.h.b16 %v1408
    %v2013 = vunpack.c.l.b16 %v1409
    %v2014 = vunpack.c.h.b16 %v1409
    %v2015 = vunpack.c.l.b16 %v1410
    %v2016 = vunpack.c.h.b16 %v1410
    %v2017 = vunpack.c.l.b16 %v1411
    %v2018 = vunpack.c.h.b16 %v1411
    %v2019 = vunpack.c.l.b16 %v1412
    %v2020 = vunpack.c.h.b16 %v1412
    %v2021 = vunpack.c.l.b16 %v1413
    %v2022 = vunpack.c.h.b16 %v1413
    %v2023 = vunpack.c.l.b16 %v1414
    %v2024 = vunpack.c.h.b16 %v1414
    %v2025 = vunpack.c.l.b16 %v1415
    %v2026 = vunpack.c.h.b16 %v1415
    %v2027 = vunpack.c.l.b16 %v1416
    %v2028 = vunpack.c.h.b16 %v1416
    %v2029 = vunpack.c.l.b16 %v1417
    %v2030 = vunpack.c.h.b16 %v1417
    %v2031 = vunpack.c.l.b16 %v1418
    %v2032 = vunpack.c.h.b16 %v1418
    %v2033 = vunpack.c.l.b16 %v1419
    %v2034 = vunpack.c.h.b16 %v1419
    %v2035 = vunpack.c.l.b16 %v1420
    %v2036 = vunpack.c.h.b16 %v1420
    %v2037 = vunpack.c.l.b16 %v1421
    %v2038 = vunpack.c.h.b16 %v1421
    %v2039 = vunpack.c.l.b16 %v1422
    %v2040 = vunpack.c.h.b16 %v1422
    %v2041 = vunpack.c.l.b16 %v1423
    %v2042 = vunpack.c.h.b16 %v1423
    %v2043 = vunpack.c.l.b16 %v1424
    %v2044 = vunpack.c.h.b16 %v1424
    %v2045 = vunpack.c.l.b16 %v1425
    %v2046 = vunpack.c.h.b16 %v1425
    %v2047 = vunpack.c.l.b16 %v1426
    %v2048 = vunpack.c.h.b16 %v1426
    %v2049 = vunpack.c.l.b16 %v1427
    %v2050 = vunpack.c.h.b16 %v1427
    %v2051 = vunpack.c.l.b16 %v1428
    %v2052 = vunpack.c.h.b16 %v1428
    %v2053 = vunpack.c.l.b16 %v1429
    %v2054 = vunpack.c.h.b16 %v1429
    %v2055 = vunpack.c.l.b16 %v1430
    %v2056 = vunpack.c.h.b16 %v1430
    %v2057 = vunpack.c.l.b16 %v1431
    %v2058 = vunpack.c.h.b16 %v1431
    %v2059 = vunpack.c.l.b16 %v1432
    %v2060 = vunpack.c.h.b16 %v1432
    %v2061 = vunpack.c.l.b16 %v1433
    %v2062 = vunpack.c.h.b16 %v1433
    %v2063 = vunpack.c.l.b16 %v1434
    %v2064 = vunpack.c.h.b16 %v1434
    %v2065 = vunpack.c.l.b16 %v1435
    %v2066 = vunpack.c.h.b16 %v1435
    %v2067 = vunpack.c.l.b16 %v1436
    %v2068 = vunpack.c.h.b16 %v1436
    %v2069 = vunpack.c.l.b16 %v1437
    %v2070 = vunpack.c.h.b16 %v1437
    %v2071 = vunpack.c.l.b16 %v1438
    %v2072 = vunpack.c.h.b16 %v1438
    %v2073 = vunpack.c.l.b16 %v1439
    %v2074 = vunpack.c.h.b16 %v1439
    %v2075 = vunpack.c.l.b16 %v1440
    %v2076 = vunpack.c.h.b16 %v1440
    %v2077 = vunpack.c.l.b16 %v1441
    %v2078 = vunpack.c.h.b16 %v1441
    %v2079 = vunpack.c.l.b16 %v1442
    %v2080 = vunpack.c.h.b16 %v1442
    %v2081 = vunpack.c.l.b16 %v1443
    %v2082 = vunpack.c.h.b16 %v1443
    %v2083 = vunpack.c.l.b16 %v1444
    %v2084 = vunpack.c.h.b16 %v1444
    %v2085 = vunpack.c.l.b16 %v1445
    %v2086 = vunpack.c.h.b16 %v1445
    %v2087 = vunpack.c.l.b16 %v1446
    %v2088 = vunpack.c.h.b16 %v1446
    %v2089 = vunpack.c.l.b16 %v1447
    %v2090 = vunpack.c.h.b16 %v1447
    %v2091 = vunpack.c.l.b16 %v1448
    %v2092 = vunpack.c.h.b16 %v1448
    %v2093 = vunpack.c.l.b16 %v1449
    %v2094 = vunpack.c.h.b16 %v1449
    %v2095 = vunpack.c.l.b16 %v1450
    %v2096 = vunpack.c.h.b16 %v1450
    %v2097 = vunpack.c.l.b16 %v1451
    %v2098 = vunpack.c.h.b16 %v1451
    %v2099 = vunpack.c.l.b16 %v1452
    %v2100 = vunpack.c.h.b16 %v1452
    %v2101 = vunpack.c.l.b16 %v1453
    %v2102 = vunpack.c.h.b16 %v1453
    %v2103 = vunpack.c.l.b16 %v1454
    %v2104 = vunpack.c.h.b16 %v1454
    %v2105 = vunpack.c.l.b16 %v1455
    %v2106 = vunpack.c.h.b16 %v1455
    %v2107 = vunpack.c.l.b16 %v1456
    %v2108 = vunpack.c.h.b16 %v1456
    %v2109 = vunpack.c.l.b16 %v1457
    %v2110 = vunpack.c.h.b16 %v1457
    %v2111 = vunpack.c.l.b16 %v1458
    %v2112 = vunpack.c.h.b16 %v1458
    %v2113 = vunpack.c.l.b16 %v1459
    %v2114 = vunpack.c.h.b16 %v1459
    %v2115 = vunpack.c.l.b16 %v1460
    %v2116 = vunpack.c.h.b16 %v1460
    %v2117 = vunpack.c.l.b16 %v1461
    %v2118 = vunpack.c.h.b16 %v1461
    %v2119 = vunpack.c.l.b16 %v1462
    %v2120 = vunpack.c.h.b16 %v1462
    %v2121 = vunpack.c.l.b16 %v1463
    %v2122 = vunpack.c.h.b16 %v1463
    %v2123 = vunpack.c.l.b16 %v1464
    %v2124 = vunpack.c.h.b16 %v1464
    %v2125 = vunpack.c.l.b16 %v1465
    %v2126 = vunpack.c.h.b16 %v1465
    %v2127 = vunpack.c.l.b16 %v1466
    %v2128 = vunpack.c.h.b16 %v1466
    %v2129 = vunpack.c.l.b16 %v1467
    %v2130 = vunpack.c.h.b16 %v1467
    %v2131 = vunpack.c.l.b16 %v1468
    %v2132 = vunpack.c.h.b16 %v1468
    %v2133 = vunpack.c.l.b16 %v1469
    %v2134 = vunpack.c.h.b16 %v1469
    %v2135 = vunpack.c.l.b16 %v1470
    %v2136 = vunpack.c.h.b16 %v1470
    %v2137 = vunpack.c.l.b16 %v1471
    %v2138 = vunpack.c.h.b16 %v1471
    %v2139 = vunpack.c.l.b16 %v1472
    %v2140 = vunpack.c.h.b16 %v1472
    %v2141 = vunpack.c.l.b16 %v1473
    %v2142 = vunpack.c.h.b16 %v1473
    %v2143 = vunpack.c.l.b16 %v1474
    %v2144 = vunpack.c.h.b16 %v1474
    %v2145 = vunpack.c.l.b16 %v1475
    %v2146 = vunpack.c.h.b16 %v1475
    %v2147 = vunpack.c.l.b16 %v1476
    %v2148 = vunpack.c.h.b16 %v1476
    %v2149 = vunpack.c.l.b16 %v1477
    %v2150 = vunpack.c.h.b16 %v1477
    %v2151 = vunpack.c.l.b16 %v1478
    %v2152 = vunpack.c.h.b16 %v1478
    %v2153 = vunpack.c.l.b16 %v1479
    %v2154 = vunpack.c.h.b16 %v1479
    %v2155 = vunpack.c.l.b16 %v1480
    %v2156 = vunpack.c.h.b16 %v1480
    %v2157 = vunpack.c.l.b16 %v1481
    %v2158 = vunpack.c.h.b16 %v1481
    %v2159 = vunpack.c.l.b16 %v1482
    %v2160 = vunpack.c.h.b16 %v1482
    %v2161 = vunpack.c.l.b16 %v1483
    %v2162 = vunpack.c.h.b16 %v1483
    %v2163 = vunpack.c.l.b16 %v1484
    %v2164 = vunpack.c.h.b16 %v1484
    %v2165 = vunpack.c.l.b16 %v1485
    %v2166 = vunpack.c.h.b16 %v1485
    %v2167 = vunpack.c.l.b16 %v1486
    %v2168 = vunpack.c.h.b16 %v1486
    %v2169 = vunpack.c.l.b16 %v1487
    %v2170 = vunpack.c.h.b16 %v1487
    %v2171 = vunpack.c.l.b16 %v1488
    %v2172 = vunpack.c.h.b16 %v1488
    %v2173 = vunpack.c.l.b16 %v1489
    %v2174 = vunpack.c.h.b16 %v1489
    %v2175 = vunpack.c.l.b16 %v1490
    %v2176 = vunpack.c.h.b16 %v1490
    %v2177 = vunpack.c.l.b16 %v1491
    %v2178 = vunpack.c.h.b16 %v1491
    %v2179 = vunpack.c.l.b16 %v1492
    %v2180 = vunpack.c.h.b16 %v1492
    %v2181 = vunpack.c.l.b16 %v1493
    %v2182 = vunpack.c.h.b16 %v1493
    %v2183 = vunpack.c.l.b16 %v1494
    %v2184 = vunpack.c.h.b16 %v1494
    %v2185 = vunpack.c.l.b16 %v1495
    %v2186 = vunpack.c.h.b16 %v1495
    %v2187 = vunpack.c.l.b16 %v1496
    %v2188 = vunpack.c.h.b16 %v1496
    %v2189 = vunpack.c.l.b16 %v1497
    %v2190 = vunpack.c.h.b16 %v1497
    %v2191 = vunpack.c.l.b16 %v1498
    %v2192 = vunpack.c.h.b16 %v1498
    %v2193 = vunpack.c.l.b16 %v1499
    %v2194 = vunpack.c.h.b16 %v1499
    %v2195 = vunpack.c.l.b16 %v1500
    %v2196 = vunpack.c.h.b16 %v1500
    %v2197 = vunpack.c.l.b16 %v1501
    %v2198 = vunpack.c.h.b16 %v1501
    %v2199 = vunpack.c.l.b16 %v1502
    %v2200 = vunpack.c.h.b16 %v1502
    %v2201 = vunpack.c.l.b16 %v1503
    %v2202 = vunpack.c.h.b16 %v1503
    %v2203 = vunpack.c.l.b16 %v1504
    %v2204 = vunpack.c.h.b16 %v1504
    %v2205 = vunpack.c.l.b16 %v1505
    %v2206 = vunpack.c.h.b16 %v1505
    %v2207 = vunpack.c.l.b16 %v1506
    %v2208 = vunpack.c.h.b16 %v1506
    %v2209 = vunpack.c.l.b16 %v1507
    %v2210 = vunpack.c.h.b16 %v1507
    %v2211 = vunpack.c.l.b16 %v1508
    %v2212 = vunpack.c.h.b16 %v1508
    %v2213 = vunpack.c.l.b16 %v1509
    %v2214 = vunpack.c.h.b16 %v1509
    %v2215 = vunpack.c.l.b16 %v1510
    %v2216 = vunpack.c.h.b16 %v1510
    %v2217 = vunpack.c.l.b16 %v1511
    %v2218 = vunpack.c.h.b16 %v1511
    %v2219 = vunpack.c.l.b16 %v1512
    %v2220 = vunpack.c.h.b16 %v1512
    %v2221 = vunpack.c.l.b16 %v1513
    %v2222 = vunpack.c.h.b16 %v1513
    %v2223 = vunpack.c.l.b16 %v1514
    %v2224 = vunpack.c.h.b16 %v1514
    %v2225 = vunpack.c.l.b16 %v1515
    %v2226 = vunpack.c.h.b16 %v1515
    %v2227 = vunpack.c.l.b16 %v1516
    %v2228 = vunpack.c.h.b16 %v1516
    %v2229 = vunpack.c.l.b16 %v1517
    %v2230 = vunpack.c.h.b16 %v1517
    %v2231 = vunpack.c.l.b16 %v1518
    %v2232 = vunpack.c.h.b16 %v1518
    %v2233 = vunpack.c.l.b16 %v1519
    %v2234 = vunpack.c.h.b16 %v1519
    %v2235 = vunpack.c.l.b16 %v1520
    %v2236 = vunpack.c.h.b16 %v1520
    %v2237 = vunpack.c.l.b16 %v1521
    %v2238 = vunpack.c.h.b16 %v1521
    %v2239 = vunpack.c.l.b16 %v1522
    %v2240 = vunpack.c.h.b16 %v1522
    %v2241 = vunpack.c.l.b16 %v1523
    %v2242 = vunpack.c.h.b16 %v1523
    %v2243 = vunpack.c.l.b16 %v1524
    %v2244 = vunpack.c.h.b16 %v1524
    %v2245 = vunpack.c.l.b16 %v1525
    %v2246 = vunpack.c.h.b16 %v1525
    %v2247 = vunpack.c.l.b16 %v1526
    %v2248 = vunpack.c.h.b16 %v1526
    %v2249 = vunpack.c.l.b16 %v1527
    %v2250 = vunpack.c.h.b16 %v1527
    %v2251 = vunpack.c.l.b16 %v1528
    %v2252 = vunpack.c.h.b16 %v1528
    %v2253 = vunpack.c.l.b16 %v1529
    %v2254 = vunpack.c.h.b16 %v1529
    %v2255 = vunpack.c.l.b16 %v1530
    %v2256 = vunpack.c.h.b16 %v1530
    %v2257 = vunpack.c.l.b16 %v1531
    %v2258 = vunpack.c.h.b16 %v1531
    %v2259 = vunpack.c.l.b16 %v1532
    %v2260 = vunpack.c.h.b16 %v1532
    %v2261 = vunpack.c.l.b16 %v1533
    %v2262 = vunpack.c.h.b16 %v1533
    %v2263 = vunpack.c.l.b16 %v1534
    %v2264 = vunpack.c.h.b16 %v1534
    %v2265 = vunpack.c.l.b16 %v1535
    %v2266 = vunpack.c.h.b16 %v1535
    %v2267 = vunpack.c.l.b16 %v1536
    %v2268 = vunpack.c.h.b16 %v1536
    %v2269 = vunpack.c.l.b16 %v1537
    %v2270 = vunpack.c.h.b16 %v1537
    %v2271 = vunpack.c.l.b16 %v1538
    %v2272 = vunpack.c.h.b16 %v1538
    %v2273 = vunpack.c.l.b16 %v1539
    %v2274 = vunpack.c.h.b16 %v1539
    %v2275 = vunpack.c.l.b16 %v1540
    %v2276 = vunpack.c.h.b16 %v1540
    %v2277 = vunpack.c.l.b16 %v1541
    %v2278 = vunpack.c.h.b16 %v1541
    %v2279 = vunpack.c.l.b16 %v1542
    %v2280 = vunpack.c.h.b16 %v1542
    %v2281 = vunpack.c.l.b16 %v1543
    %v2282 = vunpack.c.h.b16 %v1543
    %v2283 = vunpack.c.l.b16 %v1544
    %v2284 = vunpack.c.h.b16 %v1544
    %v2285 = vunpack.c.l.b16 %v1545
    %v2286 = vunpack.c.h.b16 %v1545
    %v2287 = vunpack.c.l.b16 %v1546
    %v2288 = vunpack.c.h.b16 %v1546
    %v2289 = vunpack.c.l.b16 %v1547
    %v2290 = vunpack.c.h.b16 %v1547
    %v2291 = vunpack.c.l.b16 %v1548
    %v2292 = vunpack.c.h.b16 %v1548
    %v2293 = vunpack.c.l.b16 %v1549
    %v2294 = vunpack.c.h.b16 %v1549
    %v2295 = vunpack.c.l.b16 %v1550
    %v2296 = vunpack.c.h.b16 %v1550
    %v2297 = vunpack.c.l.b16 %v1551
    %v2298 = vunpack.c.h.b16 %v1551
    %v2299 = vunpack.c.l.b16 %v1552
    %v2300 = vunpack.c.h.b16 %v1552
    %v2301 = vunpack.c.l.b16 %v1553
    %v2302 = vunpack.c.h.b16 %v1553
    %v2303 = vunpack.c.l.b16 %v1554
    %v2304 = vunpack.c.h.b16 %v1554
    %v2305 = vunpack.c.l.b16 %v1555
    %v2306 = vunpack.c.h.b16 %v1555
    %v2307 = vunpack.c.l.b16 %v1556
    %v2308 = vunpack.c.h.b16 %v1556
    %v2309 = vunpack.c.l.b16 %v1557
    %v2310 = vunpack.c.h.b16 %v1557
    %v2311 = vunpack.c.l.b16 %v1558
    %v2312 = vunpack.c.h.b16 %v1558
    %v2313 = vunpack.c.l.b16 %v1559
    %v2314 = vunpack.c.h.b16 %v1559
    %v2315 = vunpack.c.l.b16 %v1560
    %v2316 = vunpack.c.h.b16 %v1560
    %v2317 = vunpack.c.l.b16 %v1561
    %v2318 = vunpack.c.h.b16 %v1561
    %v2319 = vunpack.c.l.b16 %v1562
    %v2320 = vunpack.c.h.b16 %v1562
    %v2321 = vunpack.c.l.b16 %v1563
    %v2322 = vunpack.c.h.b16 %v1563
    %v2323 = vunpack.c.l.b16 %v1564
    %v2324 = vunpack.c.h.b16 %v1564
    %v2325 = vunpack.c.l.b16 %v1565
    %v2326 = vunpack.c.h.b16 %v1565
    %v2327 = vunpack.c.l.b16 %v1566
    %v2328 = vunpack.c.h.b16 %v1566
    %v2329 = vunpack.c.l.b16 %v1567
    %v2330 = vunpack.c.h.b16 %v1567
    %v2331 = vunpack.c.l.b16 %v1568
    %v2332 = vunpack.c.h.b16 %v1568
    %v2333 = vunpack.c.l.b16 %v1569
    %v2334 = vunpack.c.h.b16 %v1569
    %v2335 = vunpack.c.l.b16 %v1570
    %v2336 = vunpack.c.h.b16 %v1570
    %v2337 = vunpack.c.l.b16 %v1571
    %v2338 = vunpack.c.h.b16 %v1571
    %v2339 = vunpack.c.l.b16 %v1572
    %v2340 = vunpack.c.h.b16 %v1572
    %v2341 = vunpack.c.l.b16 %v1573
    %v2342 = vunpack.c.h.b16 %v1573
    %v2343 = vunpack.c.l.b16 %v1574
    %v2344 = vunpack.c.h.b16 %v1574
    %v2345 = vunpack.c.l.b16 %v1575
    %v2346 = vunpack.c.h.b16 %v1575
    %v2347 = vunpack.c.l.b16 %v1576
    %v2348 = vunpack.c.h.b16 %v1576
    %v2349 = vunpack.c.l.b16 %v1577
    %v2350 = vunpack.c.h.b16 %v1577
    %v2351 = vunpack.c.l.b16 %v1578
    %v2352 = vunpack.c.h.b16 %v1578
    %v2353 = vunpack.c.l.b16 %v1579
    %v2354 = vunpack.c.h.b16 %v1579
    %v2355 = vunpack.c.l.b16 %v1580
    %v2356 = vunpack.c.h.b16 %v1580
    %v2357 = vunpack.c.l.b16 %v1581
    %v2358 = vunpack.c.h.b16 %v1581
    %v2359 = vunpack.c.l.b16 %v1582
    %v2360 = vunpack.c.h.b16 %v1582
    %v2361 = vunpack.c.l.b16 %v1583
    %v2362 = vunpack.c.h.b16 %v1583
    %v2363 = vunpack.c.l.b16 %v1584
    %v2364 = vunpack.c.h.b16 %v1584
    %v2365 = vunpack.c.l.b16 %v1585
    %v2366 = vunpack.c.h.b16 %v1585
    %v2367 = vunpack.c.l.b16 %v1586
    %v2368 = vunpack.c.h.b16 %v1586
    %v2369 = vunpack.c.l.b16 %v1587
    %v2370 = vunpack.c.h.b16 %v1587
    %v2371 = vunpack.c.l.b16 %v1588
    %v2372 = vunpack.c.h.b16 %v1588
    %v2373 = vunpack.c.l.b16 %v1589
    %v2374 = vunpack.c.h.b16 %v1589
    %v2375 = vunpack.c.l.b16 %v1590
    %v2376 = vunpack.c.h.b16 %v1590
    %v2377 = vunpack.c.l.b16 %v1591
    %v2378 = vunpack.c.h.b16 %v1591
    %v2379 = vunpack.c.l.b16 %v1592
    %v2380 = vunpack.c.h.b16 %v1592
    %v2381 = vunpack.c.l.b16 %v1593
    %v2382 = vunpack.c.h.b16 %v1593
    %v2383 = vunpack.c.l.b16 %v1594
    %v2384 = vunpack.c.h.b16 %v1594
    %v2385 = vunpack.c.l.b16 %v1595
    %v2386 = vunpack.c.h.b16 %v1595
    %v2387 = vunpack.c.l.b16 %v1596
    %v2388 = vunpack.c.h.b16 %v1596
    %v2389 = vunpack.c.l.b16 %v1597
    %v2390 = vunpack.c.h.b16 %v1597
    %v2391 = vunpack.c.l.b16 %v1598
    %v2392 = vunpack.c.h.b16 %v1598
    %v2393 = vunpack.c.l.b16 %v1599
    %v2394 = vunpack.c.h.b16 %v1599
    %v2395 = vunpack.c.l.b16 %v1600
    %v2396 = vunpack.c.h.b16 %v1600
    %v2397 = vunpack.c.l.b16 %v1601
    %v2398 = vunpack.c.h.b16 %v1601
    %v2399 = vunpack.c.l.b16 %v1602
    %v2400 = vunpack.c.h.b16 %v1602
    %v2401 = vunpack.c.l.b16 %v1603
    %v2402 = vunpack.c.h.b16 %v1603
    %v2403 = vunpack.c.l.b16 %v1604
    %v2404 = vunpack.c.h.b16 %v1604
    %v2405 = vunpack.c.l.b16 %v1605
    %v2406 = vunpack.c.h.b16 %v1605
    %v2407 = vunpack.c.l.b16 %v1606
    %v2408 = vunpack.c.h.b16 %v1606
    %v2409 = vunpack.c.l.b16 %v1607
    %v2410 = vunpack.c.h.b16 %v1607
    %v2411 = vunpack.c.l.b16 %v1608
    %v2412 = vunpack.c.h.b16 %v1608
    %v2413 = vunpack.c.l.b16 %v1609
    %v2414 = vunpack.c.h.b16 %v1609
    %v2415 = vunpack.c.l.b16 %v1610
    %v2416 = vunpack.c.h.b16 %v1610
    %v2417 = vunpack.c.l.b16 %v1611
    %v2418 = vunpack.c.h.b16 %v1611
    %v2419 = vunpack.c.l.b16 %v1612
    %v2420 = vunpack.c.h.b16 %v1612
    %v2421 = vunpack.c.l.b16 %v1613
    %v2422 = vunpack.c.h.b16 %v1613
    %v2423 = vunpack.c.l.b16 %v1614
    %v2424 = vunpack.c.h.b16 %v1614
    %v2425 = vpack.c.b16 %v1921, %v1913
    %v2426 = vpack.c.b16 %v1922, %v1914
    %v2427 = vpack.c.b16 %v1923, %v1915
    %v2428 = vpack.c.b16 %v1924, %v1916
    %v2429 = vpack.c.b16 %v1925, %v1917
    %v2430 = vpack.c.b16 %v1926, %v1918
    %v2431 = vpack.c.b16 %v1927, %v1919
    %v2432 = vpack.c.b16 %v1928, %v1920
    %v2433 = vpack.c.b16 %v1937, %v1929
    %v2434 = vpack.c.b16 %v1938, %v1930
    %v2435 = vpack.c.b16 %v1939, %v1931
    %v2436 = vpack.c.b16 %v1940, %v1932
    %v2437 = vpack.c.b16 %v1941, %v1933
    %v2438 = vpack.c.b16 %v1942, %v1934
    %v2439 = vpack.c.b16 %v1943, %v1935
    %v2440 = vpack.c.b16 %v1944, %v1936
    %v2441 = vpack.c.b16 %v1953, %v1945
    %v2442 = vpack.c.b16 %v1954, %v1946
    %v2443 = vpack.c.b16 %v1955, %v1947
    %v2444 = vpack.c.b16 %v1956, %v1948
    %v2445 = vpack.c.b16 %v1957, %v1949
    %v2446 = vpack.c.b16 %v1958, %v1950
    %v2447 = vpack.c.b16 %v1959, %v1951
    %v2448 = vpack.c.b16 %v1960, %v1952
    %v2449 = vpack.c.b16 %v1969, %v1961
    %v2450 = vpack.c.b16 %v1970, %v1962
    %v2451 = vpack.c.b16 %v1971, %v1963
    %v2452 = vpack.c.b16 %v1972, %v1964
    %v2453 = vpack.c.b16 %v1973, %v1965
    %v2454 = vpack.c.b16 %v1974, %v1966
    %v2455 = vpack.c.b16 %v1975, %v1967
    %v2456 = vpack.c.b16 %v1976, %v1968
    %v2457 = vpack.c.b16 %v1985, %v1977
    %v2458 = vpack.c.b16 %v1986, %v1978
    %v2459 = vpack.c.b16 %v1987, %v1979
    %v2460 = vpack.c.b16 %v1988, %v1980
    %v2461 = vpack.c.b16 %v1989, %v1981
    %v2462 = vpack.c.b16 %v1990, %v1982
    %v2463 = vpack.c.b16 %v1991, %v1983
    %v2464 = vpack.c.b16 %v1992, %v1984
    %v2465 = vpack.c.b16 %v2001, %v1993
    %v2466 = vpack.c.b16 %v2002, %v1994
    %v2467 = vpack.c.b16 %v2003, %v1995
    %v2468 = vpack.c.b16 %v2004, %v1996
    %v2469 = vpack.c.b16 %v2005, %v1997
    %v2470 = vpack.c.b16 %v2006, %v1998
    %v2471 = vpack.c.b16 %v2007, %v1999
    %v2472 = vpack.c.b16 %v2008, %v2000
    %v2473 = vpack.c.b16 %v2017, %v2009
    %v2474 = vpack.c.b16 %v2018, %v2010
    %v2475 = vpack.c.b16 %v2019, %v2011
    %v2476 = vpack.c.b16 %v2020, %v2012
    %v2477 = vpack.c.b16 %v2021, %v2013
    %v2478 = vpack.c.b16 %v2022, %v2014
    %v2479 = vpack.c.b16 %v2023, %v2015
    %v2480 = vpack.c.b16 %v2024, %v2016
    %v2481 = vpack.c.b16 %v2033, %v2025
    %v2482 = vpack.c.b16 %v2034, %v2026
    %v2483 = vpack.c.b16 %v2035, %v2027
    %v2484 = vpack.c.b16 %v2036, %v2028
    %v2485 = vpack.c.b16 %v2037, %v2029
    %v2486 = vpack.c.b16 %v2038, %v2030
    %v2487 = vpack.c.b16 %v2039, %v2031
    %v2488 = vpack.c.b16 %v2040, %v2032
    %v2489 = vpack.c.b16 %v2049, %v2041
    %v2490 = vpack.c.b16 %v2050, %v2042
    %v2491 = vpack.c.b16 %v2051, %v2043
    %v2492 = vpack.c.b16 %v2052, %v2044
    %v2493 = vpack.c.b16 %v2053, %v2045
    %v2494 = vpack.c.b16 %v2054, %v2046
    %v2495 = vpack.c.b16 %v2055, %v2047
    %v2496 = vpack.c.b16 %v2056, %v2048
    %v2497 = vpack.c.b16 %v2065, %v2057
    %v2498 = vpack.c.b16 %v2066, %v2058
    %v2499 = vpack.c.b16 %v2067, %v2059
    %v2500 = vpack.c.b16 %v2068, %v2060
    %v2501 = vpack.c.b16 %v2069, %v2061
    %v2502 = vpack.c.b16 %v2070, %v2062
    %v2503 = vpack.c.b16 %v2071, %v2063
    %v2504 = vpack.c.b16 %v2072, %v2064
    %v2505 = vpack.c.b16 %v2081, %v2073
    %v2506 = vpack.c.b16 %v2082, %v2074
    %v2507 = vpack.c.b16 %v2083, %v2075
    %v2508 = vpack.c.b16 %v2084, %v2076
    %v2509 = vpack.c.b16 %v2085, %v2077
    %v2510 = vpack.c.b16 %v2086, %v2078
    %v2511 = vpack.c.b16 %v2087, %v2079
    %v2512 = vpack.c.b16 %v2088, %v2080
    %v2513 = vpack.c.b16 %v2097, %v2089
    %v2514 = vpack.c.b16 %v2098, %v2090
    %v2515 = vpack.c.b16 %v2099, %v2091
    %v2516 = vpack.c.b16 %v2100, %v2092
    %v2517 = vpack.c.b16 %v2101, %v2093
    %v2518 = vpack.c.b16 %v2102, %v2094
    %v2519 = vpack.c.b16 %v2103, %v2095
    %v2520 = vpack.c.b16 %v2104, %v2096
    %v2521 = vpack.c.b16 %v2113, %v2105
    %v2522 = vpack.c.b16 %v2114, %v2106
    %v2523 = vpack.c.b16 %v2115, %v2107
    %v2524 = vpack.c.b16 %v2116, %v2108
    %v2525 = vpack.c.b16 %v2117, %v2109
    %v2526 = vpack.c.b16 %v2118, %v2110
    %v2527 = vpack.c.b16 %v2119, %v2111
    %v2528 = vpack.c.b16 %v2120, %v2112
    %v2529 = vpack.c.b16 %v2129, %v2121
    %v2530 = vpack.c.b16 %v2130, %v2122
    %v2531 = vpack.c.b16 %v2131, %v2123
    %v2532 = vpack.c.b16 %v2132, %v2124
    %v2533 = vpack.c.b16 %v2133, %v2125
    %v2534 = vpack.c.b16 %v2134, %v2126
    %v2535 = vpack.c.b16 %v2135, %v2127
    %v2536 = vpack.c.b16 %v2136, %v2128
    %v2537 = vpack.c.b16 %v2145, %v2137
    %v2538 = vpack.c.b16 %v2146, %v2138
    %v2539 = vpack.c.b16 %v2147, %v2139
    %v2540 = vpack.c.b16 %v2148, %v2140
    %v2541 = vpack.c.b16 %v2149, %v2141
    %v2542 = vpack.c.b16 %v2150, %v2142
    %v2543 = vpack.c.b16 %v2151, %v2143
    %v2544 = vpack.c.b16 %v2152, %v2144
    %v2545 = vpack.c.b16 %v2161, %v2153
    %v2546 = vpack.c.b16 %v2162, %v2154
    %v2547 = vpack.c.b16 %v2163, %v2155
    %v2548 = vpack.c.b16 %v2164, %v2156
    %v2549 = vpack.c.b16 %v2165, %v2157
    %v2550 = vpack.c.b16 %v2166, %v2158
    %v2551 = vpack.c.b16 %v2167, %v2159
    %v2552 = vpack.c.b16 %v2168, %v2160
    %v2553 = vpack.c.b16 %v2177, %v2169
    %v2554 = vpack.c.b16 %v2178, %v2170
    %v2555 = vpack.c.b16 %v2179, %v2171
    %v2556 = vpack.c.b16 %v2180, %v2172
    %v2557 = vpack.c.b16 %v2181, %v2173
    %v2558 = vpack.c.b16 %v2182, %v2174
    %v2559 = vpack.c.b16 %v2183, %v2175
    %v2560 = vpack.c.b16 %v2184, %v2176
    %v2561 = vpack.c.b16 %v2193, %v2185
    %v2562 = vpack.c.b16 %v2194, %v2186
    %v2563 = vpack.c.b16 %v2195, %v2187
    %v2564 = vpack.c.b16 %v2196, %v2188
    %v2565 = vpack.c.b16 %v2197, %v2189
    %v2566 = vpack.c.b16 %v2198, %v2190
    %v2567 = vpack.c.b16 %v2199, %v2191
    %v2568 = vpack.c.b16 %v2200, %v2192
    %v2569 = vpack.c.b16 %v2209, %v2201
    %v2570 = vpack.c.b16 %v2210, %v2202
    %v2571 = vpack.c.b16 %v2211, %v2203
    %v2572 = vpack.c.b16 %v2212, %v2204
    %v2573 = vpack.c.b16 %v2213, %v2205
    %v2574 = vpack.c.b16 %v2214, %v2206
    %v2575 = vpack.c.b16 %v2215, %v2207
    %v2576 = vpack.c.b16 %v2216, %v2208
    %v2577 = vpack.c.b16 %v2225, %v2217
    %v2578 = vpack.c.b16 %v2226, %v2218
    %v2579 = vpack.c.b16 %v2227, %v2219
    %v2580 = vpack.c.b16 %v2228, %v2220
    %v2581 = vpack.c.b16 %v2229, %v2221
    %v2582 = vpack.c.b16 %v2230, %v2222
    %v2583 = vpack.c.b16 %v2231, %v2223
    %v2584 = vpack.c.b16 %v2232, %v2224
    %v2585 = vpack.c.b16 %v2241, %v2233
    %v2586 = vpack.c.b16 %v2242, %v2234
    %v2587 = vpack.c.b16 %v2243, %v2235
    %v2588 = vpack.c.b16 %v2244, %v2236
    %v2589 = vpack.c.b16 %v2245, %v2237
    %v2590 = vpack.c.b16 %v2246, %v2238
    %v2591 = vpack.c.b16 %v2247, %v2239
    %v2592 = vpack.c.b16 %v2248, %v2240
    %v2593 = vpack.c.b16 %v2257, %v2249
    %v2594 = vpack.c.b16 %v2258, %v2250
    %v2595 = vpack.c.b16 %v2259, %v2251
    %v2596 = vpack.c.b16 %v2260, %v2252
    %v2597 = vpack.c.b16 %v2261, %v2253
    %v2598 = vpack.c.b16 %v2262, %v2254
    %v2599 = vpack.c.b16 %v2263, %v2255
    %v2600 = vpack.c.b16 %v2264, %v2256
    %v2601 = vpack.c.b16 %v2273, %v2265
    %v2602 = vpack.c.b16 %v2274, %v2266
    %v2603 = vpack.c.b16 %v2275, %v2267
    %v2604 = vpack.c.b16 %v2276, %v2268
    %v2605 = vpack.c.b16 %v2277, %v2269
    %v2606 = vpack.c.b16 %v2278, %v2270
    %v2607 = vpack.c.b16 %v2279, %v2271
    %v2608 = vpack.c.b16 %v2280, %v2272
    %v2609 = vpack.c.b16 %v2289, %v2281
    %v2610 = vpack.c.b16 %v2290, %v2282
    %v2611 = vpack.c.b16 %v2291, %v2283
    %v2612 = vpack.c.b16 %v2292, %v2284
    %v2613 = vpack.c.b16 %v2293, %v2285
    %v2614 = vpack.c.b16 %v2294, %v2286
    %v2615 = vpack.c.b16 %v2295, %v2287
    %v2616 = vpack.c.b16 %v2296, %v2288
    %v2617 = vpack.c.b16 %v2305, %v2297
    %v2618 = vpack.c.b16 %v2306, %v2298
    %v2619 = vpack.c.b16 %v2307, %v2299
    %v2620 = vpack.c.b16 %v2308, %v2300
    %v2621 = vpack.c.b16 %v2309, %v2301
    %v2622 = vpack.c.b16 %v2310, %v2302
    %v2623 = vpack.c.b16 %v2311, %v2303
    %v2624 = vpack.c.b16 %v2312, %v2304
    %v2625 = vpack.c.b16 %v2321, %v2313
    %v2626 = vpack.c.b16 %v2322, %v2314
    %v2627 = vpack.c.b16 %v2323, %v2315
    %v2628 = vpack.c.b16 %v2324, %v2316
    %v2629 = vpack.c.b16 %v2325, %v2317
    %v2630 = vpack.c.b16 %v2326, %v2318
    %v2631 = vpack.c.b16 %v2327, %v2319
    %v2632 = vpack.c.b16 %v2328, %v2320
    %v2633 = vpack.c.b16 %v2337, %v2329
    %v2634 = vpack.c.b16 %v2338, %v2330
    %v2635 = vpack.c.b16 %v2339, %v2331
    %v2636 = vpack.c.b16 %v2340, %v2332
    %v2637 = vpack.c.b16 %v2341, %v2333
    %v2638 = vpack.c.b16 %v2342, %v2334
    %v2639 = vpack.c.b16 %v2343, %v2335
    %v2640 = vpack.c.b16 %v2344, %v2336
    %v2641 = vpack.c.b16 %v2353, %v2345
    %v2642 = vpack.c.b16 %v2354, %v2346
    %v2643 = vpack.c.b16 %v2355, %v2347
    %v2644 = vpack.c.b16 %v2356, %v2348
    %v2645 = vpack.c.b16 %v2357, %v2349
    %v2646 = vpack.c.b16 %v2358, %v2350
    %v2647 = vpack.c.b16 %v2359, %v2351
    %v2648 = vpack.c.b16 %v2360, %v2352
    %v2649 = vpack.c.b16 %v2369, %v2361
    %v2650 = vpack.c.b16 %v2370, %v2362
    %v2651 = vpack.c.b16 %v2371, %v2363
    %v2652 = vpack.c.b16 %v2372, %v2364
    %v2653 = vpack.c.b16 %v2373, %v2365
    %v2654 = vpack.c.b16 %v2374, %v2366
    %v2655 = vpack.c.b16 %v2375, %v2367
    %v2656 = vpack.c.b16 %v2376, %v2368
    %v2657 = vpack.c.b16 %v2385, %v2377
    %v2658 = vpack.c.b16 %v2386, %v2378
    %v2659 = vpack.c.b16 %v2387, %v2379
    %v2660 = vpack.c.b16 %v2388, %v2380
    %v2661 = vpack.c.b16 %v2389, %v2381
    %v2662 = vpack.c.b16 %v2390, %v2382
    %v2663 = vpack.c.b16 %v2391, %v2383
    %v2664 = vpack.c.b16 %v2392, %v2384
    %v2665 = vpack.c.b16 %v2401, %v2393
    %v2666 = vpack.c.b16 %v2402, %v2394
    %v2667 = vpack.c.b16 %v2403, %v2395
    %v2668 = vpack.c.b16 %v2404, %v2396
    %v2669 = vpack.c.b16 %v2405, %v2397
    %v2670 = vpack.c.b16 %v2406, %v2398
    %v2671 = vpack.c.b16 %v2407, %v2399
    %v2672 = vpack.c.b16 %v2408, %v2400
    %v2673 = vpack.c.b16 %v2417, %v2409
    %v2674 = vpack.c.b16 %v2418, %v2410
    %v2675 = vpack.c.b16 %v2419, %v2411
    %v2676 = vpack.c.b16 %v2420, %v2412
    %v2677 = vpack.c.b16 %v2421, %v2413
    %v2678 = vpack.c.b16 %v2422, %v2414
    %v2679 = vpack.c.b16 %v2423, %v2415
    %v2680 = vpack.c.b16 %v2424, %v2416
    %2937 = vmatprep.subr.bf16.mxu0 %v2426
    %2938 = vmatpush1.bf16.msra.mxu0 %v2425
    %2939 = vmatprep.subr.bf16.mxu0 %v2434
    %2940 = vmatpush1.bf16.msra.mxu0 %v2433
    %2941 = vmatprep.subr.bf16.mxu0 %v2442
    %2942 = vmatpush1.bf16.msra.mxu0 %v2441
    %2943 = vmatprep.subr.bf16.mxu0 %v2450
    %2944 = vmatpush1.bf16.msra.mxu0 %v2449
    %2945 = vmatprep.subr.bf16.mxu0 %v2458
    %2946 = vmatpush1.bf16.msra.mxu0 %v2457
    %2947 = vmatprep.subr.bf16.mxu0 %v2466
    %2948 = vmatpush1.bf16.msra.mxu0 %v2465
    %2949 = vmatprep.subr.bf16.mxu0 %v2474
    %2950 = vmatpush1.bf16.msra.mxu0 %v2473
    %2951 = vmatprep.subr.bf16.mxu0 %v2482
    %2952 = vmatpush1.bf16.msra.mxu0 %v2481
    %2953 = vmatprep.subr.bf16.mxu0 %v2490
    %2954 = vmatpush1.bf16.msra.mxu0 %v2489
    %2955 = vmatprep.subr.bf16.mxu0 %v2498
    %2956 = vmatpush1.bf16.msra.mxu0 %v2497
    %2957 = vmatprep.subr.bf16.mxu0 %v2506
    %2958 = vmatpush1.bf16.msra.mxu0 %v2505
    %2959 = vmatprep.subr.bf16.mxu0 %v2514
    %2960 = vmatpush1.bf16.msra.mxu0 %v2513
    %2961 = vmatprep.subr.bf16.mxu0 %v2522
    %2962 = vmatpush1.bf16.msra.mxu0 %v2521
    %2963 = vmatprep.subr.bf16.mxu0 %v2530
    %2964 = vmatpush1.bf16.msra.mxu0 %v2529
    %2965 = vmatprep.subr.bf16.mxu0 %v2538
    %2966 = vmatpush1.bf16.msra.mxu0 %v2537
    %2967 = vmatprep.subr.bf16.mxu0 %v2546
    %2968 = vmatpush1.bf16.msra.mxu0 %v2545
    %2969 = vmatprep.mubr.bf16.mxu0 %v1356
    %2970 = vmatmul.mubr.bf16.gmra.mrb[0].mxu0 %v1355
    %v2971 = vpop.f32.mrb[0].mxu0
    %v2972 = vadd.f32 %v1620, %v2971
    %v2973 = vpop.f32.mrb[0].mxu0
    %v2974 = vadd.f32 %v1624, %v2973
    %v2975 = vpop.f32.mrb[0].mxu0
    %v2976 = vpop.f32.mrb[0].mxu0
    %2977 = vdwg.mxu0
    %2978 = vmatprep.subr.bf16.mxu0 %v2554
    %2979 = vmatpush1.bf16.msra.mxu0 %v2553
    %2980 = vmatprep.subr.bf16.mxu0 %v2562
    %2981 = vmatpush1.bf16.msra.mxu0 %v2561
    %2982 = vmatprep.subr.bf16.mxu0 %v2570
    %2983 = vmatpush1.bf16.msra.mxu0 %v2569
    %2984 = vmatprep.subr.bf16.mxu0 %v2578
    %2985 = vmatpush1.bf16.msra.mxu0 %v2577
    %2986 = vmatprep.subr.bf16.mxu0 %v2586
    %2987 = vmatpush1.bf16.msra.mxu0 %v2585
    %2988 = vmatprep.subr.bf16.mxu0 %v2594
    %2989 = vmatpush1.bf16.msra.mxu0 %v2593
    %2990 = vmatprep.subr.bf16.mxu0 %v2602
    %2991 = vmatpush1.bf16.msra.mxu0 %v2601
    %2992 = vmatprep.subr.bf16.mxu0 %v2610
    %2993 = vmatpush1.bf16.msra.mxu0 %v2609
    %2994 = vmatprep.subr.bf16.mxu0 %v2618
    %2995 = vmatpush1.bf16.msra.mxu0 %v2617
    %2996 = vmatprep.subr.bf16.mxu0 %v2626
    %2997 = vmatpush1.bf16.msra.mxu0 %v2625
    %2998 = vmatprep.subr.bf16.mxu0 %v2634
    %2999 = vmatpush1.bf16.msra.mxu0 %v2633
    %3000 = vmatprep.subr.bf16.mxu0 %v2642
    %3001 = vmatpush1.bf16.msra.mxu0 %v2641
    %3002 = vmatprep.subr.bf16.mxu0 %v2650
    %3003 = vmatpush1.bf16.msra.mxu0 %v2649
    %3004 = vmatprep.subr.bf16.mxu0 %v2658
    %3005 = vmatpush1.bf16.msra.mxu0 %v2657
    %3006 = vmatprep.subr.bf16.mxu0 %v2666
    %3007 = vmatpush1.bf16.msra.mxu0 %v2665
    %3008 = vmatprep.subr.bf16.mxu0 %v2674
    %3009 = vmatpush1.bf16.msra.mxu0 %v2673
    %3010 = vmatprep.mubr.bf16.mxu0 %v1358
    %3011 = vmatmul.mubr.bf16.gmra.mrb[0].mxu0 %v1357
    %v3012 = vpop.f32.mrb[0].mxu0
    %v3013 = vadd.f32 %v2972, %v3012
    %v3014 = vpop.f32.mrb[0].mxu0
    %v3015 = vadd.f32 %v2974, %v3014
    %v3016 = vpop.f32.mrb[0].mxu0
    %v3017 = vpop.f32.mrb[0].mxu0
    %3018 = vdwg.mxu0
    %3019 = vmatprep.subr.bf16.mxu0 %v2428
    %3020 = vmatpush1.bf16.msra.mxu0 %v2427
    %3021 = vmatprep.subr.bf16.mxu0 %v2436
    %3022 = vmatpush1.bf16.msra.mxu0 %v2435
    %3023 = vmatprep.subr.bf16.mxu0 %v2444
    %3024 = vmatpush1.bf16.msra.mxu0 %v2443
    %3025 = vmatprep.subr.bf16.mxu0 %v2452
    %3026 = vmatpush1.bf16.msra.mxu0 %v2451
    %3027 = vmatprep.subr.bf16.mxu0 %v2460
    %3028 = vmatpush1.bf16.msra.mxu0 %v2459
    %3029 = vmatprep.subr.bf16.mxu0 %v2468
    %3030 = vmatpush1.bf16.msra.mxu0 %v2467
    %3031 = vmatprep.subr.bf16.mxu0 %v2476
    %3032 = vmatpush1.bf16.msra.mxu0 %v2475
    %3033 = vmatprep.subr.bf16.mxu0 %v2484
    %3034 = vmatpush1.bf16.msra.mxu0 %v2483
    %3035 = vmatprep.subr.bf16.mxu0 %v2492
    %3036 = vmatpush1.bf16.msra.mxu0 %v2491
    %3037 = vmatprep.subr.bf16.mxu0 %v2500
    %3038 = vmatpush1.bf16.msra.mxu0 %v2499
    %3039 = vmatprep.subr.bf16.mxu0 %v2508
    %3040 = vmatpush1.bf16.msra.mxu0 %v2507
    %3041 = vmatprep.subr.bf16.mxu0 %v2516
    %3042 = vmatpush1.bf16.msra.mxu0 %v2515
    %3043 = vmatprep.subr.bf16.mxu0 %v2524
    %3044 = vmatpush1.bf16.msra.mxu0 %v2523
    %3045 = vmatprep.subr.bf16.mxu0 %v2532
    %3046 = vmatpush1.bf16.msra.mxu0 %v2531
    %3047 = vmatprep.subr.bf16.mxu0 %v2540
    %3048 = vmatpush1.bf16.msra.mxu0 %v2539
    %3049 = vmatprep.subr.bf16.mxu0 %v2548
    %3050 = vmatpush1.bf16.msra.mxu0 %v2547
    %3051 = vmatprep.mubr.bf16.mxu0 %v1356
    %3052 = vmatmul.mubr.bf16.gmra.mrb[0].mxu0 %v1355
    %v3053 = vpop.f32.mrb[0].mxu0
    %v3054 = vadd.f32 %v1628, %v3053
    %v3055 = vpop.f32.mrb[0].mxu0
    %v3056 = vadd.f32 %v1632, %v3055
    %v3057 = vpop.f32.mrb[0].mxu0
    %v3058 = vpop.f32.mrb[0].mxu0
    %3059 = vdwg.mxu0
    %3060 = vmatprep.subr.bf16.mxu0 %v2556
    %3061 = vmatpush1.bf16.msra.mxu0 %v2555
    %3062 = vmatprep.subr.bf16.mxu0 %v2564
    %3063 = vmatpush1.bf16.msra.mxu0 %v2563
    %3064 = vmatprep.subr.bf16.mxu0 %v2572
    %3065 = vmatpush1.bf16.msra.mxu0 %v2571
    %3066 = vmatprep.subr.bf16.mxu0 %v2580
    %3067 = vmatpush1.bf16.msra.mxu0 %v2579
    %3068 = vmatprep.subr.bf16.mxu0 %v2588
    %3069 = vmatpush1.bf16.msra.mxu0 %v2587
    %3070 = vmatprep.subr.bf16.mxu0 %v2596
    %3071 = vmatpush1.bf16.msra.mxu0 %v2595
    %3072 = vmatprep.subr.bf16.mxu0 %v2604
    %3073 = vmatpush1.bf16.msra.mxu0 %v2603
    %3074 = vmatprep.subr.bf16.mxu0 %v2612
    %3075 = vmatpush1.bf16.msra.mxu0 %v2611
    %3076 = vmatprep.subr.bf16.mxu0 %v2620
    %3077 = vmatpush1.bf16.msra.mxu0 %v2619
    %3078 = vmatprep.subr.bf16.mxu0 %v2628
    %3079 = vmatpush1.bf16.msra.mxu0 %v2627
    %3080 = vmatprep.subr.bf16.mxu0 %v2636
    %3081 = vmatpush1.bf16.msra.mxu0 %v2635
    %3082 = vmatprep.subr.bf16.mxu0 %v2644
    %3083 = vmatpush1.bf16.msra.mxu0 %v2643
    %3084 = vmatprep.subr.bf16.mxu0 %v2652
    %3085 = vmatpush1.bf16.msra.mxu0 %v2651
    %3086 = vmatprep.subr.bf16.mxu0 %v2660
    %3087 = vmatpush1.bf16.msra.mxu0 %v2659
    %3088 = vmatprep.subr.bf16.mxu0 %v2668
    %3089 = vmatpush1.bf16.msra.mxu0 %v2667
    %3090 = vmatprep.subr.bf16.mxu0 %v2676
    %3091 = vmatpush1.bf16.msra.mxu0 %v2675
    %3092 = vmatprep.mubr.bf16.mxu0 %v1358
    %3093 = vmatmul.mubr.bf16.gmra.mrb[0].mxu0 %v1357
    %v3094 = vpop.f32.mrb[0].mxu0
    %v3095 = vadd.f32 %v3054, %v3094
    %v3096 = vpop.f32.mrb[0].mxu0
    %v3097 = vadd.f32 %v3056, %v3096
    %v3098 = vpop.f32.mrb[0].mxu0
    %v3099 = vpop.f32.mrb[0].mxu0
    %3100 = vdwg.mxu0
    %3101 = vmatprep.subr.bf16.mxu0 %v2430
    %3102 = vmatpush1.bf16.msra.mxu0 %v2429
    %3103 = vmatprep.subr.bf16.mxu0 %v2438
    %3104 = vmatpush1.bf16.msra.mxu0 %v2437
    %3105 = vmatprep.subr.bf16.mxu0 %v2446
    %3106 = vmatpush1.bf16.msra.mxu0 %v2445
    %3107 = vmatprep.subr.bf16.mxu0 %v2454
    %3108 = vmatpush1.bf16.msra.mxu0 %v2453
    %3109 = vmatprep.subr.bf16.mxu0 %v2462
    %3110 = vmatpush1.bf16.msra.mxu0 %v2461
    %3111 = vmatprep.subr.bf16.mxu0 %v2470
    %3112 = vmatpush1.bf16.msra.mxu0 %v2469
    %3113 = vmatprep.subr.bf16.mxu0 %v2478
    %3114 = vmatpush1.bf16.msra.mxu0 %v2477
    %3115 = vmatprep.subr.bf16.mxu0 %v2486
    %3116 = vmatpush1.bf16.msra.mxu0 %v2485
    %3117 = vmatprep.subr.bf16.mxu0 %v2494
    %3118 = vmatpush1.bf16.msra.mxu0 %v2493
    %3119 = vmatprep.subr.bf16.mxu0 %v2502
    %3120 = vmatpush1.bf16.msra.mxu0 %v2501
    %3121 = vmatprep.subr.bf16.mxu0 %v2510
    %3122 = vmatpush1.bf16.msra.mxu0 %v2509
    %3123 = vmatprep.subr.bf16.mxu0 %v2518
    %3124 = vmatpush1.bf16.msra.mxu0 %v2517
    %3125 = vmatprep.subr.bf16.mxu0 %v2526
    %3126 = vmatpush1.bf16.msra.mxu0 %v2525
    %3127 = vmatprep.subr.bf16.mxu0 %v2534
    %3128 = vmatpush1.bf16.msra.mxu0 %v2533
    %3129 = vmatprep.subr.bf16.mxu0 %v2542
    %3130 = vmatpush1.bf16.msra.mxu0 %v2541
    %3131 = vmatprep.subr.bf16.mxu0 %v2550
    %3132 = vmatpush1.bf16.msra.mxu0 %v2549
    %3133 = vmatprep.mubr.bf16.mxu0 %v1356
    %3134 = vmatmul.mubr.bf16.gmra.mrb[0].mxu0 %v1355
    %v3135 = vpop.f32.mrb[0].mxu0
    %v3136 = vadd.f32 %v1636, %v3135
    %v3137 = vpop.f32.mrb[0].mxu0
    %v3138 = vadd.f32 %v1640, %v3137
    %v3139 = vpop.f32.mrb[0].mxu0
    %v3140 = vpop.f32.mrb[0].mxu0
    %3141 = vdwg.mxu0
    %3142 = vmatprep.subr.bf16.mxu0 %v2558
    %3143 = vmatpush1.bf16.msra.mxu0 %v2557
    %3144 = vmatprep.subr.bf16.mxu0 %v2566
    %3145 = vmatpush1.bf16.msra.mxu0 %v2565
    %3146 = vmatprep.subr.bf16.mxu0 %v2574
    %3147 = vmatpush1.bf16.msra.mxu0 %v2573
    %3148 = vmatprep.subr.bf16.mxu0 %v2582
    %3149 = vmatpush1.bf16.msra.mxu0 %v2581
    %3150 = vmatprep.subr.bf16.mxu0 %v2590
    %3151 = vmatpush1.bf16.msra.mxu0 %v2589
    %3152 = vmatprep.subr.bf16.mxu0 %v2598
    %3153 = vmatpush1.bf16.msra.mxu0 %v2597
    %3154 = vmatprep.subr.bf16.mxu0 %v2606
    %3155 = vmatpush1.bf16.msra.mxu0 %v2605
    %3156 = vmatprep.subr.bf16.mxu0 %v2614
    %3157 = vmatpush1.bf16.msra.mxu0 %v2613
    %3158 = vmatprep.subr.bf16.mxu0 %v2622
    %3159 = vmatpush1.bf16.msra.mxu0 %v2621
    %3160 = vmatprep.subr.bf16.mxu0 %v2630
    %3161 = vmatpush1.bf16.msra.mxu0 %v2629
    %3162 = vmatprep.subr.bf16.mxu0 %v2638
    %3163 = vmatpush1.bf16.msra.mxu0 %v2637
    %3164 = vmatprep.subr.bf16.mxu0 %v2646
    %3165 = vmatpush1.bf16.msra.mxu0 %v2645
    %3166 = vmatprep.subr.bf16.mxu0 %v2654
    %3167 = vmatpush1.bf16.msra.mxu0 %v2653
    %3168 = vmatprep.subr.bf16.mxu0 %v2662
    %3169 = vmatpush1.bf16.msra.mxu0 %v2661
    %3170 = vmatprep.subr.bf16.mxu0 %v2670
    %3171 = vmatpush1.bf16.msra.mxu0 %v2669
    %3172 = vmatprep.subr.bf16.mxu0 %v2678
    %3173 = vmatpush1.bf16.msra.mxu0 %v2677
    %3174 = vmatprep.mubr.bf16.mxu0 %v1358
    %3175 = vmatmul.mubr.bf16.gmra.mrb[0].mxu0 %v1357
    %v3176 = vpop.f32.mrb[0].mxu0
    %v3177 = vadd.f32 %v3136, %v3176
    %v3178 = vpop.f32.mrb[0].mxu0
    %v3179 = vadd.f32 %v3138, %v3178
    %v3180 = vpop.f32.mrb[0].mxu0
    %v3181 = vpop.f32.mrb[0].mxu0
    %3182 = vdwg.mxu0
    %3183 = vmatprep.subr.bf16.mxu0 %v2432
    %3184 = vmatpush1.bf16.msra.mxu0 %v2431
    %3185 = vmatprep.subr.bf16.mxu0 %v2440
    %3186 = vmatpush1.bf16.msra.mxu0 %v2439
    %3187 = vmatprep.subr.bf16.mxu0 %v2448
    %3188 = vmatpush1.bf16.msra.mxu0 %v2447
    %3189 = vmatprep.subr.bf16.mxu0 %v2456
    %3190 = vmatpush1.bf16.msra.mxu0 %v2455
    %3191 = vmatprep.subr.bf16.mxu0 %v2464
    %3192 = vmatpush1.bf16.msra.mxu0 %v2463
    %3193 = vmatprep.subr.bf16.mxu0 %v2472
    %3194 = vmatpush1.bf16.msra.mxu0 %v2471
    %3195 = vmatprep.subr.bf16.mxu0 %v2480
    %3196 = vmatpush1.bf16.msra.mxu0 %v2479
    %3197 = vmatprep.subr.bf16.mxu0 %v2488
    %3198 = vmatpush1.bf16.msra.mxu0 %v2487
    %3199 = vmatprep.subr.bf16.mxu0 %v2496
    %3200 = vmatpush1.bf16.msra.mxu0 %v2495
    %3201 = vmatprep.subr.bf16.mxu0 %v2504
    %3202 = vmatpush1.bf16.msra.mxu0 %v2503
    %3203 = vmatprep.subr.bf16.mxu0 %v2512
    %3204 = vmatpush1.bf16.msra.mxu0 %v2511
    %3205 = vmatprep.subr.bf16.mxu0 %v2520
    %3206 = vmatpush1.bf16.msra.mxu0 %v2519
    %3207 = vmatprep.subr.bf16.mxu0 %v2528
    %3208 = vmatpush1.bf16.msra.mxu0 %v2527
    %3209 = vmatprep.subr.bf16.mxu0 %v2536
    %3210 = vmatpush1.bf16.msra.mxu0 %v2535
    %3211 = vmatprep.subr.bf16.mxu0 %v2544
    %3212 = vmatpush1.bf16.msra.mxu0 %v2543
    %3213 = vmatprep.subr.bf16.mxu0 %v2552
    %3214 = vmatpush1.bf16.msra.mxu0 %v2551
    %3215 = vmatprep.mubr.bf16.mxu0 %v1356
    %3216 = vmatmul.mubr.bf16.gmra.mrb[0].mxu0 %v1355
    %v3217 = vpop.f32.mrb[0].mxu0
    %v3218 = vadd.f32 %v1644, %v3217
    %v3219 = vpop.f32.mrb[0].mxu0
    %v3220 = vadd.f32 %v1648, %v3219
    %v3221 = vpop.f32.mrb[0].mxu0
    %v3222 = vpop.f32.mrb[0].mxu0
    %3223 = vdwg.mxu0
    %3224 = vmatprep.subr.bf16.mxu0 %v2560
    %3225 = vmatpush1.bf16.msra.mxu0 %v2559
    %3226 = vmatprep.subr.bf16.mxu0 %v2568
    %3227 = vmatpush1.bf16.msra.mxu0 %v2567
    %3228 = vmatprep.subr.bf16.mxu0 %v2576
    %3229 = vmatpush1.bf16.msra.mxu0 %v2575
    %3230 = vmatprep.subr.bf16.mxu0 %v2584
    %3231 = vmatpush1.bf16.msra.mxu0 %v2583
    %3232 = vmatprep.subr.bf16.mxu0 %v2592
    %3233 = vmatpush1.bf16.msra.mxu0 %v2591
    %3234 = vmatprep.subr.bf16.mxu0 %v2600
    %3235 = vmatpush1.bf16.msra.mxu0 %v2599
    %3236 = vmatprep.subr.bf16.mxu0 %v2608
    %3237 = vmatpush1.bf16.msra.mxu0 %v2607
    %3238 = vmatprep.subr.bf16.mxu0 %v2616
    %3239 = vmatpush1.bf16.msra.mxu0 %v2615
    %3240 = vmatprep.subr.bf16.mxu0 %v2624
    %3241 = vmatpush1.bf16.msra.mxu0 %v2623
    %3242 = vmatprep.subr.bf16.mxu0 %v2632
    %3243 = vmatpush1.bf16.msra.mxu0 %v2631
    %3244 = vmatprep.subr.bf16.mxu0 %v2640
    %3245 = vmatpush1.bf16.msra.mxu0 %v2639
    %3246 = vmatprep.subr.bf16.mxu0 %v2648
    %3247 = vmatpush1.bf16.msra.mxu0 %v2647
    %3248 = vmatprep.subr.bf16.mxu0 %v2656
    %3249 = vmatpush1.bf16.msra.mxu0 %v2655
    %3250 = vmatprep.subr.bf16.mxu0 %v2664
    %3251 = vmatpush1.bf16.msra.mxu0 %v2663
    %3252 = vmatprep.subr.bf16.mxu0 %v2672
    %3253 = vmatpush1.bf16.msra.mxu0 %v2671
    %3254 = vmatprep.subr.bf16.mxu0 %v2680
    %3255 = vmatpush1.bf16.msra.mxu0 %v2679
    %3256 = vmatprep.mubr.bf16.mxu0 %v1358
    %3257 = vmatmul.mubr.bf16.gmra.mrb[0].mxu0 %v1357
    %v3258 = vpop.f32.mrb[0].mxu0
    %v3259 = vadd.f32 %v3218, %v3258
    %v3260 = vpop.f32.mrb[0].mxu0
    %v3261 = vadd.f32 %v3220, %v3260
    %v3262 = vpop.f32.mrb[0].mxu0
    %v3263 = vpop.f32.mrb[0].mxu0
    %3264 = vdwg.mxu0
    %v3265 = vld [vmem:[#allocation24] sm:$0xff]
    %v3266 = vld [vmem:[#allocation26] sm:$0xff]
    %v3267 = vrot.slane %v3013, 4
    %v3268 = vadd.f32 %v3013, %v3267
    %v3269 = vrot.slane %v3268, 2
    %v3270 = vadd.f32 %v3268, %v3269
    %v3271 = vrot.slane %v3270, 1
    %v3272 = vadd.f32 %v3270, %v3271
    %v3273 = vrot.slane %v3015, 4
    %v3274 = vadd.f32 %v3015, %v3273
    %v3275 = vrot.slane %v3274, 2
    %v3276 = vadd.f32 %v3274, %v3275
    %v3277 = vrot.slane %v3276, 1
    %v3278 = vadd.f32 %v3276, %v3277
    %v3279 = vrot.slane %v3095, 4
    %v3280 = vadd.f32 %v3095, %v3279
    %v3281 = vrot.slane %v3280, 2
    %v3282 = vadd.f32 %v3280, %v3281
    %v3283 = vrot.slane %v3282, 1
    %v3284 = vadd.f32 %v3282, %v3283
    %v3285 = vrot.slane %v3097, 4
    %v3286 = vadd.f32 %v3097, %v3285
    %v3287 = vrot.slane %v3286, 2
    %v3288 = vadd.f32 %v3286, %v3287
    %v3289 = vrot.slane %v3288, 1
    %v3290 = vadd.f32 %v3288, %v3289
    %v3291 = vrot.slane %v3177, 4
    %v3292 = vadd.f32 %v3177, %v3291
    %v3293 = vrot.slane %v3292, 2
    %v3294 = vadd.f32 %v3292, %v3293
    %v3295 = vrot.slane %v3294, 1
    %v3296 = vadd.f32 %v3294, %v3295
    %v3297 = vrot.slane %v3179, 4
    %v3298 = vadd.f32 %v3179, %v3297
    %v3299 = vrot.slane %v3298, 2
    %v3300 = vadd.f32 %v3298, %v3299
    %v3301 = vrot.slane %v3300, 1
    %v3302 = vadd.f32 %v3300, %v3301
    %v3303 = vrot.slane %v3259, 4
    %v3304 = vadd.f32 %v3259, %v3303
    %v3305 = vrot.slane %v3304, 2
    %v3306 = vadd.f32 %v3304, %v3305
    %v3307 = vrot.slane %v3306, 1
    %v3308 = vadd.f32 %v3306, %v3307
    %v3309 = vrot.slane %v3261, 4
    %v3310 = vadd.f32 %v3261, %v3309
    %v3311 = vrot.slane %v3310, 2
    %v3312 = vadd.f32 %v3310, %v3311
    %v3313 = vrot.slane %v3312, 1
    %v3314 = vadd.f32 %v3312, %v3313
    %v3315 = vmul.f32 %v3272, %v666
    %v3316 = vmul.f32 %v3278, %v666
    %v3317 = vmul.f32 %v3284, %v666
    %v3318 = vmul.f32 %v3290, %v666
    %v3319 = vmul.f32 %v3296, %v666
    %v3320 = vmul.f32 %v3302, %v666
    %v3321 = vmul.f32 %v3308, %v666
    %v3322 = vmul.f32 %v3314, %v666
    %v3323 = vsub.f32 %v3013, %v3315
    %v3324 = vsub.f32 %v3015, %v3316
    %v3325 = vsub.f32 %v3095, %v3317
    %v3326 = vsub.f32 %v3097, %v3318
    %v3327 = vsub.f32 %v3177, %v3319
    %v3328 = vsub.f32 %v3179, %v3320
    %v3329 = vsub.f32 %v3259, %v3321
    %v3330 = vsub.f32 %v3261, %v3322
    %v3331 = vmul.f32 %v3323, %v3323
    %v3332 = vmul.f32 %v3324, %v3324
    %v3333 = vmul.f32 %v3325, %v3325
    %v3334 = vmul.f32 %v3326, %v3326
    %v3335 = vmul.f32 %v3327, %v3327
    %v3336 = vmul.f32 %v3328, %v3328
    %v3337 = vmul.f32 %v3329, %v3329
    %v3338 = vmul.f32 %v3330, %v3330
    %v3339 = vrot.slane %v3331, 4
    %v3340 = vadd.f32 %v3331, %v3339
    %v3341 = vrot.slane %v3340, 2
    %v3342 = vadd.f32 %v3340, %v3341
    %v3343 = vrot.slane %v3342, 1
    %v3344 = vadd.f32 %v3342, %v3343
    %v3345 = vrot.slane %v3332, 4
    %v3346 = vadd.f32 %v3332, %v3345
    %v3347 = vrot.slane %v3346, 2
    %v3348 = vadd.f32 %v3346, %v3347
    %v3349 = vrot.slane %v3348, 1
    %v3350 = vadd.f32 %v3348, %v3349
    %v3351 = vrot.slane %v3333, 4
    %v3352 = vadd.f32 %v3333, %v3351
    %v3353 = vrot.slane %v3352, 2
    %v3354 = vadd.f32 %v3352, %v3353
    %v3355 = vrot.slane %v3354, 1
    %v3356 = vadd.f32 %v3354, %v3355
    %v3357 = vrot.slane %v3334, 4
    %v3358 = vadd.f32 %v3334, %v3357
    %v3359 = vrot.slane %v3358, 2
    %v3360 = vadd.f32 %v3358, %v3359
    %v3361 = vrot.slane %v3360, 1
    %v3362 = vadd.f32 %v3360, %v3361
    %v3363 = vrot.slane %v3335, 4
    %v3364 = vadd.f32 %v3335, %v3363
    %v3365 = vrot.slane %v3364, 2
    %v3366 = vadd.f32 %v3364, %v3365
    %v3367 = vrot.slane %v3366, 1
    %v3368 = vadd.f32 %v3366, %v3367
    %v3369 = vrot.slane %v3336, 4
    %v3370 = vadd.f32 %v3336, %v3369
    %v3371 = vrot.slane %v3370, 2
    %v3372 = vadd.f32 %v3370, %v3371
    %v3373 = vrot.slane %v3372, 1
    %v3374 = vadd.f32 %v3372, %v3373
    %v3375 = vrot.slane %v3337, 4
    %v3376 = vadd.f32 %v3337, %v3375
    %v3377 = vrot.slane %v3376, 2
    %v3378 = vadd.f32 %v3376, %v3377
    %v3379 = vrot.slane %v3378, 1
    %v3380 = vadd.f32 %v3378, %v3379
    %v3381 = vrot.slane %v3338, 4
    %v3382 = vadd.f32 %v3338, %v3381
    %v3383 = vrot.slane %v3382, 2
    %v3384 = vadd.f32 %v3382, %v3383
    %v3385 = vrot.slane %v3384, 1
    %v3386 = vadd.f32 %v3384, %v3385
    %v3387 = vmul.f32 %v3344, %v666
    %v3388 = vmul.f32 %v3350, %v666
    %v3389 = vmul.f32 %v3356, %v666
    %v3390 = vmul.f32 %v3362, %v666
    %v3391 = vmul.f32 %v3368, %v666
    %v3392 = vmul.f32 %v3374, %v666
    %v3393 = vmul.f32 %v3380, %v666
    %v3394 = vmul.f32 %v3386, %v666
    %v3395 = vadd.f32 %v3387, 0.8
    %v3396 = vadd.f32 %v3388, 0.8
    %v3397 = vadd.f32 %v3389, 0.8
    %v3398 = vadd.f32 %v3390, 0.8
    %v3399 = vadd.f32 %v3391, 0.8
    %v3400 = vadd.f32 %v3392, 0.8
    %v3401 = vadd.f32 %v3393, 0.8
    %v3402 = vadd.f32 %v3394, 0.8
    %v3403 = vrsqrt.pop %v3395
    %v3404 = vrsqrt.pop %v3396
    %v3405 = vrsqrt.pop %v3397
    %v3406 = vrsqrt.pop %v3398
    %v3407 = vrsqrt.pop %v3399
    %v3408 = vrsqrt.pop %v3400
    %v3409 = vrsqrt.pop %v3401
    %v3410 = vrsqrt.pop %v3402
    %v3411 = vmul.f32 %v3323, %v3403
    %v3412 = vmul.f32 %v3324, %v3404
    %v3413 = vmul.f32 %v3325, %v3405
    %v3414 = vmul.f32 %v3326, %v3406
    %v3415 = vmul.f32 %v3327, %v3407
    %v3416 = vmul.f32 %v3328, %v3408
    %v3417 = vmul.f32 %v3329, %v3409
    %v3418 = vmul.f32 %v3330, %v3410
    %v3420 = vlaneseq
    %v3421 = vshrl.u32 %v3420, 7
    %v3422 = vsub.s32 0, %v3421
    %v3423 = vrot.slane %v3265, %v3422
    %v3424 = vlaneseq
    %v3425 = vshrl.u32 %v3424, 7
    %v3426 = vsub.s32 1, %v3425
    %v3427 = vrot.slane %v3265, %v3426
    %v3428 = vlaneseq
    %v3429 = vshrl.u32 %v3428, 7
    %v3430 = vsub.s32 2, %v3429
    %v3431 = vrot.slane %v3265, %v3430
    %v3432 = vlaneseq
    %v3433 = vshrl.u32 %v3432, 7
    %v3434 = vsub.s32 3, %v3433
    %v3435 = vrot.slane %v3265, %v3434
    %v3436 = vlaneseq
    %v3437 = vshrl.u32 %v3436, 7
    %v3438 = vsub.s32 4, %v3437
    %v3439 = vrot.slane %v3265, %v3438
    %v3440 = vlaneseq
    %v3441 = vshrl.u32 %v3440, 7
    %v3442 = vsub.s32 5, %v3441
    %v3443 = vrot.slane %v3265, %v3442
    %v3444 = vlaneseq
    %v3445 = vshrl.u32 %v3444, 7
    %v3446 = vsub.s32 6, %v3445
    %v3447 = vrot.slane %v3265, %v3446
    %v3448 = vlaneseq
    %v3449 = vshrl.u32 %v3448, 7
    %v3450 = vsub.s32 7, %v3449
    %v3451 = vrot.slane %v3265, %v3450
    %v3460 = vmul.f32 %v3411, %v3423
    %v3461 = vmul.f32 %v3412, %v3427
    %v3462 = vmul.f32 %v3413, %v3431
    %v3463 = vmul.f32 %v3414, %v3435
    %v3464 = vmul.f32 %v3415, %v3439
    %v3465 = vmul.f32 %v3416, %v3443
    %v3466 = vmul.f32 %v3417, %v3447
    %v3467 = vmul.f32 %v3418, %v3451
    %v3469 = vlaneseq
    %v3470 = vshrl.u32 %v3469, 7
    %v3471 = vsub.s32 0, %v3470
    %v3472 = vrot.slane %v3266, %v3471
    %v3473 = vlaneseq
    %v3474 = vshrl.u32 %v3473, 7
    %v3475 = vsub.s32 1, %v3474
    %v3476 = vrot.slane %v3266, %v3475
    %v3477 = vlaneseq
    %v3478 = vshrl.u32 %v3477, 7
    %v3479 = vsub.s32 2, %v3478
    %v3480 = vrot.slane %v3266, %v3479
    %v3481 = vlaneseq
    %v3482 = vshrl.u32 %v3481, 7
    %v3483 = vsub.s32 3, %v3482
    %v3484 = vrot.slane %v3266, %v3483
    %v3485 = vlaneseq
    %v3486 = vshrl.u32 %v3485, 7
    %v3487 = vsub.s32 4, %v3486
    %v3488 = vrot.slane %v3266, %v3487
    %v3489 = vlaneseq
    %v3490 = vshrl.u32 %v3489, 7
    %v3491 = vsub.s32 5, %v3490
    %v3492 = vrot.slane %v3266, %v3491
    %v3493 = vlaneseq
    %v3494 = vshrl.u32 %v3493, 7
    %v3495 = vsub.s32 6, %v3494
    %v3496 = vrot.slane %v3266, %v3495
    %v3497 = vlaneseq
    %v3498 = vshrl.u32 %v3497, 7
    %v3499 = vsub.s32 7, %v3498
    %v3500 = vrot.slane %v3266, %v3499
    %v3509 = vadd.f32 %v3460, %v3472
    %v3510 = vadd.f32 %v3461, %v3476
    %v3511 = vadd.f32 %v3462, %v3480
    %v3512 = vadd.f32 %v3463, %v3484
    %v3513 = vadd.f32 %v3464, %v3488
    %v3514 = vadd.f32 %v3465, %v3492
    %v3515 = vadd.f32 %v3466, %v3496
    %v3516 = vadd.f32 %v3467, %v3500
    %vm3517 = vcmp.gt.f32.partialorder %v3509, 0.0
    %vm3518 = vcmp.gt.f32.partialorder %v3510, 0.0
    %vm3519 = vcmp.gt.f32.partialorder %v3511, 0.0
    %vm3520 = vcmp.gt.f32.partialorder %v3512, 0.0
    %vm3521 = vcmp.gt.f32.partialorder %v3513, 0.0
    %vm3522 = vcmp.gt.f32.partialorder %v3514, 0.0
    %vm3523 = vcmp.gt.f32.partialorder %v3515, 0.0
    %vm3524 = vcmp.gt.f32.partialorder %v3516, 0.0
    %v3525 = vmul.f32 %v3509, 0.2
    %v3526 = vmul.f32 %v3510, 0.2
    %v3527 = vmul.f32 %v3511, 0.2
    %v3528 = vmul.f32 %v3512, 0.2
    %v3529 = vmul.f32 %v3513, 0.2
    %v3530 = vmul.f32 %v3514, 0.2
    %v3531 = vmul.f32 %v3515, 0.2
    %v3532 = vmul.f32 %v3516, 0.2
    %v3533 = vsel %vm3517, %v3509, %v3525
    %v3534 = vsel %vm3518, %v3510, %v3526
    %v3535 = vsel %vm3519, %v3511, %v3527
    %v3536 = vsel %vm3520, %v3512, %v3528
    %v3537 = vsel %vm3521, %v3513, %v3529
    %v3538 = vsel %vm3522, %v3514, %v3530
    %v3539 = vsel %vm3523, %v3515, %v3531
    %v3540 = vsel %vm3524, %v3516, %v3532
    %v3541 = vpack.c.bf16 %v3533, %v3533
    %v3542 = vpack.c.bf16 %v3534, %v3534
    %v3543 = vpack.c.bf16 %v3535, %v3535
    %v3544 = vpack.c.bf16 %v3536, %v3536
    %v3545 = vpack.c.bf16 %v3537, %v3537
    %v3546 = vpack.c.bf16 %v3538, %v3538
    %v3547 = vpack.c.bf16 %v3539, %v3539
    %v3548 = vpack.c.bf16 %v3540, %v3540
    %v3549 = vld [vmem:[#allocation27] sm:$0xff]
    %v3550 = vld [vmem:[#allocation27 + $0x8] sm:$0xff]
    %v3551 = vld [vmem:[#allocation27 + $0x10] sm:$0xff]
    %v3552 = vld [vmem:[#allocation27 + $0x18] sm:$0xf]
    %v3553 = vld [vmem:[#allocation27 + $0x1c] sm:$0xff]
    %v3554 = vld [vmem:[#allocation27 + $0x24] sm:$0xff]
    %v3555 = vld [vmem:[#allocation27 + $0x2c] sm:$0xff]
    %v3556 = vld [vmem:[#allocation27 + $0x34] sm:$0xf]
    %v3557 = vld [vmem:[#allocation27 + $0x38] sm:$0xff]
    %v3558 = vld [vmem:[#allocation27 + $0x40] sm:$0xff]
    %v3559 = vld [vmem:[#allocation27 + $0x48] sm:$0xff]
    %v3560 = vld [vmem:[#allocation27 + $0x50] sm:$0xf]
    %v3561 = vld [vmem:[#allocation27 + $0x54] sm:$0xff]
    %v3562 = vld [vmem:[#allocation27 + $0x5c] sm:$0xff]
    %v3563 = vld [vmem:[#allocation27 + $0x64] sm:$0xff]
    %v3564 = vld [vmem:[#allocation27 + $0x6c] sm:$0xf]
    %v3565 = vld [vmem:[#allocation27 + $0x70] sm:$0xff]
    %v3566 = vld [vmem:[#allocation27 + $0x78] sm:$0xff]
    %v3567 = vld [vmem:[#allocation27 + $0x80] sm:$0xff]
    %v3568 = vld [vmem:[#allocation27 + $0x88] sm:$0xf]
    %v3569 = vld [vmem:[#allocation27 + $0x8c] sm:$0xff]
    %v3570 = vld [vmem:[#allocation27 + $0x94] sm:$0xff]
    %v3571 = vld [vmem:[#allocation27 + $0x9c] sm:$0xff]
    %v3572 = vld [vmem:[#allocation27 + $0xa4] sm:$0xf]
    %v3573 = vld [vmem:[#allocation27 + $0xa8] sm:$0xff]
    %v3574 = vld [vmem:[#allocation27 + $0xb0] sm:$0xff]
    %v3575 = vld [vmem:[#allocation27 + $0xb8] sm:$0xff]
    %v3576 = vld [vmem:[#allocation27 + $0xc0] sm:$0xf]
    %v3577 = vld [vmem:[#allocation27 + $0xc4] sm:$0xff]
    %v3578 = vld [vmem:[#allocation27 + $0xcc] sm:$0xff]
    %v3579 = vld [vmem:[#allocation27 + $0xd4] sm:$0xff]
    %v3580 = vld [vmem:[#allocation27 + $0xdc] sm:$0xf]
    %v3581 = vld [vmem:[#allocation27 + $0xe0] sm:$0xff]
    %v3582 = vld [vmem:[#allocation27 + $0xe8] sm:$0xff]
    %v3583 = vld [vmem:[#allocation27 + $0xf0] sm:$0xff]
    %v3584 = vld [vmem:[#allocation27 + $0xf8] sm:$0xf]
    %v3585 = vld [vmem:[#allocation27 + $0xfc] sm:$0xff]
    %v3586 = vld [vmem:[#allocation27 + $0x104] sm:$0xff]
    %v3587 = vld [vmem:[#allocation27 + $0x10c] sm:$0xff]
    %v3588 = vld [vmem:[#allocation27 + $0x114] sm:$0xf]
    %v3589 = vld [vmem:[#allocation27 + $0x118] sm:$0xff]
    %v3590 = vld [vmem:[#allocation27 + $0x120] sm:$0xff]
    %v3591 = vld [vmem:[#allocation27 + $0x128] sm:$0xff]
    %v3592 = vld [vmem:[#allocation27 + $0x130] sm:$0xf]
    %v3593 = vld [vmem:[#allocation27 + $0x134] sm:$0xff]
    %v3594 = vld [vmem:[#allocation27 + $0x13c] sm:$0xff]
    %v3595 = vld [vmem:[#allocation27 + $0x144] sm:$0xff]
    %v3596 = vld [vmem:[#allocation27 + $0x14c] sm:$0xf]
    %v3597 = vld [vmem:[#allocation27 + $0x150] sm:$0xff]
    %v3598 = vld [vmem:[#allocation27 + $0x158] sm:$0xff]
    %v3599 = vld [vmem:[#allocation27 + $0x160] sm:$0xff]
    %v3600 = vld [vmem:[#allocation27 + $0x168] sm:$0xf]
    %v3601 = vld [vmem:[#allocation27 + $0x16c] sm:$0xff]
    %v3602 = vld [vmem:[#allocation27 + $0x174] sm:$0xff]
    %v3603 = vld [vmem:[#allocation27 + $0x17c] sm:$0xff]
    %v3604 = vld [vmem:[#allocation27 + $0x184] sm:$0xf]
    %v3605 = vld [vmem:[#allocation27 + $0x188] sm:$0xff]
    %v3606 = vld [vmem:[#allocation27 + $0x190] sm:$0xff]
    %v3607 = vld [vmem:[#allocation27 + $0x198] sm:$0xff]
    %v3608 = vld [vmem:[#allocation27 + $0x1a0] sm:$0xf]
    %v3609 = vld [vmem:[#allocation27 + $0x1a4] sm:$0xff]
    %v3610 = vld [vmem:[#allocation27 + $0x1ac] sm:$0xff]
    %v3611 = vld [vmem:[#allocation27 + $0x1b4] sm:$0xff]
    %v3612 = vld [vmem:[#allocation27 + $0x1bc] sm:$0xf]
    %v3613 = vld [vmem:[#allocation27 + $0x1c0] sm:$0xff]
    %v3614 = vld [vmem:[#allocation27 + $0x1c8] sm:$0xff]
    %v3615 = vld [vmem:[#allocation27 + $0x1d0] sm:$0xff]
    %v3616 = vld [vmem:[#allocation27 + $0x1d8] sm:$0xf]
    %v3617 = vld [vmem:[#allocation27 + $0x1dc] sm:$0xff]
    %v3618 = vld [vmem:[#allocation27 + $0x1e4] sm:$0xff]
    %v3619 = vld [vmem:[#allocation27 + $0x1ec] sm:$0xff]
    %v3620 = vld [vmem:[#allocation27 + $0x1f4] sm:$0xf]
    %v3621 = vld [vmem:[#allocation27 + $0x1f8] sm:$0xff]
    %v3622 = vld [vmem:[#allocation27 + $0x200] sm:$0xff]
    %v3623 = vld [vmem:[#allocation27 + $0x208] sm:$0xff]
    %v3624 = vld [vmem:[#allocation27 + $0x210] sm:$0xf]
    %v3625 = vld [vmem:[#allocation27 + $0x214] sm:$0xff]
    %v3626 = vld [vmem:[#allocation27 + $0x21c] sm:$0xff]
    %v3627 = vld [vmem:[#allocation27 + $0x224] sm:$0xff]
    %v3628 = vld [vmem:[#allocation27 + $0x22c] sm:$0xf]
    %v3629 = vld [vmem:[#allocation27 + $0x230] sm:$0xff]
    %v3630 = vld [vmem:[#allocation27 + $0x238] sm:$0xff]
    %v3631 = vld [vmem:[#allocation27 + $0x240] sm:$0xff]
    %v3632 = vld [vmem:[#allocation27 + $0x248] sm:$0xf]
    %v3633 = vld [vmem:[#allocation27 + $0x24c] sm:$0xff]
    %v3634 = vld [vmem:[#allocation27 + $0x254] sm:$0xff]
    %v3635 = vld [vmem:[#allocation27 + $0x25c] sm:$0xff]
    %v3636 = vld [vmem:[#allocation27 + $0x264] sm:$0xf]
    %v3637 = vld [vmem:[#allocation27 + $0x268] sm:$0xff]
    %v3638 = vld [vmem:[#allocation27 + $0x270] sm:$0xff]
    %v3639 = vld [vmem:[#allocation27 + $0x278] sm:$0xff]
    %v3640 = vld [vmem:[#allocation27 + $0x280] sm:$0xf]
    %v3641 = vld [vmem:[#allocation27 + $0x284] sm:$0xff]
    %v3642 = vld [vmem:[#allocation27 + $0x28c] sm:$0xff]
    %v3643 = vld [vmem:[#allocation27 + $0x294] sm:$0xff]
    %v3644 = vld [vmem:[#allocation27 + $0x29c] sm:$0xf]
    %v3645 = vld [vmem:[#allocation27 + $0x2a0] sm:$0xff]
    %v3646 = vld [vmem:[#allocation27 + $0x2a8] sm:$0xff]
    %v3647 = vld [vmem:[#allocation27 + $0x2b0] sm:$0xff]
    %v3648 = vld [vmem:[#allocation27 + $0x2b8] sm:$0xf]
    %v3649 = vld [vmem:[#allocation27 + $0x2bc] sm:$0xff]
    %v3650 = vld [vmem:[#allocation27 + $0x2c4] sm:$0xff]
    %v3651 = vld [vmem:[#allocation27 + $0x2cc] sm:$0xff]
    %v3652 = vld [vmem:[#allocation27 + $0x2d4] sm:$0xf]
    %v3653 = vld [vmem:[#allocation27 + $0x2d8] sm:$0xff]
    %v3654 = vld [vmem:[#allocation27 + $0x2e0] sm:$0xff]
    %v3655 = vld [vmem:[#allocation27 + $0x2e8] sm:$0xff]
    %v3656 = vld [vmem:[#allocation27 + $0x2f0] sm:$0xf]
    %v3657 = vld [vmem:[#allocation27 + $0x2f4] sm:$0xff]
    %v3658 = vld [vmem:[#allocation27 + $0x2fc] sm:$0xff]
    %v3659 = vld [vmem:[#allocation27 + $0x304] sm:$0xff]
    %v3660 = vld [vmem:[#allocation27 + $0x30c] sm:$0xf]
    %v3661 = vld [vmem:[#allocation27 + $0x310] sm:$0xff]
    %v3662 = vld [vmem:[#allocation27 + $0x318] sm:$0xff]
    %v3663 = vld [vmem:[#allocation27 + $0x320] sm:$0xff]
    %v3664 = vld [vmem:[#allocation27 + $0x328] sm:$0xf]
    %v3665 = vld [vmem:[#allocation27 + $0x32c] sm:$0xff]
    %v3666 = vld [vmem:[#allocation27 + $0x334] sm:$0xff]
    %v3667 = vld [vmem:[#allocation27 + $0x33c] sm:$0xff]
    %v3668 = vld [vmem:[#allocation27 + $0x344] sm:$0xf]
    %v3669 = vld [vmem:[#allocation27 + $0x348] sm:$0xff]
    %v3670 = vld [vmem:[#allocation27 + $0x350] sm:$0xff]
    %v3671 = vld [vmem:[#allocation27 + $0x358] sm:$0xff]
    %v3672 = vld [vmem:[#allocation27 + $0x360] sm:$0xf]
    %v3673 = vld [vmem:[#allocation27 + $0x364] sm:$0xff]
    %v3674 = vld [vmem:[#allocation27 + $0x36c] sm:$0xff]
    %v3675 = vld [vmem:[#allocation27 + $0x374] sm:$0xff]
    %v3676 = vld [vmem:[#allocation27 + $0x37c] sm:$0xf]
    %v3677 = vld [vmem:[#allocation27 + $0x380] sm:$0xff]
    %v3678 = vld [vmem:[#allocation27 + $0x388] sm:$0xff]
    %v3679 = vld [vmem:[#allocation27 + $0x390] sm:$0xff]
    %v3680 = vld [vmem:[#allocation27 + $0x398] sm:$0xf]
    %v3681 = vld [vmem:[#allocation27 + $0x39c] sm:$0xff]
    %v3682 = vld [vmem:[#allocation27 + $0x3a4] sm:$0xff]
    %v3683 = vld [vmem:[#allocation27 + $0x3ac] sm:$0xff]
    %v3684 = vld [vmem:[#allocation27 + $0x3b4] sm:$0xf]
    %v3685 = vld [vmem:[#allocation27 + $0x3b8] sm:$0xff]
    %v3686 = vld [vmem:[#allocation27 + $0x3c0] sm:$0xff]
    %v3687 = vld [vmem:[#allocation27 + $0x3c8] sm:$0xff]
    %v3688 = vld [vmem:[#allocation27 + $0x3d0] sm:$0xf]
    %v3689 = vld [vmem:[#allocation27 + $0x3d4] sm:$0xff]
    %v3690 = vld [vmem:[#allocation27 + $0x3dc] sm:$0xff]
    %v3691 = vld [vmem:[#allocation27 + $0x3e4] sm:$0xff]
    %v3692 = vld [vmem:[#allocation27 + $0x3ec] sm:$0xf]
    %v3693 = vld [vmem:[#allocation27 + $0x3f0] sm:$0xff]
    %v3694 = vld [vmem:[#allocation27 + $0x3f8] sm:$0xff]
    %v3695 = vld [vmem:[#allocation27 + $0x400] sm:$0xff]
    %v3696 = vld [vmem:[#allocation27 + $0x408] sm:$0xf]
    %v3697 = vld [vmem:[#allocation27 + $0x40c] sm:$0xff]
    %v3698 = vld [vmem:[#allocation27 + $0x414] sm:$0xff]
    %v3699 = vld [vmem:[#allocation27 + $0x41c] sm:$0xff]
    %v3700 = vld [vmem:[#allocation27 + $0x424] sm:$0xf]
    %v3701 = vld [vmem:[#allocation27 + $0x428] sm:$0xff]
    %v3702 = vld [vmem:[#allocation27 + $0x430] sm:$0xff]
    %v3703 = vld [vmem:[#allocation27 + $0x438] sm:$0xff]
    %v3704 = vld [vmem:[#allocation27 + $0x440] sm:$0xf]
    %v3705 = vld [vmem:[#allocation27 + $0x444] sm:$0xff]
    %v3706 = vld [vmem:[#allocation27 + $0x44c] sm:$0xff]
    %v3707 = vld [vmem:[#allocation27 + $0x454] sm:$0xff]
    %v3708 = vld [vmem:[#allocation27 + $0x45c] sm:$0xf]
    %v3709 = vld [vmem:[#allocation27 + $0x460] sm:$0xff]
    %v3710 = vld [vmem:[#allocation27 + $0x468] sm:$0xff]
    %v3711 = vld [vmem:[#allocation27 + $0x470] sm:$0xff]
    %v3712 = vld [vmem:[#allocation27 + $0x478] sm:$0xf]
    %v3713 = vld [vmem:[#allocation27 + $0x47c] sm:$0xff]
    %v3714 = vld [vmem:[#allocation27 + $0x484] sm:$0xff]
    %v3715 = vld [vmem:[#allocation27 + $0x48c] sm:$0xff]
    %v3716 = vld [vmem:[#allocation27 + $0x494] sm:$0xf]
    %v3717 = vld [vmem:[#allocation27 + $0x498] sm:$0xff]
    %v3718 = vld [vmem:[#allocation27 + $0x4a0] sm:$0xff]
    %v3719 = vld [vmem:[#allocation27 + $0x4a8] sm:$0xff]
    %v3720 = vld [vmem:[#allocation27 + $0x4b0] sm:$0xf]
    %v3721 = vld [vmem:[#allocation27 + $0x4b4] sm:$0xff]
    %v3722 = vld [vmem:[#allocation27 + $0x4bc] sm:$0xff]
    %v3723 = vld [vmem:[#allocation27 + $0x4c4] sm:$0xff]
    %v3724 = vld [vmem:[#allocation27 + $0x4cc] sm:$0xf]
    %v3725 = vld [vmem:[#allocation27 + $0x4d0] sm:$0xff]
    %v3726 = vld [vmem:[#allocation27 + $0x4d8] sm:$0xff]
    %v3727 = vld [vmem:[#allocation27 + $0x4e0] sm:$0xff]
    %v3728 = vld [vmem:[#allocation27 + $0x4e8] sm:$0xf]
    %v3729 = vld [vmem:[#allocation27 + $0x4ec] sm:$0xff]
    %v3730 = vld [vmem:[#allocation27 + $0x4f4] sm:$0xff]
    %v3731 = vld [vmem:[#allocation27 + $0x4fc] sm:$0xff]
    %v3732 = vld [vmem:[#allocation27 + $0x504] sm:$0xf]
    %v3733 = vld [vmem:[#allocation27 + $0x508] sm:$0xff]
    %v3734 = vld [vmem:[#allocation27 + $0x510] sm:$0xff]
    %v3735 = vld [vmem:[#allocation27 + $0x518] sm:$0xff]
    %v3736 = vld [vmem:[#allocation27 + $0x520] sm:$0xf]
    %v3737 = vld [vmem:[#allocation27 + $0x524] sm:$0xff]
    %v3738 = vld [vmem:[#allocation27 + $0x52c] sm:$0xff]
    %v3739 = vld [vmem:[#allocation27 + $0x534] sm:$0xff]
    %v3740 = vld [vmem:[#allocation27 + $0x53c] sm:$0xf]
    %v3741 = vld [vmem:[#allocation27 + $0x540] sm:$0xff]
    %v3742 = vld [vmem:[#allocation27 + $0x548] sm:$0xff]
    %v3743 = vld [vmem:[#allocation27 + $0x550] sm:$0xff]
    %v3744 = vld [vmem:[#allocation27 + $0x558] sm:$0xf]
    %v3745 = vld [vmem:[#allocation27 + $0x55c] sm:$0xff]
    %v3746 = vld [vmem:[#allocation27 + $0x564] sm:$0xff]
    %v3747 = vld [vmem:[#allocation27 + $0x56c] sm:$0xff]
    %v3748 = vld [vmem:[#allocation27 + $0x574] sm:$0xf]
    %v3749 = vld [vmem:[#allocation27 + $0x578] sm:$0xff]
    %v3750 = vld [vmem:[#allocation27 + $0x580] sm:$0xff]
    %v3751 = vld [vmem:[#allocation27 + $0x588] sm:$0xff]
    %v3752 = vld [vmem:[#allocation27 + $0x590] sm:$0xf]
    %v3753 = vld [vmem:[#allocation27 + $0x594] sm:$0xff]
    %v3754 = vld [vmem:[#allocation27 + $0x59c] sm:$0xff]
    %v3755 = vld [vmem:[#allocation27 + $0x5a4] sm:$0xff]
    %v3756 = vld [vmem:[#allocation27 + $0x5ac] sm:$0xf]
    %v3757 = vld [vmem:[#allocation27 + $0x5b0] sm:$0xff]
    %v3758 = vld [vmem:[#allocation27 + $0x5b8] sm:$0xff]
    %v3759 = vld [vmem:[#allocation27 + $0x5c0] sm:$0xff]
    %v3760 = vld [vmem:[#allocation27 + $0x5c8] sm:$0xf]
    %v3761 = vld [vmem:[#allocation27 + $0x5cc] sm:$0xff]
    %v3762 = vld [vmem:[#allocation27 + $0x5d4] sm:$0xff]
    %v3763 = vld [vmem:[#allocation27 + $0x5dc] sm:$0xff]
    %v3764 = vld [vmem:[#allocation27 + $0x5e4] sm:$0xf]
    %v3765 = vld [vmem:[#allocation27 + $0x5e8] sm:$0xff]
    %v3766 = vld [vmem:[#allocation27 + $0x5f0] sm:$0xff]
    %v3767 = vld [vmem:[#allocation27 + $0x5f8] sm:$0xff]
    %v3768 = vld [vmem:[#allocation27 + $0x600] sm:$0xf]
    %v3769 = vld [vmem:[#allocation27 + $0x604] sm:$0xff]
    %v3770 = vld [vmem:[#allocation27 + $0x60c] sm:$0xff]
    %v3771 = vld [vmem:[#allocation27 + $0x614] sm:$0xff]
    %v3772 = vld [vmem:[#allocation27 + $0x61c] sm:$0xf]
    %v3773 = vld [vmem:[#allocation27 + $0x620] sm:$0xff]
    %v3774 = vld [vmem:[#allocation27 + $0x628] sm:$0xff]
    %v3775 = vld [vmem:[#allocation27 + $0x630] sm:$0xff]
    %v3776 = vld [vmem:[#allocation27 + $0x638] sm:$0xf]
    %v3777 = vld [vmem:[#allocation27 + $0x63c] sm:$0xff]
    %v3778 = vld [vmem:[#allocation27 + $0x644] sm:$0xff]
    %v3779 = vld [vmem:[#allocation27 + $0x64c] sm:$0xff]
    %v3780 = vld [vmem:[#allocation27 + $0x654] sm:$0xf]
    %v3781 = vld [vmem:[#allocation27 + $0x658] sm:$0xff]
    %v3782 = vld [vmem:[#allocation27 + $0x660] sm:$0xff]
    %v3783 = vld [vmem:[#allocation27 + $0x668] sm:$0xff]
    %v3784 = vld [vmem:[#allocation27 + $0x670] sm:$0xf]
    %v3785 = vld [vmem:[#allocation27 + $0x674] sm:$0xff]
    %v3786 = vld [vmem:[#allocation27 + $0x67c] sm:$0xff]
    %v3787 = vld [vmem:[#allocation27 + $0x684] sm:$0xff]
    %v3788 = vld [vmem:[#allocation27 + $0x68c] sm:$0xf]
    %v3789 = vld [vmem:[#allocation27 + $0x690] sm:$0xff]
    %v3790 = vld [vmem:[#allocation27 + $0x698] sm:$0xff]
    %v3791 = vld [vmem:[#allocation27 + $0x6a0] sm:$0xff]
    %v3792 = vld [vmem:[#allocation27 + $0x6a8] sm:$0xf]
    %v3793 = vld [vmem:[#allocation27 + $0x6ac] sm:$0xff]
    %v3794 = vld [vmem:[#allocation27 + $0x6b4] sm:$0xff]
    %v3795 = vld [vmem:[#allocation27 + $0x6bc] sm:$0xff]
    %v3796 = vld [vmem:[#allocation27 + $0x6c4] sm:$0xf]
    %v3797 = vld [vmem:[#allocation27 + $0x6c8] sm:$0xff]
    %v3798 = vld [vmem:[#allocation27 + $0x6d0] sm:$0xff]
    %v3799 = vld [vmem:[#allocation27 + $0x6d8] sm:$0xff]
    %v3800 = vld [vmem:[#allocation27 + $0x6e0] sm:$0xf]
    %v3801 = vld [vmem:[#allocation27 + $0x6e4] sm:$0xff]
    %v3802 = vld [vmem:[#allocation27 + $0x6ec] sm:$0xff]
    %v3803 = vld [vmem:[#allocation27 + $0x6f4] sm:$0xff]
    %v3804 = vld [vmem:[#allocation27 + $0x6fc] sm:$0xf]
    %v3805 = vld [vmem:[#allocation27 + $0x700] sm:$0xff]
    %v3806 = vld [vmem:[#allocation27 + $0x708] sm:$0xff]
    %v3807 = vld [vmem:[#allocation27 + $0x710] sm:$0xff]
    %v3808 = vld [vmem:[#allocation27 + $0x718] sm:$0xf]
    %v3809 = vld [vmem:[#allocation27 + $0x71c] sm:$0xff]
    %v3810 = vld [vmem:[#allocation27 + $0x724] sm:$0xff]
    %v3811 = vld [vmem:[#allocation27 + $0x72c] sm:$0xff]
    %v3812 = vld [vmem:[#allocation27 + $0x734] sm:$0xf]
    %v3813 = vld [vmem:[#allocation27 + $0x738] sm:$0xff]
    %v3814 = vld [vmem:[#allocation27 + $0x740] sm:$0xff]
    %v3815 = vld [vmem:[#allocation27 + $0x748] sm:$0xff]
    %v3816 = vld [vmem:[#allocation27 + $0x750] sm:$0xf]
    %v3817 = vld [vmem:[#allocation27 + $0x754] sm:$0xff]
    %v3818 = vld [vmem:[#allocation27 + $0x75c] sm:$0xff]
    %v3819 = vld [vmem:[#allocation27 + $0x764] sm:$0xff]
    %v3820 = vld [vmem:[#allocation27 + $0x76c] sm:$0xf]
    %v3821 = vld [vmem:[#allocation27 + $0x770] sm:$0xff]
    %v3822 = vld [vmem:[#allocation27 + $0x778] sm:$0xff]
    %v3823 = vld [vmem:[#allocation27 + $0x780] sm:$0xff]
    %v3824 = vld [vmem:[#allocation27 + $0x788] sm:$0xf]
    %v3825 = vld [vmem:[#allocation27 + $0x78c] sm:$0xff]
    %v3826 = vld [vmem:[#allocation27 + $0x794] sm:$0xff]
    %v3827 = vld [vmem:[#allocation27 + $0x79c] sm:$0xff]
    %v3828 = vld [vmem:[#allocation27 + $0x7a4] sm:$0xf]
    %v3829 = vld [vmem:[#allocation27 + $0x7a8] sm:$0xff]
    %v3830 = vld [vmem:[#allocation27 + $0x7b0] sm:$0xff]
    %v3831 = vld [vmem:[#allocation27 + $0x7b8] sm:$0xff]
    %v3832 = vld [vmem:[#allocation27 + $0x7c0] sm:$0xf]
    %v3833 = vld [vmem:[#allocation27 + $0x7c4] sm:$0xff]
    %v3834 = vld [vmem:[#allocation27 + $0x7cc] sm:$0xff]
    %v3835 = vld [vmem:[#allocation27 + $0x7d4] sm:$0xff]
    %v3836 = vld [vmem:[#allocation27 + $0x7dc] sm:$0xf]
    %v3837 = vld [vmem:[#allocation27 + $0x7e0] sm:$0xff]
    %v3838 = vld [vmem:[#allocation27 + $0x7e8] sm:$0xff]
    %v3839 = vld [vmem:[#allocation27 + $0x7f0] sm:$0xff]
    %v3840 = vld [vmem:[#allocation27 + $0x7f8] sm:$0xf]
    %v3841 = vld [vmem:[#allocation27 + $0x7fc] sm:$0xff]
    %v3842 = vld [vmem:[#allocation27 + $0x804] sm:$0xff]
    %v3843 = vld [vmem:[#allocation27 + $0x80c] sm:$0xff]
    %v3844 = vld [vmem:[#allocation27 + $0x814] sm:$0xf]
    %v3845 = vld [vmem:[#allocation27 + $0x818] sm:$0xff]
    %v3846 = vld [vmem:[#allocation27 + $0x820] sm:$0xff]
    %v3847 = vld [vmem:[#allocation27 + $0x828] sm:$0xff]
    %v3848 = vld [vmem:[#allocation27 + $0x830] sm:$0xf]
    %v3849 = vld [vmem:[#allocation27 + $0x834] sm:$0xff]
    %v3850 = vld [vmem:[#allocation27 + $0x83c] sm:$0xff]
    %v3851 = vld [vmem:[#allocation27 + $0x844] sm:$0xff]
    %v3852 = vld [vmem:[#allocation27 + $0x84c] sm:$0xf]
    %v3853 = vld [vmem:[#allocation27 + $0x850] sm:$0xff]
    %v3854 = vld [vmem:[#allocation27 + $0x858] sm:$0xff]
    %v3855 = vld [vmem:[#allocation27 + $0x860] sm:$0xff]
    %v3856 = vld [vmem:[#allocation27 + $0x868] sm:$0xf]
    %v3857 = vld [vmem:[#allocation27 + $0x86c] sm:$0xff]
    %v3858 = vld [vmem:[#allocation27 + $0x874] sm:$0xff]
    %v3859 = vld [vmem:[#allocation27 + $0x87c] sm:$0xff]
    %v3860 = vld [vmem:[#allocation27 + $0x884] sm:$0xf]
    %v3861 = vld [vmem:[#allocation27 + $0x888] sm:$0xff]
    %v3862 = vld [vmem:[#allocation27 + $0x890] sm:$0xff]
    %v3863 = vld [vmem:[#allocation27 + $0x898] sm:$0xff]
    %v3864 = vld [vmem:[#allocation27 + $0x8a0] sm:$0xf]
    %v3865 = vld [vmem:[#allocation27 + $0x8a4] sm:$0xff]
    %v3866 = vld [vmem:[#allocation27 + $0x8ac] sm:$0xff]
    %v3867 = vld [vmem:[#allocation27 + $0x8b4] sm:$0xff]
    %v3868 = vld [vmem:[#allocation27 + $0x8bc] sm:$0xf]
    %v3869 = vld [vmem:[#allocation27 + $0x8c0] sm:$0xff]
    %v3870 = vld [vmem:[#allocation27 + $0x8c8] sm:$0xff]
    %v3871 = vld [vmem:[#allocation27 + $0x8d0] sm:$0xff]
    %v3872 = vld [vmem:[#allocation27 + $0x8d8] sm:$0xf]
    %v3873 = vld [vmem:[#allocation27 + $0x8dc] sm:$0xff]
    %v3874 = vld [vmem:[#allocation27 + $0x8e4] sm:$0xff]
    %v3875 = vld [vmem:[#allocation27 + $0x8ec] sm:$0xff]
    %v3876 = vld [vmem:[#allocation27 + $0x8f4] sm:$0xf]
    %v3877 = vld [vmem:[#allocation27 + $0x8f8] sm:$0xff]
    %v3878 = vld [vmem:[#allocation27 + $0x900] sm:$0xff]
    %v3879 = vld [vmem:[#allocation27 + $0x908] sm:$0xff]
    %v3880 = vld [vmem:[#allocation27 + $0x910] sm:$0xf]
    %v3881 = vld [vmem:[#allocation27 + $0x914] sm:$0xff]
    %v3882 = vld [vmem:[#allocation27 + $0x91c] sm:$0xff]
    %v3883 = vld [vmem:[#allocation27 + $0x924] sm:$0xff]
    %v3884 = vld [vmem:[#allocation27 + $0x92c] sm:$0xf]
    %v3885 = vld [vmem:[#allocation27 + $0x930] sm:$0xff]
    %v3886 = vld [vmem:[#allocation27 + $0x938] sm:$0xff]
    %v3887 = vld [vmem:[#allocation27 + $0x940] sm:$0xff]
    %v3888 = vld [vmem:[#allocation27 + $0x948] sm:$0xf]
    %v3889 = vld [vmem:[#allocation27 + $0x94c] sm:$0xff]
    %v3890 = vld [vmem:[#allocation27 + $0x954] sm:$0xff]
    %v3891 = vld [vmem:[#allocation27 + $0x95c] sm:$0xff]
    %v3892 = vld [vmem:[#allocation27 + $0x964] sm:$0xf]
    %v3893 = vld [vmem:[#allocation27 + $0x968] sm:$0xff]
    %v3894 = vld [vmem:[#allocation27 + $0x970] sm:$0xff]
    %v3895 = vld [vmem:[#allocation27 + $0x978] sm:$0xff]
    %v3896 = vld [vmem:[#allocation27 + $0x980] sm:$0xf]
    %v3897 = vld [vmem:[#allocation27 + $0x984] sm:$0xff]
    %v3898 = vld [vmem:[#allocation27 + $0x98c] sm:$0xff]
    %v3899 = vld [vmem:[#allocation27 + $0x994] sm:$0xff]
    %v3900 = vld [vmem:[#allocation27 + $0x99c] sm:$0xf]
    %v3901 = vld [vmem:[#allocation27 + $0x9a0] sm:$0xff]
    %v3902 = vld [vmem:[#allocation27 + $0x9a8] sm:$0xff]
    %v3903 = vld [vmem:[#allocation27 + $0x9b0] sm:$0xff]
    %v3904 = vld [vmem:[#allocation27 + $0x9b8] sm:$0xf]
    %v3905 = vld [vmem:[#allocation27 + $0x9bc] sm:$0xff]
    %v3906 = vld [vmem:[#allocation27 + $0x9c4] sm:$0xff]
    %v3907 = vld [vmem:[#allocation27 + $0x9cc] sm:$0xff]
    %v3908 = vld [vmem:[#allocation27 + $0x9d4] sm:$0xf]
    %v3909 = vld [vmem:[#allocation27 + $0x9d8] sm:$0xff]
    %v3910 = vld [vmem:[#allocation27 + $0x9e0] sm:$0xff]
    %v3911 = vld [vmem:[#allocation27 + $0x9e8] sm:$0xff]
    %v3912 = vld [vmem:[#allocation27 + $0x9f0] sm:$0xf]
    %v3913 = vld [vmem:[#allocation27 + $0x9f4] sm:$0xff]
    %v3914 = vld [vmem:[#allocation27 + $0x9fc] sm:$0xff]
    %v3915 = vld [vmem:[#allocation27 + $0xa04] sm:$0xff]
    %v3916 = vld [vmem:[#allocation27 + $0xa0c] sm:$0xf]
    %v3917 = vld [vmem:[#allocation27 + $0xa10] sm:$0xff]
    %v3918 = vld [vmem:[#allocation27 + $0xa18] sm:$0xff]
    %v3919 = vld [vmem:[#allocation27 + $0xa20] sm:$0xff]
    %v3920 = vld [vmem:[#allocation27 + $0xa28] sm:$0xf]
    %v3921 = vld [vmem:[#allocation27 + $0xa2c] sm:$0xff]
    %v3922 = vld [vmem:[#allocation27 + $0xa34] sm:$0xff]
    %v3923 = vld [vmem:[#allocation27 + $0xa3c] sm:$0xff]
    %v3924 = vld [vmem:[#allocation27 + $0xa44] sm:$0xf]
    %v3925 = vld [vmem:[#allocation27 + $0xa48] sm:$0xff]
    %v3926 = vld [vmem:[#allocation27 + $0xa50] sm:$0xff]
    %v3927 = vld [vmem:[#allocation27 + $0xa58] sm:$0xff]
    %v3928 = vld [vmem:[#allocation27 + $0xa60] sm:$0xf]
    %v3929 = vld [vmem:[#allocation27 + $0xa64] sm:$0xff]
    %v3930 = vld [vmem:[#allocation27 + $0xa6c] sm:$0xff]
    %v3931 = vld [vmem:[#allocation27 + $0xa74] sm:$0xff]
    %v3932 = vld [vmem:[#allocation27 + $0xa7c] sm:$0xf]
    %v3933 = vld [vmem:[#allocation27 + $0xa80] sm:$0xff]
    %v3934 = vld [vmem:[#allocation27 + $0xa88] sm:$0xff]
    %v3935 = vld [vmem:[#allocation27 + $0xa90] sm:$0xff]
    %v3936 = vld [vmem:[#allocation27 + $0xa98] sm:$0xf]
    %v3937 = vld [vmem:[#allocation27 + $0xa9c] sm:$0xff]
    %v3938 = vld [vmem:[#allocation27 + $0xaa4] sm:$0xff]
    %v3939 = vld [vmem:[#allocation27 + $0xaac] sm:$0xff]
    %v3940 = vld [vmem:[#allocation27 + $0xab4] sm:$0xf]
    %v3941 = vld [vmem:[#allocation27 + $0xab8] sm:$0xff]
    %v3942 = vld [vmem:[#allocation27 + $0xac0] sm:$0xff]
    %v3943 = vld [vmem:[#allocation27 + $0xac8] sm:$0xff]
    %v3944 = vld [vmem:[#allocation27 + $0xad0] sm:$0xf]
    %v3945 = vld [vmem:[#allocation27 + $0xad4] sm:$0xff]
    %v3946 = vld [vmem:[#allocation27 + $0xadc] sm:$0xff]
    %v3947 = vld [vmem:[#allocation27 + $0xae4] sm:$0xff]
    %v3948 = vld [vmem:[#allocation27 + $0xaec] sm:$0xf]
    %v3949 = vld [vmem:[#allocation27 + $0xaf0] sm:$0xff]
    %v3950 = vld [vmem:[#allocation27 + $0xaf8] sm:$0xff]
    %v3951 = vld [vmem:[#allocation27 + $0xb00] sm:$0xff]
    %v3952 = vld [vmem:[#allocation27 + $0xb08] sm:$0xf]
    %v3953 = vld [vmem:[#allocation27 + $0xb0c] sm:$0xff]
    %v3954 = vld [vmem:[#allocation27 + $0xb14] sm:$0xff]
    %v3955 = vld [vmem:[#allocation27 + $0xb1c] sm:$0xff]
    %v3956 = vld [vmem:[#allocation27 + $0xb24] sm:$0xf]
    %v3957 = vld [vmem:[#allocation27 + $0xb28] sm:$0xff]
    %v3958 = vld [vmem:[#allocation27 + $0xb30] sm:$0xff]
    %v3959 = vld [vmem:[#allocation27 + $0xb38] sm:$0xff]
    %v3960 = vld [vmem:[#allocation27 + $0xb40] sm:$0xf]
    %v3961 = vld [vmem:[#allocation27 + $0xb44] sm:$0xff]
    %v3962 = vld [vmem:[#allocation27 + $0xb4c] sm:$0xff]
    %v3963 = vld [vmem:[#allocation27 + $0xb54] sm:$0xff]
    %v3964 = vld [vmem:[#allocation27 + $0xb5c] sm:$0xf]
    %v3965 = vld [vmem:[#allocation27 + $0xb60] sm:$0xff]
    %v3966 = vld [vmem:[#allocation27 + $0xb68] sm:$0xff]
    %v3967 = vld [vmem:[#allocation27 + $0xb70] sm:$0xff]
    %v3968 = vld [vmem:[#allocation27 + $0xb78] sm:$0xf]
    %v3969 = vld [vmem:[#allocation27 + $0xb7c] sm:$0xff]
    %v3970 = vld [vmem:[#allocation27 + $0xb84] sm:$0xff]
    %v3971 = vld [vmem:[#allocation27 + $0xb8c] sm:$0xff]
    %v3972 = vld [vmem:[#allocation27 + $0xb94] sm:$0xf]
    %v3973 = vld [vmem:[#allocation27 + $0xb98] sm:$0xff]
    %v3974 = vld [vmem:[#allocation27 + $0xba0] sm:$0xff]
    %v3975 = vld [vmem:[#allocation27 + $0xba8] sm:$0xff]
    %v3976 = vld [vmem:[#allocation27 + $0xbb0] sm:$0xf]
    %v3977 = vld [vmem:[#allocation27 + $0xbb4] sm:$0xff]
    %v3978 = vld [vmem:[#allocation27 + $0xbbc] sm:$0xff]
    %v3979 = vld [vmem:[#allocation27 + $0xbc4] sm:$0xff]
    %v3980 = vld [vmem:[#allocation27 + $0xbcc] sm:$0xf]
    %v3981 = vld [vmem:[#allocation27 + $0xbd0] sm:$0xff]
    %v3982 = vld [vmem:[#allocation27 + $0xbd8] sm:$0xff]
    %v3983 = vld [vmem:[#allocation27 + $0xbe0] sm:$0xff]
    %v3984 = vld [vmem:[#allocation27 + $0xbe8] sm:$0xf]
    %v3985 = vld [vmem:[#allocation27 + $0xbec] sm:$0xff]
    %v3986 = vld [vmem:[#allocation27 + $0xbf4] sm:$0xff]
    %v3987 = vld [vmem:[#allocation27 + $0xbfc] sm:$0xff]
    %v3988 = vld [vmem:[#allocation27 + $0xc04] sm:$0xf]
    %v3989 = vld [vmem:[#allocation27 + $0xc08] sm:$0xff]
    %v3990 = vld [vmem:[#allocation27 + $0xc10] sm:$0xff]
    %v3991 = vld [vmem:[#allocation27 + $0xc18] sm:$0xff]
    %v3992 = vld [vmem:[#allocation27 + $0xc20] sm:$0xf]
    %v3993 = vld [vmem:[#allocation27 + $0xc24] sm:$0xff]
    %v3994 = vld [vmem:[#allocation27 + $0xc2c] sm:$0xff]
    %v3995 = vld [vmem:[#allocation27 + $0xc34] sm:$0xff]
    %v3996 = vld [vmem:[#allocation27 + $0xc3c] sm:$0xf]
    %v3997 = vld [vmem:[#allocation27 + $0xc40] sm:$0xff]
    %v3998 = vld [vmem:[#allocation27 + $0xc48] sm:$0xff]
    %v3999 = vld [vmem:[#allocation27 + $0xc50] sm:$0xff]
    %v4000 = vld [vmem:[#allocation27 + $0xc58] sm:$0xf]
    %v4001 = vld [vmem:[#allocation27 + $0xc5c] sm:$0xff]
    %v4002 = vld [vmem:[#allocation27 + $0xc64] sm:$0xff]
    %v4003 = vld [vmem:[#allocation27 + $0xc6c] sm:$0xff]
    %v4004 = vld [vmem:[#allocation27 + $0xc74] sm:$0xf]
    %v4005 = vld [vmem:[#allocation27 + $0xc78] sm:$0xff]
    %v4006 = vld [vmem:[#allocation27 + $0xc80] sm:$0xff]
    %v4007 = vld [vmem:[#allocation27 + $0xc88] sm:$0xff]
    %v4008 = vld [vmem:[#allocation27 + $0xc90] sm:$0xf]
    %v4009 = vld [vmem:[#allocation27 + $0xc94] sm:$0xff]
    %v4010 = vld [vmem:[#allocation27 + $0xc9c] sm:$0xff]
    %v4011 = vld [vmem:[#allocation27 + $0xca4] sm:$0xff]
    %v4012 = vld [vmem:[#allocation27 + $0xcac] sm:$0xf]
    %v4013 = vld [vmem:[#allocation27 + $0xcb0] sm:$0xff]
    %v4014 = vld [vmem:[#allocation27 + $0xcb8] sm:$0xff]
    %v4015 = vld [vmem:[#allocation27 + $0xcc0] sm:$0xff]
    %v4016 = vld [vmem:[#allocation27 + $0xcc8] sm:$0xf]
    %v4017 = vld [vmem:[#allocation27 + $0xccc] sm:$0xff]
    %v4018 = vld [vmem:[#allocation27 + $0xcd4] sm:$0xff]
    %v4019 = vld [vmem:[#allocation27 + $0xcdc] sm:$0xff]
    %v4020 = vld [vmem:[#allocation27 + $0xce4] sm:$0xf]
    %v4021 = vld [vmem:[#allocation27 + $0xce8] sm:$0xff]
    %v4022 = vld [vmem:[#allocation27 + $0xcf0] sm:$0xff]
    %v4023 = vld [vmem:[#allocation27 + $0xcf8] sm:$0xff]
    %v4024 = vld [vmem:[#allocation27 + $0xd00] sm:$0xf]
    %v4025 = vld [vmem:[#allocation27 + $0xd04] sm:$0xff]
    %v4026 = vld [vmem:[#allocation27 + $0xd0c] sm:$0xff]
    %v4027 = vld [vmem:[#allocation27 + $0xd14] sm:$0xff]
    %v4028 = vld [vmem:[#allocation27 + $0xd1c] sm:$0xf]
    %v4029 = vld [vmem:[#allocation27 + $0xd20] sm:$0xff]
    %v4030 = vld [vmem:[#allocation27 + $0xd28] sm:$0xff]
    %v4031 = vld [vmem:[#allocation27 + $0xd30] sm:$0xff]
    %v4032 = vld [vmem:[#allocation27 + $0xd38] sm:$0xf]
    %v4033 = vld [vmem:[#allocation27 + $0xd3c] sm:$0xff]
    %v4034 = vld [vmem:[#allocation27 + $0xd44] sm:$0xff]
    %v4035 = vld [vmem:[#allocation27 + $0xd4c] sm:$0xff]
    %v4036 = vld [vmem:[#allocation27 + $0xd54] sm:$0xf]
    %v4037 = vld [vmem:[#allocation27 + $0xd58] sm:$0xff]
    %v4038 = vld [vmem:[#allocation27 + $0xd60] sm:$0xff]
    %v4039 = vld [vmem:[#allocation27 + $0xd68] sm:$0xff]
    %v4040 = vld [vmem:[#allocation27 + $0xd70] sm:$0xf]
    %v4041 = vld [vmem:[#allocation27 + $0xd74] sm:$0xff]
    %v4042 = vld [vmem:[#allocation27 + $0xd7c] sm:$0xff]
    %v4043 = vld [vmem:[#allocation27 + $0xd84] sm:$0xff]
    %v4044 = vld [vmem:[#allocation27 + $0xd8c] sm:$0xf]
    %v4045 = vld [vmem:[#allocation27 + $0xd90] sm:$0xff]
    %v4046 = vld [vmem:[#allocation27 + $0xd98] sm:$0xff]
    %v4047 = vld [vmem:[#allocation27 + $0xda0] sm:$0xff]
    %v4048 = vld [vmem:[#allocation27 + $0xda8] sm:$0xf]
    %v4049 = vld [vmem:[#allocation27 + $0xdac] sm:$0xff]
    %v4050 = vld [vmem:[#allocation27 + $0xdb4] sm:$0xff]
    %v4051 = vld [vmem:[#allocation27 + $0xdbc] sm:$0xff]
    %v4052 = vld [vmem:[#allocation27 + $0xdc4] sm:$0xf]
    %v4053 = vld [vmem:[#allocation27 + $0xdc8] sm:$0xff]
    %v4054 = vld [vmem:[#allocation27 + $0xdd0] sm:$0xff]
    %v4055 = vld [vmem:[#allocation27 + $0xdd8] sm:$0xff]
    %v4056 = vld [vmem:[#allocation27 + $0xde0] sm:$0xf]
    %v4057 = vld [vmem:[#allocation27 + $0xde4] sm:$0xff]
    %v4058 = vld [vmem:[#allocation27 + $0xdec] sm:$0xff]
    %v4059 = vld [vmem:[#allocation27 + $0xdf4] sm:$0xff]
    %v4060 = vld [vmem:[#allocation27 + $0xdfc] sm:$0xf]
    %v4061 = vld [vmem:[#allocation29] sm:$0xff]
    %v4063 = vlaneseq
    %v4064 = vshrl.u32 %v4063, 7
    %v4065 = vsub.s32 0, %v4064
    %v4066 = vrot.slane %v4061, %v4065
    %v4067 = vlaneseq
    %v4068 = vshrl.u32 %v4067, 7
    %v4069 = vsub.s32 1, %v4068
    %v4070 = vrot.slane %v4061, %v4069
    %v4071 = vlaneseq
    %v4072 = vshrl.u32 %v4071, 7
    %v4073 = vsub.s32 2, %v4072
    %v4074 = vrot.slane %v4061, %v4073
    %v4075 = vlaneseq
    %v4076 = vshrl.u32 %v4075, 7
    %v4077 = vsub.s32 3, %v4076
    %v4078 = vrot.slane %v4061, %v4077
    %v4079 = vlaneseq
    %v4080 = vshrl.u32 %v4079, 7
    %v4081 = vsub.s32 4, %v4080
    %v4082 = vrot.slane %v4061, %v4081
    %v4083 = vlaneseq
    %v4084 = vshrl.u32 %v4083, 7
    %v4085 = vsub.s32 5, %v4084
    %v4086 = vrot.slane %v4061, %v4085
    %v4087 = vlaneseq
    %v4088 = vshrl.u32 %v4087, 7
    %v4089 = vsub.s32 6, %v4088
    %v4090 = vrot.slane %v4061, %v4089
    %v4610 = vunpack.c.l.b16 %v3549
    %v4611 = vunpack.c.h.b16 %v3549
    %v4612 = vunpack.c.l.b16 %v3550
    %v4613 = vunpack.c.h.b16 %v3550
    %v4614 = vunpack.c.l.b16 %v3551
    %v4615 = vunpack.c.h.b16 %v3551
    %v4616 = vunpack.c.l.b16 %v3552
    %v4617 = vunpack.c.l.b16 %v3553
    %v4618 = vunpack.c.h.b16 %v3553
    %v4619 = vunpack.c.l.b16 %v3554
    %v4620 = vunpack.c.h.b16 %v3554
    %v4621 = vunpack.c.l.b16 %v3555
    %v4622 = vunpack.c.h.b16 %v3555
    %v4623 = vunpack.c.l.b16 %v3556
    %v4624 = vunpack.c.l.b16 %v3557
    %v4625 = vunpack.c.h.b16 %v3557
    %v4626 = vunpack.c.l.b16 %v3558
    %v4627 = vunpack.c.h.b16 %v3558
    %v4628 = vunpack.c.l.b16 %v3559
    %v4629 = vunpack.c.h.b16 %v3559
    %v4630 = vunpack.c.l.b16 %v3560
    %v4631 = vunpack.c.l.b16 %v3561
    %v4632 = vunpack.c.h.b16 %v3561
    %v4633 = vunpack.c.l.b16 %v3562
    %v4634 = vunpack.c.h.b16 %v3562
    %v4635 = vunpack.c.l.b16 %v3563
    %v4636 = vunpack.c.h.b16 %v3563
    %v4637 = vunpack.c.l.b16 %v3564
    %v4638 = vunpack.c.l.b16 %v3565
    %v4639 = vunpack.c.h.b16 %v3565
    %v4640 = vunpack.c.l.b16 %v3566
    %v4641 = vunpack.c.h.b16 %v3566
    %v4642 = vunpack.c.l.b16 %v3567
    %v4643 = vunpack.c.h.b16 %v3567
    %v4644 = vunpack.c.l.b16 %v3568
    %v4645 = vunpack.c.l.b16 %v3569
    %v4646 = vunpack.c.h.b16 %v3569
    %v4647 = vunpack.c.l.b16 %v3570
    %v4648 = vunpack.c.h.b16 %v3570
    %v4649 = vunpack.c.l.b16 %v3571
    %v4650 = vunpack.c.h.b16 %v3571
    %v4651 = vunpack.c.l.b16 %v3572
    %v4652 = vunpack.c.l.b16 %v3573
    %v4653 = vunpack.c.h.b16 %v3573
    %v4654 = vunpack.c.l.b16 %v3574
    %v4655 = vunpack.c.h.b16 %v3574
    %v4656 = vunpack.c.l.b16 %v3575
    %v4657 = vunpack.c.h.b16 %v3575
    %v4658 = vunpack.c.l.b16 %v3576
    %v4659 = vunpack.c.l.b16 %v3577
    %v4660 = vunpack.c.h.b16 %v3577
    %v4661 = vunpack.c.l.b16 %v3578
    %v4662 = vunpack.c.h.b16 %v3578
    %v4663 = vunpack.c.l.b16 %v3579
    %v4664 = vunpack.c.h.b16 %v3579
    %v4665 = vunpack.c.l.b16 %v3580
    %v4666 = vunpack.c.l.b16 %v3581
    %v4667 = vunpack.c.h.b16 %v3581
    %v4668 = vunpack.c.l.b16 %v3582
    %v4669 = vunpack.c.h.b16 %v3582
    %v4670 = vunpack.c.l.b16 %v3583
    %v4671 = vunpack.c.h.b16 %v3583
    %v4672 = vunpack.c.l.b16 %v3584
    %v4673 = vunpack.c.l.b16 %v3585
    %v4674 = vunpack.c.h.b16 %v3585
    %v4675 = vunpack.c.l.b16 %v3586
    %v4676 = vunpack.c.h.b16 %v3586
    %v4677 = vunpack.c.l.b16 %v3587
    %v4678 = vunpack.c.h.b16 %v3587
    %v4679 = vunpack.c.l.b16 %v3588
    %v4680 = vunpack.c.l.b16 %v3589
    %v4681 = vunpack.c.h.b16 %v3589
    %v4682 = vunpack.c.l.b16 %v3590
    %v4683 = vunpack.c.h.b16 %v3590
    %v4684 = vunpack.c.l.b16 %v3591
    %v4685 = vunpack.c.h.b16 %v3591
    %v4686 = vunpack.c.l.b16 %v3592
    %v4687 = vunpack.c.l.b16 %v3593
    %v4688 = vunpack.c.h.b16 %v3593
    %v4689 = vunpack.c.l.b16 %v3594
    %v4690 = vunpack.c.h.b16 %v3594
    %v4691 = vunpack.c.l.b16 %v3595
    %v4692 = vunpack.c.h.b16 %v3595
    %v4693 = vunpack.c.l.b16 %v3596
    %v4694 = vunpack.c.l.b16 %v3597
    %v4695 = vunpack.c.h.b16 %v3597
    %v4696 = vunpack.c.l.b16 %v3598
    %v4697 = vunpack.c.h.b16 %v3598
    %v4698 = vunpack.c.l.b16 %v3599
    %v4699 = vunpack.c.h.b16 %v3599
    %v4700 = vunpack.c.l.b16 %v3600
    %v4701 = vunpack.c.l.b16 %v3601
    %v4702 = vunpack.c.h.b16 %v3601
    %v4703 = vunpack.c.l.b16 %v3602
    %v4704 = vunpack.c.h.b16 %v3602
    %v4705 = vunpack.c.l.b16 %v3603
    %v4706 = vunpack.c.h.b16 %v3603
    %v4707 = vunpack.c.l.b16 %v3604
    %v4708 = vunpack.c.l.b16 %v3605
    %v4709 = vunpack.c.h.b16 %v3605
    %v4710 = vunpack.c.l.b16 %v3606
    %v4711 = vunpack.c.h.b16 %v3606
    %v4712 = vunpack.c.l.b16 %v3607
    %v4713 = vunpack.c.h.b16 %v3607
    %v4714 = vunpack.c.l.b16 %v3608
    %v4715 = vunpack.c.l.b16 %v3609
    %v4716 = vunpack.c.h.b16 %v3609
    %v4717 = vunpack.c.l.b16 %v3610
    %v4718 = vunpack.c.h.b16 %v3610
    %v4719 = vunpack.c.l.b16 %v3611
    %v4720 = vunpack.c.h.b16 %v3611
    %v4721 = vunpack.c.l.b16 %v3612
    %v4722 = vunpack.c.l.b16 %v3613
    %v4723 = vunpack.c.h.b16 %v3613
    %v4724 = vunpack.c.l.b16 %v3614
    %v4725 = vunpack.c.h.b16 %v3614
    %v4726 = vunpack.c.l.b16 %v3615
    %v4727 = vunpack.c.h.b16 %v3615
    %v4728 = vunpack.c.l.b16 %v3616
    %v4729 = vunpack.c.l.b16 %v3617
    %v4730 = vunpack.c.h.b16 %v3617
    %v4731 = vunpack.c.l.b16 %v3618
    %v4732 = vunpack.c.h.b16 %v3618
    %v4733 = vunpack.c.l.b16 %v3619
    %v4734 = vunpack.c.h.b16 %v3619
    %v4735 = vunpack.c.l.b16 %v3620
    %v4736 = vunpack.c.l.b16 %v3621
    %v4737 = vunpack.c.h.b16 %v3621
    %v4738 = vunpack.c.l.b16 %v3622
    %v4739 = vunpack.c.h.b16 %v3622
    %v4740 = vunpack.c.l.b16 %v3623
    %v4741 = vunpack.c.h.b16 %v3623
    %v4742 = vunpack.c.l.b16 %v3624
    %v4743 = vunpack.c.l.b16 %v3625
    %v4744 = vunpack.c.h.b16 %v3625
    %v4745 = vunpack.c.l.b16 %v3626
    %v4746 = vunpack.c.h.b16 %v3626
    %v4747 = vunpack.c.l.b16 %v3627
    %v4748 = vunpack.c.h.b16 %v3627
    %v4749 = vunpack.c.l.b16 %v3628
    %v4750 = vunpack.c.l.b16 %v3629
    %v4751 = vunpack.c.h.b16 %v3629
    %v4752 = vunpack.c.l.b16 %v3630
    %v4753 = vunpack.c.h.b16 %v3630
    %v4754 = vunpack.c.l.b16 %v3631
    %v4755 = vunpack.c.h.b16 %v3631
    %v4756 = vunpack.c.l.b16 %v3632
    %v4757 = vunpack.c.l.b16 %v3633
    %v4758 = vunpack.c.h.b16 %v3633
    %v4759 = vunpack.c.l.b16 %v3634
    %v4760 = vunpack.c.h.b16 %v3634
    %v4761 = vunpack.c.l.b16 %v3635
    %v4762 = vunpack.c.h.b16 %v3635
    %v4763 = vunpack.c.l.b16 %v3636
    %v4764 = vunpack.c.l.b16 %v3637
    %v4765 = vunpack.c.h.b16 %v3637
    %v4766 = vunpack.c.l.b16 %v3638
    %v4767 = vunpack.c.h.b16 %v3638
    %v4768 = vunpack.c.l.b16 %v3639
    %v4769 = vunpack.c.h.b16 %v3639
    %v4770 = vunpack.c.l.b16 %v3640
    %v4771 = vunpack.c.l.b16 %v3641
    %v4772 = vunpack.c.h.b16 %v3641
    %v4773 = vunpack.c.l.b16 %v3642
    %v4774 = vunpack.c.h.b16 %v3642
    %v4775 = vunpack.c.l.b16 %v3643
    %v4776 = vunpack.c.h.b16 %v3643
    %v4777 = vunpack.c.l.b16 %v3644
    %v4778 = vunpack.c.l.b16 %v3645
    %v4779 = vunpack.c.h.b16 %v3645
    %v4780 = vunpack.c.l.b16 %v3646
    %v4781 = vunpack.c.h.b16 %v3646
    %v4782 = vunpack.c.l.b16 %v3647
    %v4783 = vunpack.c.h.b16 %v3647
    %v4784 = vunpack.c.l.b16 %v3648
    %v4785 = vunpack.c.l.b16 %v3649
    %v4786 = vunpack.c.h.b16 %v3649
    %v4787 = vunpack.c.l.b16 %v3650
    %v4788 = vunpack.c.h.b16 %v3650
    %v4789 = vunpack.c.l.b16 %v3651
    %v4790 = vunpack.c.h.b16 %v3651
    %v4791 = vunpack.c.l.b16 %v3652
    %v4792 = vunpack.c.l.b16 %v3653
    %v4793 = vunpack.c.h.b16 %v3653
    %v4794 = vunpack.c.l.b16 %v3654
    %v4795 = vunpack.c.h.b16 %v3654
    %v4796 = vunpack.c.l.b16 %v3655
    %v4797 = vunpack.c.h.b16 %v3655
    %v4798 = vunpack.c.l.b16 %v3656
    %v4799 = vunpack.c.l.b16 %v3657
    %v4800 = vunpack.c.h.b16 %v3657
    %v4801 = vunpack.c.l.b16 %v3658
    %v4802 = vunpack.c.h.b16 %v3658
    %v4803 = vunpack.c.l.b16 %v3659
    %v4804 = vunpack.c.h.b16 %v3659
    %v4805 = vunpack.c.l.b16 %v3660
    %v4806 = vunpack.c.l.b16 %v3661
    %v4807 = vunpack.c.h.b16 %v3661
    %v4808 = vunpack.c.l.b16 %v3662
    %v4809 = vunpack.c.h.b16 %v3662
    %v4810 = vunpack.c.l.b16 %v3663
    %v4811 = vunpack.c.h.b16 %v3663
    %v4812 = vunpack.c.l.b16 %v3664
    %v4813 = vunpack.c.l.b16 %v3665
    %v4814 = vunpack.c.h.b16 %v3665
    %v4815 = vunpack.c.l.b16 %v3666
    %v4816 = vunpack.c.h.b16 %v3666
    %v4817 = vunpack.c.l.b16 %v3667
    %v4818 = vunpack.c.h.b16 %v3667
    %v4819 = vunpack.c.l.b16 %v3668
    %v4820 = vunpack.c.l.b16 %v3669
    %v4821 = vunpack.c.h.b16 %v3669
    %v4822 = vunpack.c.l.b16 %v3670
    %v4823 = vunpack.c.h.b16 %v3670
    %v4824 = vunpack.c.l.b16 %v3671
    %v4825 = vunpack.c.h.b16 %v3671
    %v4826 = vunpack.c.l.b16 %v3672
    %v4827 = vunpack.c.l.b16 %v3673
    %v4828 = vunpack.c.h.b16 %v3673
    %v4829 = vunpack.c.l.b16 %v3674
    %v4830 = vunpack.c.h.b16 %v3674
    %v4831 = vunpack.c.l.b16 %v3675
    %v4832 = vunpack.c.h.b16 %v3675
    %v4833 = vunpack.c.l.b16 %v3676
    %v4834 = vunpack.c.l.b16 %v3677
    %v4835 = vunpack.c.h.b16 %v3677
    %v4836 = vunpack.c.l.b16 %v3678
    %v4837 = vunpack.c.h.b16 %v3678
    %v4838 = vunpack.c.l.b16 %v3679
    %v4839 = vunpack.c.h.b16 %v3679
    %v4840 = vunpack.c.l.b16 %v3680
    %v4841 = vunpack.c.l.b16 %v3681
    %v4842 = vunpack.c.h.b16 %v3681
    %v4843 = vunpack.c.l.b16 %v3682
    %v4844 = vunpack.c.h.b16 %v3682
    %v4845 = vunpack.c.l.b16 %v3683
    %v4846 = vunpack.c.h.b16 %v3683
    %v4847 = vunpack.c.l.b16 %v3684
    %v4848 = vunpack.c.l.b16 %v3685
    %v4849 = vunpack.c.h.b16 %v3685
    %v4850 = vunpack.c.l.b16 %v3686
    %v4851 = vunpack.c.h.b16 %v3686
    %v4852 = vunpack.c.l.b16 %v3687
    %v4853 = vunpack.c.h.b16 %v3687
    %v4854 = vunpack.c.l.b16 %v3688
    %v4855 = vunpack.c.l.b16 %v3689
    %v4856 = vunpack.c.h.b16 %v3689
    %v4857 = vunpack.c.l.b16 %v3690
    %v4858 = vunpack.c.h.b16 %v3690
    %v4859 = vunpack.c.l.b16 %v3691
    %v4860 = vunpack.c.h.b16 %v3691
    %v4861 = vunpack.c.l.b16 %v3692
    %v4862 = vunpack.c.l.b16 %v3693
    %v4863 = vunpack.c.h.b16 %v3693
    %v4864 = vunpack.c.l.b16 %v3694
    %v4865 = vunpack.c.h.b16 %v3694
    %v4866 = vunpack.c.l.b16 %v3695
    %v4867 = vunpack.c.h.b16 %v3695
    %v4868 = vunpack.c.l.b16 %v3696
    %v4869 = vunpack.c.l.b16 %v3697
    %v4870 = vunpack.c.h.b16 %v3697
    %v4871 = vunpack.c.l.b16 %v3698
    %v4872 = vunpack.c.h.b16 %v3698
    %v4873 = vunpack.c.l.b16 %v3699
    %v4874 = vunpack.c.h.b16 %v3699
    %v4875 = vunpack.c.l.b16 %v3700
    %v4876 = vunpack.c.l.b16 %v3701
    %v4877 = vunpack.c.h.b16 %v3701
    %v4878 = vunpack.c.l.b16 %v3702
    %v4879 = vunpack.c.h.b16 %v3702
    %v4880 = vunpack.c.l.b16 %v3703
    %v4881 = vunpack.c.h.b16 %v3703
    %v4882 = vunpack.c.l.b16 %v3704
    %v4883 = vunpack.c.l.b16 %v3705
    %v4884 = vunpack.c.h.b16 %v3705
    %v4885 = vunpack.c.l.b16 %v3706
    %v4886 = vunpack.c.h.b16 %v3706
    %v4887 = vunpack.c.l.b16 %v3707
    %v4888 = vunpack.c.h.b16 %v3707
    %v4889 = vunpack.c.l.b16 %v3708
    %v4890 = vunpack.c.l.b16 %v3709
    %v4891 = vunpack.c.h.b16 %v3709
    %v4892 = vunpack.c.l.b16 %v3710
    %v4893 = vunpack.c.h.b16 %v3710
    %v4894 = vunpack.c.l.b16 %v3711
    %v4895 = vunpack.c.h.b16 %v3711
    %v4896 = vunpack.c.l.b16 %v3712
    %v4897 = vunpack.c.l.b16 %v3713
    %v4898 = vunpack.c.h.b16 %v3713
    %v4899 = vunpack.c.l.b16 %v3714
    %v4900 = vunpack.c.h.b16 %v3714
    %v4901 = vunpack.c.l.b16 %v3715
    %v4902 = vunpack.c.h.b16 %v3715
    %v4903 = vunpack.c.l.b16 %v3716
    %v4904 = vunpack.c.l.b16 %v3717
    %v4905 = vunpack.c.h.b16 %v3717
    %v4906 = vunpack.c.l.b16 %v3718
    %v4907 = vunpack.c.h.b16 %v3718
    %v4908 = vunpack.c.l.b16 %v3719
    %v4909 = vunpack.c.h.b16 %v3719
    %v4910 = vunpack.c.l.b16 %v3720
    %v4911 = vunpack.c.l.b16 %v3721
    %v4912 = vunpack.c.h.b16 %v3721
    %v4913 = vunpack.c.l.b16 %v3722
    %v4914 = vunpack.c.h.b16 %v3722
    %v4915 = vunpack.c.l.b16 %v3723
    %v4916 = vunpack.c.h.b16 %v3723
    %v4917 = vunpack.c.l.b16 %v3724
    %v4918 = vunpack.c.l.b16 %v3725
    %v4919 = vunpack.c.h.b16 %v3725
    %v4920 = vunpack.c.l.b16 %v3726
    %v4921 = vunpack.c.h.b16 %v3726
    %v4922 = vunpack.c.l.b16 %v3727
    %v4923 = vunpack.c.h.b16 %v3727
    %v4924 = vunpack.c.l.b16 %v3728
    %v4925 = vunpack.c.l.b16 %v3729
    %v4926 = vunpack.c.h.b16 %v3729
    %v4927 = vunpack.c.l.b16 %v3730
    %v4928 = vunpack.c.h.b16 %v3730
    %v4929 = vunpack.c.l.b16 %v3731
    %v4930 = vunpack.c.h.b16 %v3731
    %v4931 = vunpack.c.l.b16 %v3732
    %v4932 = vunpack.c.l.b16 %v3733
    %v4933 = vunpack.c.h.b16 %v3733
    %v4934 = vunpack.c.l.b16 %v3734
    %v4935 = vunpack.c.h.b16 %v3734
    %v4936 = vunpack.c.l.b16 %v3735
    %v4937 = vunpack.c.h.b16 %v3735
    %v4938 = vunpack.c.l.b16 %v3736
    %v4939 = vunpack.c.l.b16 %v3737
    %v4940 = vunpack.c.h.b16 %v3737
    %v4941 = vunpack.c.l.b16 %v3738
    %v4942 = vunpack.c.h.b16 %v3738
    %v4943 = vunpack.c.l.b16 %v3739
    %v4944 = vunpack.c.h.b16 %v3739
    %v4945 = vunpack.c.l.b16 %v3740
    %v4946 = vunpack.c.l.b16 %v3741
    %v4947 = vunpack.c.h.b16 %v3741
    %v4948 = vunpack.c.l.b16 %v3742
    %v4949 = vunpack.c.h.b16 %v3742
    %v4950 = vunpack.c.l.b16 %v3743
    %v4951 = vunpack.c.h.b16 %v3743
    %v4952 = vunpack.c.l.b16 %v3744
    %v4953 = vunpack.c.l.b16 %v3745
    %v4954 = vunpack.c.h.b16 %v3745
    %v4955 = vunpack.c.l.b16 %v3746
    %v4956 = vunpack.c.h.b16 %v3746
    %v4957 = vunpack.c.l.b16 %v3747
    %v4958 = vunpack.c.h.b16 %v3747
    %v4959 = vunpack.c.l.b16 %v3748
    %v4960 = vunpack.c.l.b16 %v3749
    %v4961 = vunpack.c.h.b16 %v3749
    %v4962 = vunpack.c.l.b16 %v3750
    %v4963 = vunpack.c.h.b16 %v3750
    %v4964 = vunpack.c.l.b16 %v3751
    %v4965 = vunpack.c.h.b16 %v3751
    %v4966 = vunpack.c.l.b16 %v3752
    %v4967 = vunpack.c.l.b16 %v3753
    %v4968 = vunpack.c.h.b16 %v3753
    %v4969 = vunpack.c.l.b16 %v3754
    %v4970 = vunpack.c.h.b16 %v3754
    %v4971 = vunpack.c.l.b16 %v3755
    %v4972 = vunpack.c.h.b16 %v3755
    %v4973 = vunpack.c.l.b16 %v3756
    %v4974 = vunpack.c.l.b16 %v3757
    %v4975 = vunpack.c.h.b16 %v3757
    %v4976 = vunpack.c.l.b16 %v3758
    %v4977 = vunpack.c.h.b16 %v3758
    %v4978 = vunpack.c.l.b16 %v3759
    %v4979 = vunpack.c.h.b16 %v3759
    %v4980 = vunpack.c.l.b16 %v3760
    %v4981 = vunpack.c.l.b16 %v3761
    %v4982 = vunpack.c.h.b16 %v3761
    %v4983 = vunpack.c.l.b16 %v3762
    %v4984 = vunpack.c.h.b16 %v3762
    %v4985 = vunpack.c.l.b16 %v3763
    %v4986 = vunpack.c.h.b16 %v3763
    %v4987 = vunpack.c.l.b16 %v3764
    %v4988 = vunpack.c.l.b16 %v3765
    %v4989 = vunpack.c.h.b16 %v3765
    %v4990 = vunpack.c.l.b16 %v3766
    %v4991 = vunpack.c.h.b16 %v3766
    %v4992 = vunpack.c.l.b16 %v3767
    %v4993 = vunpack.c.h.b16 %v3767
    %v4994 = vunpack.c.l.b16 %v3768
    %v4995 = vunpack.c.l.b16 %v3769
    %v4996 = vunpack.c.h.b16 %v3769
    %v4997 = vunpack.c.l.b16 %v3770
    %v4998 = vunpack.c.h.b16 %v3770
    %v4999 = vunpack.c.l.b16 %v3771
    %v5000 = vunpack.c.h.b16 %v3771
    %v5001 = vunpack.c.l.b16 %v3772
    %v5002 = vunpack.c.l.b16 %v3773
    %v5003 = vunpack.c.h.b16 %v3773
    %v5004 = vunpack.c.l.b16 %v3774
    %v5005 = vunpack.c.h.b16 %v3774
    %v5006 = vunpack.c.l.b16 %v3775
    %v5007 = vunpack.c.h.b16 %v3775
    %v5008 = vunpack.c.l.b16 %v3776
    %v5009 = vunpack.c.l.b16 %v3777
    %v5010 = vunpack.c.h.b16 %v3777
    %v5011 = vunpack.c.l.b16 %v3778
    %v5012 = vunpack.c.h.b16 %v3778
    %v5013 = vunpack.c.l.b16 %v3779
    %v5014 = vunpack.c.h.b16 %v3779
    %v5015 = vunpack.c.l.b16 %v3780
    %v5016 = vunpack.c.l.b16 %v3781
    %v5017 = vunpack.c.h.b16 %v3781
    %v5018 = vunpack.c.l.b16 %v3782
    %v5019 = vunpack.c.h.b16 %v3782
    %v5020 = vunpack.c.l.b16 %v3783
    %v5021 = vunpack.c.h.b16 %v3783
    %v5022 = vunpack.c.l.b16 %v3784
    %v5023 = vunpack.c.l.b16 %v3785
    %v5024 = vunpack.c.h.b16 %v3785
    %v5025 = vunpack.c.l.b16 %v3786
    %v5026 = vunpack.c.h.b16 %v3786
    %v5027 = vunpack.c.l.b16 %v3787
    %v5028 = vunpack.c.h.b16 %v3787
    %v5029 = vunpack.c.l.b16 %v3788
    %v5030 = vunpack.c.l.b16 %v3789
    %v5031 = vunpack.c.h.b16 %v3789
    %v5032 = vunpack.c.l.b16 %v3790
    %v5033 = vunpack.c.h.b16 %v3790
    %v5034 = vunpack.c.l.b16 %v3791
    %v5035 = vunpack.c.h.b16 %v3791
    %v5036 = vunpack.c.l.b16 %v3792
    %v5037 = vunpack.c.l.b16 %v3793
    %v5038 = vunpack.c.h.b16 %v3793
    %v5039 = vunpack.c.l.b16 %v3794
    %v5040 = vunpack.c.h.b16 %v3794
    %v5041 = vunpack.c.l.b16 %v3795
    %v5042 = vunpack.c.h.b16 %v3795
    %v5043 = vunpack.c.l.b16 %v3796
    %v5044 = vunpack.c.l.b16 %v3797
    %v5045 = vunpack.c.h.b16 %v3797
    %v5046 = vunpack.c.l.b16 %v3798
    %v5047 = vunpack.c.h.b16 %v3798
    %v5048 = vunpack.c.l.b16 %v3799
    %v5049 = vunpack.c.h.b16 %v3799
    %v5050 = vunpack.c.l.b16 %v3800
    %v5051 = vunpack.c.l.b16 %v3801
    %v5052 = vunpack.c.h.b16 %v3801
    %v5053 = vunpack.c.l.b16 %v3802
    %v5054 = vunpack.c.h.b16 %v3802
    %v5055 = vunpack.c.l.b16 %v3803
    %v5056 = vunpack.c.h.b16 %v3803
    %v5057 = vunpack.c.l.b16 %v3804
    %v5058 = vunpack.c.l.b16 %v3805
    %v5059 = vunpack.c.h.b16 %v3805
    %v5060 = vunpack.c.l.b16 %v3806
    %v5061 = vunpack.c.h.b16 %v3806
    %v5062 = vunpack.c.l.b16 %v3807
    %v5063 = vunpack.c.h.b16 %v3807
    %v5064 = vunpack.c.l.b16 %v3808
    %v5065 = vunpack.c.l.b16 %v3809
    %v5066 = vunpack.c.h.b16 %v3809
    %v5067 = vunpack.c.l.b16 %v3810
    %v5068 = vunpack.c.h.b16 %v3810
    %v5069 = vunpack.c.l.b16 %v3811
    %v5070 = vunpack.c.h.b16 %v3811
    %v5071 = vunpack.c.l.b16 %v3812
    %v5072 = vunpack.c.l.b16 %v3813
    %v5073 = vunpack.c.h.b16 %v3813
    %v5074 = vunpack.c.l.b16 %v3814
    %v5075 = vunpack.c.h.b16 %v3814
    %v5076 = vunpack.c.l.b16 %v3815
    %v5077 = vunpack.c.h.b16 %v3815
    %v5078 = vunpack.c.l.b16 %v3816
    %v5079 = vunpack.c.l.b16 %v3817
    %v5080 = vunpack.c.h.b16 %v3817
    %v5081 = vunpack.c.l.b16 %v3818
    %v5082 = vunpack.c.h.b16 %v3818
    %v5083 = vunpack.c.l.b16 %v3819
    %v5084 = vunpack.c.h.b16 %v3819
    %v5085 = vunpack.c.l.b16 %v3820
    %v5086 = vunpack.c.l.b16 %v3821
    %v5087 = vunpack.c.h.b16 %v3821
    %v5088 = vunpack.c.l.b16 %v3822
    %v5089 = vunpack.c.h.b16 %v3822
    %v5090 = vunpack.c.l.b16 %v3823
    %v5091 = vunpack.c.h.b16 %v3823
    %v5092 = vunpack.c.l.b16 %v3824
    %v5093 = vunpack.c.l.b16 %v3825
    %v5094 = vunpack.c.h.b16 %v3825
    %v5095 = vunpack.c.l.b16 %v3826
    %v5096 = vunpack.c.h.b16 %v3826
    %v5097 = vunpack.c.l.b16 %v3827
    %v5098 = vunpack.c.h.b16 %v3827
    %v5099 = vunpack.c.l.b16 %v3828
    %v5100 = vunpack.c.l.b16 %v3829
    %v5101 = vunpack.c.h.b16 %v3829
    %v5102 = vunpack.c.l.b16 %v3830
    %v5103 = vunpack.c.h.b16 %v3830
    %v5104 = vunpack.c.l.b16 %v3831
    %v5105 = vunpack.c.h.b16 %v3831
    %v5106 = vunpack.c.l.b16 %v3832
    %v5107 = vunpack.c.l.b16 %v3833
    %v5108 = vunpack.c.h.b16 %v3833
    %v5109 = vunpack.c.l.b16 %v3834
    %v5110 = vunpack.c.h.b16 %v3834
    %v5111 = vunpack.c.l.b16 %v3835
    %v5112 = vunpack.c.h.b16 %v3835
    %v5113 = vunpack.c.l.b16 %v3836
    %v5114 = vunpack.c.l.b16 %v3837
    %v5115 = vunpack.c.h.b16 %v3837
    %v5116 = vunpack.c.l.b16 %v3838
    %v5117 = vunpack.c.h.b16 %v3838
    %v5118 = vunpack.c.l.b16 %v3839
    %v5119 = vunpack.c.h.b16 %v3839
    %v5120 = vunpack.c.l.b16 %v3840
    %v5121 = vunpack.c.l.b16 %v3841
    %v5122 = vunpack.c.h.b16 %v3841
    %v5123 = vunpack.c.l.b16 %v3842
    %v5124 = vunpack.c.h.b16 %v3842
    %v5125 = vunpack.c.l.b16 %v3843
    %v5126 = vunpack.c.h.b16 %v3843
    %v5127 = vunpack.c.l.b16 %v3844
    %v5128 = vunpack.c.l.b16 %v3845
    %v5129 = vunpack.c.h.b16 %v3845
    %v5130 = vunpack.c.l.b16 %v3846
    %v5131 = vunpack.c.h.b16 %v3846
    %v5132 = vunpack.c.l.b16 %v3847
    %v5133 = vunpack.c.h.b16 %v3847
    %v5134 = vunpack.c.l.b16 %v3848
    %v5135 = vunpack.c.l.b16 %v3849
    %v5136 = vunpack.c.h.b16 %v3849
    %v5137 = vunpack.c.l.b16 %v3850
    %v5138 = vunpack.c.h.b16 %v3850
    %v5139 = vunpack.c.l.b16 %v3851
    %v5140 = vunpack.c.h.b16 %v3851
    %v5141 = vunpack.c.l.b16 %v3852
    %v5142 = vunpack.c.l.b16 %v3853
    %v5143 = vunpack.c.h.b16 %v3853
    %v5144 = vunpack.c.l.b16 %v3854
    %v5145 = vunpack.c.h.b16 %v3854
    %v5146 = vunpack.c.l.b16 %v3855
    %v5147 = vunpack.c.h.b16 %v3855
    %v5148 = vunpack.c.l.b16 %v3856
    %v5149 = vunpack.c.l.b16 %v3857
    %v5150 = vunpack.c.h.b16 %v3857
    %v5151 = vunpack.c.l.b16 %v3858
    %v5152 = vunpack.c.h.b16 %v3858
    %v5153 = vunpack.c.l.b16 %v3859
    %v5154 = vunpack.c.h.b16 %v3859
    %v5155 = vunpack.c.l.b16 %v3860
    %v5156 = vunpack.c.l.b16 %v3861
    %v5157 = vunpack.c.h.b16 %v3861
    %v5158 = vunpack.c.l.b16 %v3862
    %v5159 = vunpack.c.h.b16 %v3862
    %v5160 = vunpack.c.l.b16 %v3863
    %v5161 = vunpack.c.h.b16 %v3863
    %v5162 = vunpack.c.l.b16 %v3864
    %v5163 = vunpack.c.l.b16 %v3865
    %v5164 = vunpack.c.h.b16 %v3865
    %v5165 = vunpack.c.l.b16 %v3866
    %v5166 = vunpack.c.h.b16 %v3866
    %v5167 = vunpack.c.l.b16 %v3867
    %v5168 = vunpack.c.h.b16 %v3867
    %v5169 = vunpack.c.l.b16 %v3868
    %v5170 = vunpack.c.l.b16 %v3869
    %v5171 = vunpack.c.h.b16 %v3869
    %v5172 = vunpack.c.l.b16 %v3870
    %v5173 = vunpack.c.h.b16 %v3870
    %v5174 = vunpack.c.l.b16 %v3871
    %v5175 = vunpack.c.h.b16 %v3871
    %v5176 = vunpack.c.l.b16 %v3872
    %v5177 = vunpack.c.l.b16 %v3873
    %v5178 = vunpack.c.h.b16 %v3873
    %v5179 = vunpack.c.l.b16 %v3874
    %v5180 = vunpack.c.h.b16 %v3874
    %v5181 = vunpack.c.l.b16 %v3875
    %v5182 = vunpack.c.h.b16 %v3875
    %v5183 = vunpack.c.l.b16 %v3876
    %v5184 = vunpack.c.l.b16 %v3877
    %v5185 = vunpack.c.h.b16 %v3877
    %v5186 = vunpack.c.l.b16 %v3878
    %v5187 = vunpack.c.h.b16 %v3878
    %v5188 = vunpack.c.l.b16 %v3879
    %v5189 = vunpack.c.h.b16 %v3879
    %v5190 = vunpack.c.l.b16 %v3880
    %v5191 = vunpack.c.l.b16 %v3881
    %v5192 = vunpack.c.h.b16 %v3881
    %v5193 = vunpack.c.l.b16 %v3882
    %v5194 = vunpack.c.h.b16 %v3882
    %v5195 = vunpack.c.l.b16 %v3883
    %v5196 = vunpack.c.h.b16 %v3883
    %v5197 = vunpack.c.l.b16 %v3884
    %v5198 = vunpack.c.l.b16 %v3885
    %v5199 = vunpack.c.h.b16 %v3885
    %v5200 = vunpack.c.l.b16 %v3886
    %v5201 = vunpack.c.h.b16 %v3886
    %v5202 = vunpack.c.l.b16 %v3887
    %v5203 = vunpack.c.h.b16 %v3887
    %v5204 = vunpack.c.l.b16 %v3888
    %v5205 = vunpack.c.l.b16 %v3889
    %v5206 = vunpack.c.h.b16 %v3889
    %v5207 = vunpack.c.l.b16 %v3890
    %v5208 = vunpack.c.h.b16 %v3890
    %v5209 = vunpack.c.l.b16 %v3891
    %v5210 = vunpack.c.h.b16 %v3891
    %v5211 = vunpack.c.l.b16 %v3892
    %v5212 = vunpack.c.l.b16 %v3893
    %v5213 = vunpack.c.h.b16 %v3893
    %v5214 = vunpack.c.l.b16 %v3894
    %v5215 = vunpack.c.h.b16 %v3894
    %v5216 = vunpack.c.l.b16 %v3895
    %v5217 = vunpack.c.h.b16 %v3895
    %v5218 = vunpack.c.l.b16 %v3896
    %v5219 = vunpack.c.l.b16 %v3897
    %v5220 = vunpack.c.h.b16 %v3897
    %v5221 = vunpack.c.l.b16 %v3898
    %v5222 = vunpack.c.h.b16 %v3898
    %v5223 = vunpack.c.l.b16 %v3899
    %v5224 = vunpack.c.h.b16 %v3899
    %v5225 = vunpack.c.l.b16 %v3900
    %v5226 = vunpack.c.l.b16 %v3901
    %v5227 = vunpack.c.h.b16 %v3901
    %v5228 = vunpack.c.l.b16 %v3902
    %v5229 = vunpack.c.h.b16 %v3902
    %v5230 = vunpack.c.l.b16 %v3903
    %v5231 = vunpack.c.h.b16 %v3903
    %v5232 = vunpack.c.l.b16 %v3904
    %v5233 = vunpack.c.l.b16 %v3905
    %v5234 = vunpack.c.h.b16 %v3905
    %v5235 = vunpack.c.l.b16 %v3906
    %v5236 = vunpack.c.h.b16 %v3906
    %v5237 = vunpack.c.l.b16 %v3907
    %v5238 = vunpack.c.h.b16 %v3907
    %v5239 = vunpack.c.l.b16 %v3908
    %v5240 = vunpack.c.l.b16 %v3909
    %v5241 = vunpack.c.h.b16 %v3909
    %v5242 = vunpack.c.l.b16 %v3910
    %v5243 = vunpack.c.h.b16 %v3910
    %v5244 = vunpack.c.l.b16 %v3911
    %v5245 = vunpack.c.h.b16 %v3911
    %v5246 = vunpack.c.l.b16 %v3912
    %v5247 = vunpack.c.l.b16 %v3913
    %v5248 = vunpack.c.h.b16 %v3913
    %v5249 = vunpack.c.l.b16 %v3914
    %v5250 = vunpack.c.h.b16 %v3914
    %v5251 = vunpack.c.l.b16 %v3915
    %v5252 = vunpack.c.h.b16 %v3915
    %v5253 = vunpack.c.l.b16 %v3916
    %v5254 = vunpack.c.l.b16 %v3917
    %v5255 = vunpack.c.h.b16 %v3917
    %v5256 = vunpack.c.l.b16 %v3918
    %v5257 = vunpack.c.h.b16 %v3918
    %v5258 = vunpack.c.l.b16 %v3919
    %v5259 = vunpack.c.h.b16 %v3919
    %v5260 = vunpack.c.l.b16 %v3920
    %v5261 = vunpack.c.l.b16 %v3921
    %v5262 = vunpack.c.h.b16 %v3921
    %v5263 = vunpack.c.l.b16 %v3922
    %v5264 = vunpack.c.h.b16 %v3922
    %v5265 = vunpack.c.l.b16 %v3923
    %v5266 = vunpack.c.h.b16 %v3923
    %v5267 = vunpack.c.l.b16 %v3924
    %v5268 = vunpack.c.l.b16 %v3925
    %v5269 = vunpack.c.h.b16 %v3925
    %v5270 = vunpack.c.l.b16 %v3926
    %v5271 = vunpack.c.h.b16 %v3926
    %v5272 = vunpack.c.l.b16 %v3927
    %v5273 = vunpack.c.h.b16 %v3927
    %v5274 = vunpack.c.l.b16 %v3928
    %v5275 = vunpack.c.l.b16 %v3929
    %v5276 = vunpack.c.h.b16 %v3929
    %v5277 = vunpack.c.l.b16 %v3930
    %v5278 = vunpack.c.h.b16 %v3930
    %v5279 = vunpack.c.l.b16 %v3931
    %v5280 = vunpack.c.h.b16 %v3931
    %v5281 = vunpack.c.l.b16 %v3932
    %v5282 = vunpack.c.l.b16 %v3933
    %v5283 = vunpack.c.h.b16 %v3933
    %v5284 = vunpack.c.l.b16 %v3934
    %v5285 = vunpack.c.h.b16 %v3934
    %v5286 = vunpack.c.l.b16 %v3935
    %v5287 = vunpack.c.h.b16 %v3935
    %v5288 = vunpack.c.l.b16 %v3936
    %v5289 = vunpack.c.l.b16 %v3937
    %v5290 = vunpack.c.h.b16 %v3937
    %v5291 = vunpack.c.l.b16 %v3938
    %v5292 = vunpack.c.h.b16 %v3938
    %v5293 = vunpack.c.l.b16 %v3939
    %v5294 = vunpack.c.h.b16 %v3939
    %v5295 = vunpack.c.l.b16 %v3940
    %v5296 = vunpack.c.l.b16 %v3941
    %v5297 = vunpack.c.h.b16 %v3941
    %v5298 = vunpack.c.l.b16 %v3942
    %v5299 = vunpack.c.h.b16 %v3942
    %v5300 = vunpack.c.l.b16 %v3943
    %v5301 = vunpack.c.h.b16 %v3943
    %v5302 = vunpack.c.l.b16 %v3944
    %v5303 = vunpack.c.l.b16 %v3945
    %v5304 = vunpack.c.h.b16 %v3945
    %v5305 = vunpack.c.l.b16 %v3946
    %v5306 = vunpack.c.h.b16 %v3946
    %v5307 = vunpack.c.l.b16 %v3947
    %v5308 = vunpack.c.h.b16 %v3947
    %v5309 = vunpack.c.l.b16 %v3948
    %v5310 = vunpack.c.l.b16 %v3949
    %v5311 = vunpack.c.h.b16 %v3949
    %v5312 = vunpack.c.l.b16 %v3950
    %v5313 = vunpack.c.h.b16 %v3950
    %v5314 = vunpack.c.l.b16 %v3951
    %v5315 = vunpack.c.h.b16 %v3951
    %v5316 = vunpack.c.l.b16 %v3952
    %v5317 = vunpack.c.l.b16 %v3953
    %v5318 = vunpack.c.h.b16 %v3953
    %v5319 = vunpack.c.l.b16 %v3954
    %v5320 = vunpack.c.h.b16 %v3954
    %v5321 = vunpack.c.l.b16 %v3955
    %v5322 = vunpack.c.h.b16 %v3955
    %v5323 = vunpack.c.l.b16 %v3956
    %v5324 = vunpack.c.l.b16 %v3957
    %v5325 = vunpack.c.h.b16 %v3957
    %v5326 = vunpack.c.l.b16 %v3958
    %v5327 = vunpack.c.h.b16 %v3958
    %v5328 = vunpack.c.l.b16 %v3959
    %v5329 = vunpack.c.h.b16 %v3959
    %v5330 = vunpack.c.l.b16 %v3960
    %v5331 = vunpack.c.l.b16 %v3961
    %v5332 = vunpack.c.h.b16 %v3961
    %v5333 = vunpack.c.l.b16 %v3962
    %v5334 = vunpack.c.h.b16 %v3962
    %v5335 = vunpack.c.l.b16 %v3963
    %v5336 = vunpack.c.h.b16 %v3963
    %v5337 = vunpack.c.l.b16 %v3964
    %v5338 = vunpack.c.l.b16 %v3965
    %v5339 = vunpack.c.h.b16 %v3965
    %v5340 = vunpack.c.l.b16 %v3966
    %v5341 = vunpack.c.h.b16 %v3966
    %v5342 = vunpack.c.l.b16 %v3967
    %v5343 = vunpack.c.h.b16 %v3967
    %v5344 = vunpack.c.l.b16 %v3968
    %v5345 = vunpack.c.l.b16 %v3969
    %v5346 = vunpack.c.h.b16 %v3969
    %v5347 = vunpack.c.l.b16 %v3970
    %v5348 = vunpack.c.h.b16 %v3970
    %v5349 = vunpack.c.l.b16 %v3971
    %v5350 = vunpack.c.h.b16 %v3971
    %v5351 = vunpack.c.l.b16 %v3972
    %v5352 = vunpack.c.l.b16 %v3973
    %v5353 = vunpack.c.h.b16 %v3973
    %v5354 = vunpack.c.l.b16 %v3974
    %v5355 = vunpack.c.h.b16 %v3974
    %v5356 = vunpack.c.l.b16 %v3975
    %v5357 = vunpack.c.h.b16 %v3975
    %v5358 = vunpack.c.l.b16 %v3976
    %v5359 = vunpack.c.l.b16 %v3977
    %v5360 = vunpack.c.h.b16 %v3977
    %v5361 = vunpack.c.l.b16 %v3978
    %v5362 = vunpack.c.h.b16 %v3978
    %v5363 = vunpack.c.l.b16 %v3979
    %v5364 = vunpack.c.h.b16 %v3979
    %v5365 = vunpack.c.l.b16 %v3980
    %v5366 = vunpack.c.l.b16 %v3981
    %v5367 = vunpack.c.h.b16 %v3981
    %v5368 = vunpack.c.l.b16 %v3982
    %v5369 = vunpack.c.h.b16 %v3982
    %v5370 = vunpack.c.l.b16 %v3983
    %v5371 = vunpack.c.h.b16 %v3983
    %v5372 = vunpack.c.l.b16 %v3984
    %v5373 = vunpack.c.l.b16 %v3985
    %v5374 = vunpack.c.h.b16 %v3985
    %v5375 = vunpack.c.l.b16 %v3986
    %v5376 = vunpack.c.h.b16 %v3986
    %v5377 = vunpack.c.l.b16 %v3987
    %v5378 = vunpack.c.h.b16 %v3987
    %v5379 = vunpack.c.l.b16 %v3988
    %v5380 = vunpack.c.l.b16 %v3989
    %v5381 = vunpack.c.h.b16 %v3989
    %v5382 = vunpack.c.l.b16 %v3990
    %v5383 = vunpack.c.h.b16 %v3990
    %v5384 = vunpack.c.l.b16 %v3991
    %v5385 = vunpack.c.h.b16 %v3991
    %v5386 = vunpack.c.l.b16 %v3992
    %v5387 = vunpack.c.l.b16 %v3993
    %v5388 = vunpack.c.h.b16 %v3993
    %v5389 = vunpack.c.l.b16 %v3994
    %v5390 = vunpack.c.h.b16 %v3994
    %v5391 = vunpack.c.l.b16 %v3995
    %v5392 = vunpack.c.h.b16 %v3995
    %v5393 = vunpack.c.l.b16 %v3996
    %v5394 = vunpack.c.l.b16 %v3997
    %v5395 = vunpack.c.h.b16 %v3997
    %v5396 = vunpack.c.l.b16 %v3998
    %v5397 = vunpack.c.h.b16 %v3998
    %v5398 = vunpack.c.l.b16 %v3999
    %v5399 = vunpack.c.h.b16 %v3999
    %v5400 = vunpack.c.l.b16 %v4000
    %v5401 = vunpack.c.l.b16 %v4001
    %v5402 = vunpack.c.h.b16 %v4001
    %v5403 = vunpack.c.l.b16 %v4002
    %v5404 = vunpack.c.h.b16 %v4002
    %v5405 = vunpack.c.l.b16 %v4003
    %v5406 = vunpack.c.h.b16 %v4003
    %v5407 = vunpack.c.l.b16 %v4004
    %v5408 = vunpack.c.l.b16 %v4005
    %v5409 = vunpack.c.h.b16 %v4005
    %v5410 = vunpack.c.l.b16 %v4006
    %v5411 = vunpack.c.h.b16 %v4006
    %v5412 = vunpack.c.l.b16 %v4007
    %v5413 = vunpack.c.h.b16 %v4007
    %v5414 = vunpack.c.l.b16 %v4008
    %v5415 = vunpack.c.l.b16 %v4009
    %v5416 = vunpack.c.h.b16 %v4009
    %v5417 = vunpack.c.l.b16 %v4010
    %v5418 = vunpack.c.h.b16 %v4010
    %v5419 = vunpack.c.l.b16 %v4011
    %v5420 = vunpack.c.h.b16 %v4011
    %v5421 = vunpack.c.l.b16 %v4012
    %v5422 = vunpack.c.l.b16 %v4013
    %v5423 = vunpack.c.h.b16 %v4013
    %v5424 = vunpack.c.l.b16 %v4014
    %v5425 = vunpack.c.h.b16 %v4014
    %v5426 = vunpack.c.l.b16 %v4015
    %v5427 = vunpack.c.h.b16 %v4015
    %v5428 = vunpack.c.l.b16 %v4016
    %v5429 = vunpack.c.l.b16 %v4017
    %v5430 = vunpack.c.h.b16 %v4017
    %v5431 = vunpack.c.l.b16 %v4018
    %v5432 = vunpack.c.h.b16 %v4018
    %v5433 = vunpack.c.l.b16 %v4019
    %v5434 = vunpack.c.h.b16 %v4019
    %v5435 = vunpack.c.l.b16 %v4020
    %v5436 = vunpack.c.l.b16 %v4021
    %v5437 = vunpack.c.h.b16 %v4021
    %v5438 = vunpack.c.l.b16 %v4022
    %v5439 = vunpack.c.h.b16 %v4022
    %v5440 = vunpack.c.l.b16 %v4023
    %v5441 = vunpack.c.h.b16 %v4023
    %v5442 = vunpack.c.l.b16 %v4024
    %v5443 = vunpack.c.l.b16 %v4025
    %v5444 = vunpack.c.h.b16 %v4025
    %v5445 = vunpack.c.l.b16 %v4026
    %v5446 = vunpack.c.h.b16 %v4026
    %v5447 = vunpack.c.l.b16 %v4027
    %v5448 = vunpack.c.h.b16 %v4027
    %v5449 = vunpack.c.l.b16 %v4028
    %v5450 = vunpack.c.l.b16 %v4029
    %v5451 = vunpack.c.h.b16 %v4029
    %v5452 = vunpack.c.l.b16 %v4030
    %v5453 = vunpack.c.h.b16 %v4030
    %v5454 = vunpack.c.l.b16 %v4031
    %v5455 = vunpack.c.h.b16 %v4031
    %v5456 = vunpack.c.l.b16 %v4032
    %v5457 = vunpack.c.l.b16 %v4033
    %v5458 = vunpack.c.h.b16 %v4033
    %v5459 = vunpack.c.l.b16 %v4034
    %v5460 = vunpack.c.h.b16 %v4034
    %v5461 = vunpack.c.l.b16 %v4035
    %v5462 = vunpack.c.h.b16 %v4035
    %v5463 = vunpack.c.l.b16 %v4036
    %v5464 = vunpack.c.l.b16 %v4037
    %v5465 = vunpack.c.h.b16 %v4037
    %v5466 = vunpack.c.l.b16 %v4038
    %v5467 = vunpack.c.h.b16 %v4038
    %v5468 = vunpack.c.l.b16 %v4039
    %v5469 = vunpack.c.h.b16 %v4039
    %v5470 = vunpack.c.l.b16 %v4040
    %v5471 = vunpack.c.l.b16 %v4041
    %v5472 = vunpack.c.h.b16 %v4041
    %v5473 = vunpack.c.l.b16 %v4042
    %v5474 = vunpack.c.h.b16 %v4042
    %v5475 = vunpack.c.l.b16 %v4043
    %v5476 = vunpack.c.h.b16 %v4043
    %v5477 = vunpack.c.l.b16 %v4044
    %v5478 = vunpack.c.l.b16 %v4045
    %v5479 = vunpack.c.h.b16 %v4045
    %v5480 = vunpack.c.l.b16 %v4046
    %v5481 = vunpack.c.h.b16 %v4046
    %v5482 = vunpack.c.l.b16 %v4047
    %v5483 = vunpack.c.h.b16 %v4047
    %v5484 = vunpack.c.l.b16 %v4048
    %v5485 = vunpack.c.l.b16 %v4049
    %v5486 = vunpack.c.h.b16 %v4049
    %v5487 = vunpack.c.l.b16 %v4050
    %v5488 = vunpack.c.h.b16 %v4050
    %v5489 = vunpack.c.l.b16 %v4051
    %v5490 = vunpack.c.h.b16 %v4051
    %v5491 = vunpack.c.l.b16 %v4052
    %v5492 = vunpack.c.l.b16 %v4053
    %v5493 = vunpack.c.h.b16 %v4053
    %v5494 = vunpack.c.l.b16 %v4054
    %v5495 = vunpack.c.h.b16 %v4054
    %v5496 = vunpack.c.l.b16 %v4055
    %v5497 = vunpack.c.h.b16 %v4055
    %v5498 = vunpack.c.l.b16 %v4056
    %v5499 = vunpack.c.l.b16 %v4057
    %v5500 = vunpack.c.h.b16 %v4057
    %v5501 = vunpack.c.l.b16 %v4058
    %v5502 = vunpack.c.h.b16 %v4058
    %v5503 = vunpack.c.l.b16 %v4059
    %v5504 = vunpack.c.h.b16 %v4059
    %v5505 = vunpack.c.l.b16 %v4060
    %v5506 = vpack.c.b16 %v4617, %v4610
    %v5507 = vpack.c.b16 %v4618, %v4611
    %v5508 = vpack.c.b16 %v4619, %v4612
    %v5509 = vpack.c.b16 %v4620, %v4613
    %v5510 = vpack.c.b16 %v4621, %v4614
    %v5511 = vpack.c.b16 %v4622, %v4615
    %v5512 = vpack.c.b16 %v4623, %v4616
    %v5513 = vpack.c.b16 %v4631, %v4624
    %v5514 = vpack.c.b16 %v4632, %v4625
    %v5515 = vpack.c.b16 %v4633, %v4626
    %v5516 = vpack.c.b16 %v4634, %v4627
    %v5517 = vpack.c.b16 %v4635, %v4628
    %v5518 = vpack.c.b16 %v4636, %v4629
    %v5519 = vpack.c.b16 %v4637, %v4630
    %v5520 = vpack.c.b16 %v4645, %v4638
    %v5521 = vpack.c.b16 %v4646, %v4639
    %v5522 = vpack.c.b16 %v4647, %v4640
    %v5523 = vpack.c.b16 %v4648, %v4641
    %v5524 = vpack.c.b16 %v4649, %v4642
    %v5525 = vpack.c.b16 %v4650, %v4643
    %v5526 = vpack.c.b16 %v4651, %v4644
    %v5527 = vpack.c.b16 %v4659, %v4652
    %v5528 = vpack.c.b16 %v4660, %v4653
    %v5529 = vpack.c.b16 %v4661, %v4654
    %v5530 = vpack.c.b16 %v4662, %v4655
    %v5531 = vpack.c.b16 %v4663, %v4656
    %v5532 = vpack.c.b16 %v4664, %v4657
    %v5533 = vpack.c.b16 %v4665, %v4658
    %v5534 = vpack.c.b16 %v4673, %v4666
    %v5535 = vpack.c.b16 %v4674, %v4667
    %v5536 = vpack.c.b16 %v4675, %v4668
    %v5537 = vpack.c.b16 %v4676, %v4669
    %v5538 = vpack.c.b16 %v4677, %v4670
    %v5539 = vpack.c.b16 %v4678, %v4671
    %v5540 = vpack.c.b16 %v4679, %v4672
    %v5541 = vpack.c.b16 %v4687, %v4680
    %v5542 = vpack.c.b16 %v4688, %v4681
    %v5543 = vpack.c.b16 %v4689, %v4682
    %v5544 = vpack.c.b16 %v4690, %v4683
    %v5545 = vpack.c.b16 %v4691, %v4684
    %v5546 = vpack.c.b16 %v4692, %v4685
    %v5547 = vpack.c.b16 %v4693, %v4686
    %v5548 = vpack.c.b16 %v4701, %v4694
    %v5549 = vpack.c.b16 %v4702, %v4695
    %v5550 = vpack.c.b16 %v4703, %v4696
    %v5551 = vpack.c.b16 %v4704, %v4697
    %v5552 = vpack.c.b16 %v4705, %v4698
    %v5553 = vpack.c.b16 %v4706, %v4699
    %v5554 = vpack.c.b16 %v4707, %v4700
    %v5555 = vpack.c.b16 %v4715, %v4708
    %v5556 = vpack.c.b16 %v4716, %v4709
    %v5557 = vpack.c.b16 %v4717, %v4710
    %v5558 = vpack.c.b16 %v4718, %v4711
    %v5559 = vpack.c.b16 %v4719, %v4712
    %v5560 = vpack.c.b16 %v4720, %v4713
    %v5561 = vpack.c.b16 %v4721, %v4714
    %v5562 = vpack.c.b16 %v4729, %v4722
    %v5563 = vpack.c.b16 %v4730, %v4723
    %v5564 = vpack.c.b16 %v4731, %v4724
    %v5565 = vpack.c.b16 %v4732, %v4725
    %v5566 = vpack.c.b16 %v4733, %v4726
    %v5567 = vpack.c.b16 %v4734, %v4727
    %v5568 = vpack.c.b16 %v4735, %v4728
    %v5569 = vpack.c.b16 %v4743, %v4736
    %v5570 = vpack.c.b16 %v4744, %v4737
    %v5571 = vpack.c.b16 %v4745, %v4738
    %v5572 = vpack.c.b16 %v4746, %v4739
    %v5573 = vpack.c.b16 %v4747, %v4740
    %v5574 = vpack.c.b16 %v4748, %v4741
    %v5575 = vpack.c.b16 %v4749, %v4742
    %v5576 = vpack.c.b16 %v4757, %v4750
    %v5577 = vpack.c.b16 %v4758, %v4751
    %v5578 = vpack.c.b16 %v4759, %v4752
    %v5579 = vpack.c.b16 %v4760, %v4753
    %v5580 = vpack.c.b16 %v4761, %v4754
    %v5581 = vpack.c.b16 %v4762, %v4755
    %v5582 = vpack.c.b16 %v4763, %v4756
    %v5583 = vpack.c.b16 %v4771, %v4764
    %v5584 = vpack.c.b16 %v4772, %v4765
    %v5585 = vpack.c.b16 %v4773, %v4766
    %v5586 = vpack.c.b16 %v4774, %v4767
    %v5587 = vpack.c.b16 %v4775, %v4768
    %v5588 = vpack.c.b16 %v4776, %v4769
    %v5589 = vpack.c.b16 %v4777, %v4770
    %v5590 = vpack.c.b16 %v4785, %v4778
    %v5591 = vpack.c.b16 %v4786, %v4779
    %v5592 = vpack.c.b16 %v4787, %v4780
    %v5593 = vpack.c.b16 %v4788, %v4781
    %v5594 = vpack.c.b16 %v4789, %v4782
    %v5595 = vpack.c.b16 %v4790, %v4783
    %v5596 = vpack.c.b16 %v4791, %v4784
    %v5597 = vpack.c.b16 %v4799, %v4792
    %v5598 = vpack.c.b16 %v4800, %v4793
    %v5599 = vpack.c.b16 %v4801, %v4794
    %v5600 = vpack.c.b16 %v4802, %v4795
    %v5601 = vpack.c.b16 %v4803, %v4796
    %v5602 = vpack.c.b16 %v4804, %v4797
    %v5603 = vpack.c.b16 %v4805, %v4798
    %v5604 = vpack.c.b16 %v4813, %v4806
    %v5605 = vpack.c.b16 %v4814, %v4807
    %v5606 = vpack.c.b16 %v4815, %v4808
    %v5607 = vpack.c.b16 %v4816, %v4809
    %v5608 = vpack.c.b16 %v4817, %v4810
    %v5609 = vpack.c.b16 %v4818, %v4811
    %v5610 = vpack.c.b16 %v4819, %v4812
    %v5611 = vpack.c.b16 %v4827, %v4820
    %v5612 = vpack.c.b16 %v4828, %v4821
    %v5613 = vpack.c.b16 %v4829, %v4822
    %v5614 = vpack.c.b16 %v4830, %v4823
    %v5615 = vpack.c.b16 %v4831, %v4824
    %v5616 = vpack.c.b16 %v4832, %v4825
    %v5617 = vpack.c.b16 %v4833, %v4826
    %v5618 = vpack.c.b16 %v4841, %v4834
    %v5619 = vpack.c.b16 %v4842, %v4835
    %v5620 = vpack.c.b16 %v4843, %v4836
    %v5621 = vpack.c.b16 %v4844, %v4837
    %v5622 = vpack.c.b16 %v4845, %v4838
    %v5623 = vpack.c.b16 %v4846, %v4839
    %v5624 = vpack.c.b16 %v4847, %v4840
    %v5625 = vpack.c.b16 %v4855, %v4848
    %v5626 = vpack.c.b16 %v4856, %v4849
    %v5627 = vpack.c.b16 %v4857, %v4850
    %v5628 = vpack.c.b16 %v4858, %v4851
    %v5629 = vpack.c.b16 %v4859, %v4852
    %v5630 = vpack.c.b16 %v4860, %v4853
    %v5631 = vpack.c.b16 %v4861, %v4854
    %v5632 = vpack.c.b16 %v4869, %v4862
    %v5633 = vpack.c.b16 %v4870, %v4863
    %v5634 = vpack.c.b16 %v4871, %v4864
    %v5635 = vpack.c.b16 %v4872, %v4865
    %v5636 = vpack.c.b16 %v4873, %v4866
    %v5637 = vpack.c.b16 %v4874, %v4867
    %v5638 = vpack.c.b16 %v4875, %v4868
    %v5639 = vpack.c.b16 %v4883, %v4876
    %v5640 = vpack.c.b16 %v4884, %v4877
    %v5641 = vpack.c.b16 %v4885, %v4878
    %v5642 = vpack.c.b16 %v4886, %v4879
    %v5643 = vpack.c.b16 %v4887, %v4880
    %v5644 = vpack.c.b16 %v4888, %v4881
    %v5645 = vpack.c.b16 %v4889, %v4882
    %v5646 = vpack.c.b16 %v4897, %v4890
    %v5647 = vpack.c.b16 %v4898, %v4891
    %v5648 = vpack.c.b16 %v4899, %v4892
    %v5649 = vpack.c.b16 %v4900, %v4893
    %v5650 = vpack.c.b16 %v4901, %v4894
    %v5651 = vpack.c.b16 %v4902, %v4895
    %v5652 = vpack.c.b16 %v4903, %v4896
    %v5653 = vpack.c.b16 %v4911, %v4904
    %v5654 = vpack.c.b16 %v4912, %v4905
    %v5655 = vpack.c.b16 %v4913, %v4906
    %v5656 = vpack.c.b16 %v4914, %v4907
    %v5657 = vpack.c.b16 %v4915, %v4908
    %v5658 = vpack.c.b16 %v4916, %v4909
    %v5659 = vpack.c.b16 %v4917, %v4910
    %v5660 = vpack.c.b16 %v4925, %v4918
    %v5661 = vpack.c.b16 %v4926, %v4919
    %v5662 = vpack.c.b16 %v4927, %v4920
    %v5663 = vpack.c.b16 %v4928, %v4921
    %v5664 = vpack.c.b16 %v4929, %v4922
    %v5665 = vpack.c.b16 %v4930, %v4923
    %v5666 = vpack.c.b16 %v4931, %v4924
    %v5667 = vpack.c.b16 %v4939, %v4932
    %v5668 = vpack.c.b16 %v4940, %v4933
    %v5669 = vpack.c.b16 %v4941, %v4934
    %v5670 = vpack.c.b16 %v4942, %v4935
    %v5671 = vpack.c.b16 %v4943, %v4936
    %v5672 = vpack.c.b16 %v4944, %v4937
    %v5673 = vpack.c.b16 %v4945, %v4938
    %v5674 = vpack.c.b16 %v4953, %v4946
    %v5675 = vpack.c.b16 %v4954, %v4947
    %v5676 = vpack.c.b16 %v4955, %v4948
    %v5677 = vpack.c.b16 %v4956, %v4949
    %v5678 = vpack.c.b16 %v4957, %v4950
    %v5679 = vpack.c.b16 %v4958, %v4951
    %v5680 = vpack.c.b16 %v4959, %v4952
    %v5681 = vpack.c.b16 %v4967, %v4960
    %v5682 = vpack.c.b16 %v4968, %v4961
    %v5683 = vpack.c.b16 %v4969, %v4962
    %v5684 = vpack.c.b16 %v4970, %v4963
    %v5685 = vpack.c.b16 %v4971, %v4964
    %v5686 = vpack.c.b16 %v4972, %v4965
    %v5687 = vpack.c.b16 %v4973, %v4966
    %v5688 = vpack.c.b16 %v4981, %v4974
    %v5689 = vpack.c.b16 %v4982, %v4975
    %v5690 = vpack.c.b16 %v4983, %v4976
    %v5691 = vpack.c.b16 %v4984, %v4977
    %v5692 = vpack.c.b16 %v4985, %v4978
    %v5693 = vpack.c.b16 %v4986, %v4979
    %v5694 = vpack.c.b16 %v4987, %v4980
    %v5695 = vpack.c.b16 %v4995, %v4988
    %v5696 = vpack.c.b16 %v4996, %v4989
    %v5697 = vpack.c.b16 %v4997, %v4990
    %v5698 = vpack.c.b16 %v4998, %v4991
    %v5699 = vpack.c.b16 %v4999, %v4992
    %v5700 = vpack.c.b16 %v5000, %v4993
    %v5701 = vpack.c.b16 %v5001, %v4994
    %v5702 = vpack.c.b16 %v5009, %v5002
    %v5703 = vpack.c.b16 %v5010, %v5003
    %v5704 = vpack.c.b16 %v5011, %v5004
    %v5705 = vpack.c.b16 %v5012, %v5005
    %v5706 = vpack.c.b16 %v5013, %v5006
    %v5707 = vpack.c.b16 %v5014, %v5007
    %v5708 = vpack.c.b16 %v5015, %v5008
    %v5709 = vpack.c.b16 %v5023, %v5016
    %v5710 = vpack.c.b16 %v5024, %v5017
    %v5711 = vpack.c.b16 %v5025, %v5018
    %v5712 = vpack.c.b16 %v5026, %v5019
    %v5713 = vpack.c.b16 %v5027, %v5020
    %v5714 = vpack.c.b16 %v5028, %v5021
    %v5715 = vpack.c.b16 %v5029, %v5022
    %v5716 = vpack.c.b16 %v5037, %v5030
    %v5717 = vpack.c.b16 %v5038, %v5031
    %v5718 = vpack.c.b16 %v5039, %v5032
    %v5719 = vpack.c.b16 %v5040, %v5033
    %v5720 = vpack.c.b16 %v5041, %v5034
    %v5721 = vpack.c.b16 %v5042, %v5035
    %v5722 = vpack.c.b16 %v5043, %v5036
    %v5723 = vpack.c.b16 %v5051, %v5044
    %v5724 = vpack.c.b16 %v5052, %v5045
    %v5725 = vpack.c.b16 %v5053, %v5046
    %v5726 = vpack.c.b16 %v5054, %v5047
    %v5727 = vpack.c.b16 %v5055, %v5048
    %v5728 = vpack.c.b16 %v5056, %v5049
    %v5729 = vpack.c.b16 %v5057, %v5050
    %v5730 = vpack.c.b16 %v5065, %v5058
    %v5731 = vpack.c.b16 %v5066, %v5059
    %v5732 = vpack.c.b16 %v5067, %v5060
    %v5733 = vpack.c.b16 %v5068, %v5061
    %v5734 = vpack.c.b16 %v5069, %v5062
    %v5735 = vpack.c.b16 %v5070, %v5063
    %v5736 = vpack.c.b16 %v5071, %v5064
    %v5737 = vpack.c.b16 %v5079, %v5072
    %v5738 = vpack.c.b16 %v5080, %v5073
    %v5739 = vpack.c.b16 %v5081, %v5074
    %v5740 = vpack.c.b16 %v5082, %v5075
    %v5741 = vpack.c.b16 %v5083, %v5076
    %v5742 = vpack.c.b16 %v5084, %v5077
    %v5743 = vpack.c.b16 %v5085, %v5078
    %v5744 = vpack.c.b16 %v5093, %v5086
    %v5745 = vpack.c.b16 %v5094, %v5087
    %v5746 = vpack.c.b16 %v5095, %v5088
    %v5747 = vpack.c.b16 %v5096, %v5089
    %v5748 = vpack.c.b16 %v5097, %v5090
    %v5749 = vpack.c.b16 %v5098, %v5091
    %v5750 = vpack.c.b16 %v5099, %v5092
    %v5751 = vpack.c.b16 %v5107, %v5100
    %v5752 = vpack.c.b16 %v5108, %v5101
    %v5753 = vpack.c.b16 %v5109, %v5102
    %v5754 = vpack.c.b16 %v5110, %v5103
    %v5755 = vpack.c.b16 %v5111, %v5104
    %v5756 = vpack.c.b16 %v5112, %v5105
    %v5757 = vpack.c.b16 %v5113, %v5106
    %v5758 = vpack.c.b16 %v5121, %v5114
    %v5759 = vpack.c.b16 %v5122, %v5115
    %v5760 = vpack.c.b16 %v5123, %v5116
    %v5761 = vpack.c.b16 %v5124, %v5117
    %v5762 = vpack.c.b16 %v5125, %v5118
    %v5763 = vpack.c.b16 %v5126, %v5119
    %v5764 = vpack.c.b16 %v5127, %v5120
    %v5765 = vpack.c.b16 %v5135, %v5128
    %v5766 = vpack.c.b16 %v5136, %v5129
    %v5767 = vpack.c.b16 %v5137, %v5130
    %v5768 = vpack.c.b16 %v5138, %v5131
    %v5769 = vpack.c.b16 %v5139, %v5132
    %v5770 = vpack.c.b16 %v5140, %v5133
    %v5771 = vpack.c.b16 %v5141, %v5134
    %v5772 = vpack.c.b16 %v5149, %v5142
    %v5773 = vpack.c.b16 %v5150, %v5143
    %v5774 = vpack.c.b16 %v5151, %v5144
    %v5775 = vpack.c.b16 %v5152, %v5145
    %v5776 = vpack.c.b16 %v5153, %v5146
    %v5777 = vpack.c.b16 %v5154, %v5147
    %v5778 = vpack.c.b16 %v5155, %v5148
    %v5779 = vpack.c.b16 %v5163, %v5156
    %v5780 = vpack.c.b16 %v5164, %v5157
    %v5781 = vpack.c.b16 %v5165, %v5158
    %v5782 = vpack.c.b16 %v5166, %v5159
    %v5783 = vpack.c.b16 %v5167, %v5160
    %v5784 = vpack.c.b16 %v5168, %v5161
    %v5785 = vpack.c.b16 %v5169, %v5162
    %v5786 = vpack.c.b16 %v5177, %v5170
    %v5787 = vpack.c.b16 %v5178, %v5171
    %v5788 = vpack.c.b16 %v5179, %v5172
    %v5789 = vpack.c.b16 %v5180, %v5173
    %v5790 = vpack.c.b16 %v5181, %v5174
    %v5791 = vpack.c.b16 %v5182, %v5175
    %v5792 = vpack.c.b16 %v5183, %v5176
    %v5793 = vpack.c.b16 %v5191, %v5184
    %v5794 = vpack.c.b16 %v5192, %v5185
    %v5795 = vpack.c.b16 %v5193, %v5186
    %v5796 = vpack.c.b16 %v5194, %v5187
    %v5797 = vpack.c.b16 %v5195, %v5188
    %v5798 = vpack.c.b16 %v5196, %v5189
    %v5799 = vpack.c.b16 %v5197, %v5190
    %v5800 = vpack.c.b16 %v5205, %v5198
    %v5801 = vpack.c.b16 %v5206, %v5199
    %v5802 = vpack.c.b16 %v5207, %v5200
    %v5803 = vpack.c.b16 %v5208, %v5201
    %v5804 = vpack.c.b16 %v5209, %v5202
    %v5805 = vpack.c.b16 %v5210, %v5203
    %v5806 = vpack.c.b16 %v5211, %v5204
    %v5807 = vpack.c.b16 %v5219, %v5212
    %v5808 = vpack.c.b16 %v5220, %v5213
    %v5809 = vpack.c.b16 %v5221, %v5214
    %v5810 = vpack.c.b16 %v5222, %v5215
    %v5811 = vpack.c.b16 %v5223, %v5216
    %v5812 = vpack.c.b16 %v5224, %v5217
    %v5813 = vpack.c.b16 %v5225, %v5218
    %v5814 = vpack.c.b16 %v5233, %v5226
    %v5815 = vpack.c.b16 %v5234, %v5227
    %v5816 = vpack.c.b16 %v5235, %v5228
    %v5817 = vpack.c.b16 %v5236, %v5229
    %v5818 = vpack.c.b16 %v5237, %v5230
    %v5819 = vpack.c.b16 %v5238, %v5231
    %v5820 = vpack.c.b16 %v5239, %v5232
    %v5821 = vpack.c.b16 %v5247, %v5240
    %v5822 = vpack.c.b16 %v5248, %v5241
    %v5823 = vpack.c.b16 %v5249, %v5242
    %v5824 = vpack.c.b16 %v5250, %v5243
    %v5825 = vpack.c.b16 %v5251, %v5244
    %v5826 = vpack.c.b16 %v5252, %v5245
    %v5827 = vpack.c.b16 %v5253, %v5246
    %v5828 = vpack.c.b16 %v5261, %v5254
    %v5829 = vpack.c.b16 %v5262, %v5255
    %v5830 = vpack.c.b16 %v5263, %v5256
    %v5831 = vpack.c.b16 %v5264, %v5257
    %v5832 = vpack.c.b16 %v5265, %v5258
    %v5833 = vpack.c.b16 %v5266, %v5259
    %v5834 = vpack.c.b16 %v5267, %v5260
    %v5835 = vpack.c.b16 %v5275, %v5268
    %v5836 = vpack.c.b16 %v5276, %v5269
    %v5837 = vpack.c.b16 %v5277, %v5270
    %v5838 = vpack.c.b16 %v5278, %v5271
    %v5839 = vpack.c.b16 %v5279, %v5272
    %v5840 = vpack.c.b16 %v5280, %v5273
    %v5841 = vpack.c.b16 %v5281, %v5274
    %v5842 = vpack.c.b16 %v5289, %v5282
    %v5843 = vpack.c.b16 %v5290, %v5283
    %v5844 = vpack.c.b16 %v5291, %v5284
    %v5845 = vpack.c.b16 %v5292, %v5285
    %v5846 = vpack.c.b16 %v5293, %v5286
    %v5847 = vpack.c.b16 %v5294, %v5287
    %v5848 = vpack.c.b16 %v5295, %v5288
    %v5849 = vpack.c.b16 %v5303, %v5296
    %v5850 = vpack.c.b16 %v5304, %v5297
    %v5851 = vpack.c.b16 %v5305, %v5298
    %v5852 = vpack.c.b16 %v5306, %v5299
    %v5853 = vpack.c.b16 %v5307, %v5300
    %v5854 = vpack.c.b16 %v5308, %v5301
    %v5855 = vpack.c.b16 %v5309, %v5302
    %v5856 = vpack.c.b16 %v5317, %v5310
    %v5857 = vpack.c.b16 %v5318, %v5311
    %v5858 = vpack.c.b16 %v5319, %v5312
    %v5859 = vpack.c.b16 %v5320, %v5313
    %v5860 = vpack.c.b16 %v5321, %v5314
    %v5861 = vpack.c.b16 %v5322, %v5315
    %v5862 = vpack.c.b16 %v5323, %v5316
    %v5863 = vpack.c.b16 %v5331, %v5324
    %v5864 = vpack.c.b16 %v5332, %v5325
    %v5865 = vpack.c.b16 %v5333, %v5326
    %v5866 = vpack.c.b16 %v5334, %v5327
    %v5867 = vpack.c.b16 %v5335, %v5328
    %v5868 = vpack.c.b16 %v5336, %v5329
    %v5869 = vpack.c.b16 %v5337, %v5330
    %v5870 = vpack.c.b16 %v5345, %v5338
    %v5871 = vpack.c.b16 %v5346, %v5339
    %v5872 = vpack.c.b16 %v5347, %v5340
    %v5873 = vpack.c.b16 %v5348, %v5341
    %v5874 = vpack.c.b16 %v5349, %v5342
    %v5875 = vpack.c.b16 %v5350, %v5343
    %v5876 = vpack.c.b16 %v5351, %v5344
    %v5877 = vpack.c.b16 %v5359, %v5352
    %v5878 = vpack.c.b16 %v5360, %v5353
    %v5879 = vpack.c.b16 %v5361, %v5354
    %v5880 = vpack.c.b16 %v5362, %v5355
    %v5881 = vpack.c.b16 %v5363, %v5356
    %v5882 = vpack.c.b16 %v5364, %v5357
    %v5883 = vpack.c.b16 %v5365, %v5358
    %v5884 = vpack.c.b16 %v5373, %v5366
    %v5885 = vpack.c.b16 %v5374, %v5367
    %v5886 = vpack.c.b16 %v5375, %v5368
    %v5887 = vpack.c.b16 %v5376, %v5369
    %v5888 = vpack.c.b16 %v5377, %v5370
    %v5889 = vpack.c.b16 %v5378, %v5371
    %v5890 = vpack.c.b16 %v5379, %v5372
    %v5891 = vpack.c.b16 %v5387, %v5380
    %v5892 = vpack.c.b16 %v5388, %v5381
    %v5893 = vpack.c.b16 %v5389, %v5382
    %v5894 = vpack.c.b16 %v5390, %v5383
    %v5895 = vpack.c.b16 %v5391, %v5384
    %v5896 = vpack.c.b16 %v5392, %v5385
    %v5897 = vpack.c.b16 %v5393, %v5386
    %v5898 = vpack.c.b16 %v5401, %v5394
    %v5899 = vpack.c.b16 %v5402, %v5395
    %v5900 = vpack.c.b16 %v5403, %v5396
    %v5901 = vpack.c.b16 %v5404, %v5397
    %v5902 = vpack.c.b16 %v5405, %v5398
    %v5903 = vpack.c.b16 %v5406, %v5399
    %v5904 = vpack.c.b16 %v5407, %v5400
    %v5905 = vpack.c.b16 %v5415, %v5408
    %v5906 = vpack.c.b16 %v5416, %v5409
    %v5907 = vpack.c.b16 %v5417, %v5410
    %v5908 = vpack.c.b16 %v5418, %v5411
    %v5909 = vpack.c.b16 %v5419, %v5412
    %v5910 = vpack.c.b16 %v5420, %v5413
    %v5911 = vpack.c.b16 %v5421, %v5414
    %v5912 = vpack.c.b16 %v5429, %v5422
    %v5913 = vpack.c.b16 %v5430, %v5423
    %v5914 = vpack.c.b16 %v5431, %v5424
    %v5915 = vpack.c.b16 %v5432, %v5425
    %v5916 = vpack.c.b16 %v5433, %v5426
    %v5917 = vpack.c.b16 %v5434, %v5427
    %v5918 = vpack.c.b16 %v5435, %v5428
    %v5919 = vpack.c.b16 %v5443, %v5436
    %v5920 = vpack.c.b16 %v5444, %v5437
    %v5921 = vpack.c.b16 %v5445, %v5438
    %v5922 = vpack.c.b16 %v5446, %v5439
    %v5923 = vpack.c.b16 %v5447, %v5440
    %v5924 = vpack.c.b16 %v5448, %v5441
    %v5925 = vpack.c.b16 %v5449, %v5442
    %v5926 = vpack.c.b16 %v5457, %v5450
    %v5927 = vpack.c.b16 %v5458, %v5451
    %v5928 = vpack.c.b16 %v5459, %v5452
    %v5929 = vpack.c.b16 %v5460, %v5453
    %v5930 = vpack.c.b16 %v5461, %v5454
    %v5931 = vpack.c.b16 %v5462, %v5455
    %v5932 = vpack.c.b16 %v5463, %v5456
    %v5933 = vpack.c.b16 %v5471, %v5464
    %v5934 = vpack.c.b16 %v5472, %v5465
    %v5935 = vpack.c.b16 %v5473, %v5466
    %v5936 = vpack.c.b16 %v5474, %v5467
    %v5937 = vpack.c.b16 %v5475, %v5468
    %v5938 = vpack.c.b16 %v5476, %v5469
    %v5939 = vpack.c.b16 %v5477, %v5470
    %v5940 = vpack.c.b16 %v5485, %v5478
    %v5941 = vpack.c.b16 %v5486, %v5479
    %v5942 = vpack.c.b16 %v5487, %v5480
    %v5943 = vpack.c.b16 %v5488, %v5481
    %v5944 = vpack.c.b16 %v5489, %v5482
    %v5945 = vpack.c.b16 %v5490, %v5483
    %v5946 = vpack.c.b16 %v5491, %v5484
    %v5947 = vpack.c.b16 %v5499, %v5492
    %v5948 = vpack.c.b16 %v5500, %v5493
    %v5949 = vpack.c.b16 %v5501, %v5494
    %v5950 = vpack.c.b16 %v5502, %v5495
    %v5951 = vpack.c.b16 %v5503, %v5496
    %v5952 = vpack.c.b16 %v5504, %v5497
    %v5953 = vpack.c.b16 %v5505, %v5498
    %6402 = vmatprep.subr.bf16.mxu0 %v5507
    %6403 = vmatpush1.bf16.msra.mxu0 %v5506
    %6404 = vmatprep.subr.bf16.mxu0 %v5514
    %6405 = vmatpush1.bf16.msra.mxu0 %v5513
    %6406 = vmatprep.subr.bf16.mxu0 %v5521
    %6407 = vmatpush1.bf16.msra.mxu0 %v5520
    %6408 = vmatprep.subr.bf16.mxu0 %v5528
    %6409 = vmatpush1.bf16.msra.mxu0 %v5527
    %6410 = vmatprep.subr.bf16.mxu0 %v5535
    %6411 = vmatpush1.bf16.msra.mxu0 %v5534
    %6412 = vmatprep.subr.bf16.mxu0 %v5542
    %6413 = vmatpush1.bf16.msra.mxu0 %v5541
    %6414 = vmatprep.subr.bf16.mxu0 %v5549
    %6415 = vmatpush1.bf16.msra.mxu0 %v5548
    %6416 = vmatprep.subr.bf16.mxu0 %v5556
    %6417 = vmatpush1.bf16.msra.mxu0 %v5555
    %6418 = vmatprep.subr.bf16.mxu0 %v5563
    %6419 = vmatpush1.bf16.msra.mxu0 %v5562
    %6420 = vmatprep.subr.bf16.mxu0 %v5570
    %6421 = vmatpush1.bf16.msra.mxu0 %v5569
    %6422 = vmatprep.subr.bf16.mxu0 %v5577
    %6423 = vmatpush1.bf16.msra.mxu0 %v5576
    %6424 = vmatprep.subr.bf16.mxu0 %v5584
    %6425 = vmatpush1.bf16.msra.mxu0 %v5583
    %6426 = vmatprep.subr.bf16.mxu0 %v5591
    %6427 = vmatpush1.bf16.msra.mxu0 %v5590
    %6428 = vmatprep.subr.bf16.mxu0 %v5598
    %6429 = vmatpush1.bf16.msra.mxu0 %v5597
    %6430 = vmatprep.subr.bf16.mxu0 %v5605
    %6431 = vmatpush1.bf16.msra.mxu0 %v5604
    %6432 = vmatprep.subr.bf16.mxu0 %v5612
    %6433 = vmatpush1.bf16.msra.mxu0 %v5611
    %6434 = vmatprep.mubr.bf16.mxu0 %v3542
    %6435 = vmatmul.mubr.bf16.gmra.mrb[0].mxu0 %v3541
    %v6436 = vpop.f32.mrb[0].mxu0
    %v6437 = vadd.f32 %v4066, %v6436
    %v6438 = vpop.f32.mrb[0].mxu0
    %v6439 = vadd.f32 %v4070, %v6438
    %v6440 = vpop.f32.mrb[0].mxu0
    %v6441 = vpop.f32.mrb[0].mxu0
    %6442 = vdwg.mxu0
    %6443 = vmatprep.subr.bf16.mxu0 %v5619
    %6444 = vmatpush1.bf16.msra.mxu0 %v5618
    %6445 = vmatprep.subr.bf16.mxu0 %v5626
    %6446 = vmatpush1.bf16.msra.mxu0 %v5625
    %6447 = vmatprep.subr.bf16.mxu0 %v5633
    %6448 = vmatpush1.bf16.msra.mxu0 %v5632
    %6449 = vmatprep.subr.bf16.mxu0 %v5640
    %6450 = vmatpush1.bf16.msra.mxu0 %v5639
    %6451 = vmatprep.subr.bf16.mxu0 %v5647
    %6452 = vmatpush1.bf16.msra.mxu0 %v5646
    %6453 = vmatprep.subr.bf16.mxu0 %v5654
    %6454 = vmatpush1.bf16.msra.mxu0 %v5653
    %6455 = vmatprep.subr.bf16.mxu0 %v5661
    %6456 = vmatpush1.bf16.msra.mxu0 %v5660
    %6457 = vmatprep.subr.bf16.mxu0 %v5668
    %6458 = vmatpush1.bf16.msra.mxu0 %v5667
    %6459 = vmatprep.subr.bf16.mxu0 %v5675
    %6460 = vmatpush1.bf16.msra.mxu0 %v5674
    %6461 = vmatprep.subr.bf16.mxu0 %v5682
    %6462 = vmatpush1.bf16.msra.mxu0 %v5681
    %6463 = vmatprep.subr.bf16.mxu0 %v5689
    %6464 = vmatpush1.bf16.msra.mxu0 %v5688
    %6465 = vmatprep.subr.bf16.mxu0 %v5696
    %6466 = vmatpush1.bf16.msra.mxu0 %v5695
    %6467 = vmatprep.subr.bf16.mxu0 %v5703
    %6468 = vmatpush1.bf16.msra.mxu0 %v5702
    %6469 = vmatprep.subr.bf16.mxu0 %v5710
    %6470 = vmatpush1.bf16.msra.mxu0 %v5709
    %6471 = vmatprep.subr.bf16.mxu0 %v5717
    %6472 = vmatpush1.bf16.msra.mxu0 %v5716
    %6473 = vmatprep.subr.bf16.mxu0 %v5724
    %6474 = vmatpush1.bf16.msra.mxu0 %v5723
    %6475 = vmatprep.mubr.bf16.mxu0 %v3544
    %6476 = vmatmul.mubr.bf16.gmra.mrb[0].mxu0 %v3543
    %v6477 = vpop.f32.mrb[0].mxu0
    %v6478 = vadd.f32 %v6437, %v6477
    %v6479 = vpop.f32.mrb[0].mxu0
    %v6480 = vadd.f32 %v6439, %v6479
    %v6481 = vpop.f32.mrb[0].mxu0
    %v6482 = vpop.f32.mrb[0].mxu0
    %6483 = vdwg.mxu0
    %6484 = vmatprep.subr.bf16.mxu0 %v5731
    %6485 = vmatpush1.bf16.msra.mxu0 %v5730
    %6486 = vmatprep.subr.bf16.mxu0 %v5738
    %6487 = vmatpush1.bf16.msra.mxu0 %v5737
    %6488 = vmatprep.subr.bf16.mxu0 %v5745
    %6489 = vmatpush1.bf16.msra.mxu0 %v5744
    %6490 = vmatprep.subr.bf16.mxu0 %v5752
    %6491 = vmatpush1.bf16.msra.mxu0 %v5751
    %6492 = vmatprep.subr.bf16.mxu0 %v5759
    %6493 = vmatpush1.bf16.msra.mxu0 %v5758
    %6494 = vmatprep.subr.bf16.mxu0 %v5766
    %6495 = vmatpush1.bf16.msra.mxu0 %v5765
    %6496 = vmatprep.subr.bf16.mxu0 %v5773
    %6497 = vmatpush1.bf16.msra.mxu0 %v5772
    %6498 = vmatprep.subr.bf16.mxu0 %v5780
    %6499 = vmatpush1.bf16.msra.mxu0 %v5779
    %6500 = vmatprep.subr.bf16.mxu0 %v5787
    %6501 = vmatpush1.bf16.msra.mxu0 %v5786
    %6502 = vmatprep.subr.bf16.mxu0 %v5794
    %6503 = vmatpush1.bf16.msra.mxu0 %v5793
    %6504 = vmatprep.subr.bf16.mxu0 %v5801
    %6505 = vmatpush1.bf16.msra.mxu0 %v5800
    %6506 = vmatprep.subr.bf16.mxu0 %v5808
    %6507 = vmatpush1.bf16.msra.mxu0 %v5807
    %6508 = vmatprep.subr.bf16.mxu0 %v5815
    %6509 = vmatpush1.bf16.msra.mxu0 %v5814
    %6510 = vmatprep.subr.bf16.mxu0 %v5822
    %6511 = vmatpush1.bf16.msra.mxu0 %v5821
    %6512 = vmatprep.subr.bf16.mxu0 %v5829
    %6513 = vmatpush1.bf16.msra.mxu0 %v5828
    %6514 = vmatprep.subr.bf16.mxu0 %v5836
    %6515 = vmatpush1.bf16.msra.mxu0 %v5835
    %6516 = vmatprep.mubr.bf16.mxu0 %v3546
    %6517 = vmatmul.mubr.bf16.gmra.mrb[0].mxu0 %v3545
    %v6518 = vpop.f32.mrb[0].mxu0
    %v6519 = vadd.f32 %v6478, %v6518
    %v6520 = vpop.f32.mrb[0].mxu0
    %v6521 = vadd.f32 %v6480, %v6520
    %v6522 = vpop.f32.mrb[0].mxu0
    %v6523 = vpop.f32.mrb[0].mxu0
    %6524 = vdwg.mxu0
    %6525 = vmatprep.subr.bf16.mxu0 %v5843
    %6526 = vmatpush1.bf16.msra.mxu0 %v5842
    %6527 = vmatprep.subr.bf16.mxu0 %v5850
    %6528 = vmatpush1.bf16.msra.mxu0 %v5849
    %6529 = vmatprep.subr.bf16.mxu0 %v5857
    %6530 = vmatpush1.bf16.msra.mxu0 %v5856
    %6531 = vmatprep.subr.bf16.mxu0 %v5864
    %6532 = vmatpush1.bf16.msra.mxu0 %v5863
    %6533 = vmatprep.subr.bf16.mxu0 %v5871
    %6534 = vmatpush1.bf16.msra.mxu0 %v5870
    %6535 = vmatprep.subr.bf16.mxu0 %v5878
    %6536 = vmatpush1.bf16.msra.mxu0 %v5877
    %6537 = vmatprep.subr.bf16.mxu0 %v5885
    %6538 = vmatpush1.bf16.msra.mxu0 %v5884
    %6539 = vmatprep.subr.bf16.mxu0 %v5892
    %6540 = vmatpush1.bf16.msra.mxu0 %v5891
    %6541 = vmatprep.subr.bf16.mxu0 %v5899
    %6542 = vmatpush1.bf16.msra.mxu0 %v5898
    %6543 = vmatprep.subr.bf16.mxu0 %v5906
    %6544 = vmatpush1.bf16.msra.mxu0 %v5905
    %6545 = vmatprep.subr.bf16.mxu0 %v5913
    %6546 = vmatpush1.bf16.msra.mxu0 %v5912
    %6547 = vmatprep.subr.bf16.mxu0 %v5920
    %6548 = vmatpush1.bf16.msra.mxu0 %v5919
    %6549 = vmatprep.subr.bf16.mxu0 %v5927
    %6550 = vmatpush1.bf16.msra.mxu0 %v5926
    %6551 = vmatprep.subr.bf16.mxu0 %v5934
    %6552 = vmatpush1.bf16.msra.mxu0 %v5933
    %6553 = vmatprep.subr.bf16.mxu0 %v5941
    %6554 = vmatpush1.bf16.msra.mxu0 %v5940
    %6555 = vmatprep.subr.bf16.mxu0 %v5948
    %6556 = vmatpush1.bf16.msra.mxu0 %v5947
    %6557 = vmatprep.mubr.bf16.mxu0 %v3548
    %6558 = vmatmul.mubr.bf16.gmra.mrb[0].mxu0 %v3547
    %v6559 = vpop.f32.mrb[0].mxu0
    %v6560 = vadd.f32 %v6519, %v6559
    %v6561 = vpop.f32.mrb[0].mxu0
    %v6562 = vadd.f32 %v6521, %v6561
    %v6563 = vpop.f32.mrb[0].mxu0
    %v6564 = vpop.f32.mrb[0].mxu0
    %6565 = vdwg.mxu0
    %6566 = vmatprep.subr.bf16.mxu0 %v5509
    %6567 = vmatpush1.bf16.msra.mxu0 %v5508
    %6568 = vmatprep.subr.bf16.mxu0 %v5516
    %6569 = vmatpush1.bf16.msra.mxu0 %v5515
    %6570 = vmatprep.subr.bf16.mxu0 %v5523
    %6571 = vmatpush1.bf16.msra.mxu0 %v5522
    %6572 = vmatprep.subr.bf16.mxu0 %v5530
    %6573 = vmatpush1.bf16.msra.mxu0 %v5529
    %6574 = vmatprep.subr.bf16.mxu0 %v5537
    %6575 = vmatpush1.bf16.msra.mxu0 %v5536
    %6576 = vmatprep.subr.bf16.mxu0 %v5544
    %6577 = vmatpush1.bf16.msra.mxu0 %v5543
    %6578 = vmatprep.subr.bf16.mxu0 %v5551
    %6579 = vmatpush1.bf16.msra.mxu0 %v5550
    %6580 = vmatprep.subr.bf16.mxu0 %v5558
    %6581 = vmatpush1.bf16.msra.mxu0 %v5557
    %6582 = vmatprep.subr.bf16.mxu0 %v5565
    %6583 = vmatpush1.bf16.msra.mxu0 %v5564
    %6584 = vmatprep.subr.bf16.mxu0 %v5572
    %6585 = vmatpush1.bf16.msra.mxu0 %v5571
    %6586 = vmatprep.subr.bf16.mxu0 %v5579
    %6587 = vmatpush1.bf16.msra.mxu0 %v5578
    %6588 = vmatprep.subr.bf16.mxu0 %v5586
    %6589 = vmatpush1.bf16.msra.mxu0 %v5585
    %6590 = vmatprep.subr.bf16.mxu0 %v5593
    %6591 = vmatpush1.bf16.msra.mxu0 %v5592
    %6592 = vmatprep.subr.bf16.mxu0 %v5600
    %6593 = vmatpush1.bf16.msra.mxu0 %v5599
    %6594 = vmatprep.subr.bf16.mxu0 %v5607
    %6595 = vmatpush1.bf16.msra.mxu0 %v5606
    %6596 = vmatprep.subr.bf16.mxu0 %v5614
    %6597 = vmatpush1.bf16.msra.mxu0 %v5613
    %6598 = vmatprep.mubr.bf16.mxu0 %v3542
    %6599 = vmatmul.mubr.bf16.gmra.mrb[0].mxu0 %v3541
    %v6600 = vpop.f32.mrb[0].mxu0
    %v6601 = vadd.f32 %v4074, %v6600
    %v6602 = vpop.f32.mrb[0].mxu0
    %v6603 = vadd.f32 %v4078, %v6602
    %v6604 = vpop.f32.mrb[0].mxu0
    %v6605 = vpop.f32.mrb[0].mxu0
    %6606 = vdwg.mxu0
    %6607 = vmatprep.subr.bf16.mxu0 %v5621
    %6608 = vmatpush1.bf16.msra.mxu0 %v5620
    %6609 = vmatprep.subr.bf16.mxu0 %v5628
    %6610 = vmatpush1.bf16.msra.mxu0 %v5627
    %6611 = vmatprep.subr.bf16.mxu0 %v5635
    %6612 = vmatpush1.bf16.msra.mxu0 %v5634
    %6613 = vmatprep.subr.bf16.mxu0 %v5642
    %6614 = vmatpush1.bf16.msra.mxu0 %v5641
    %6615 = vmatprep.subr.bf16.mxu0 %v5649
    %6616 = vmatpush1.bf16.msra.mxu0 %v5648
    %6617 = vmatprep.subr.bf16.mxu0 %v5656
    %6618 = vmatpush1.bf16.msra.mxu0 %v5655
    %6619 = vmatprep.subr.bf16.mxu0 %v5663
    %6620 = vmatpush1.bf16.msra.mxu0 %v5662
    %6621 = vmatprep.subr.bf16.mxu0 %v5670
    %6622 = vmatpush1.bf16.msra.mxu0 %v5669
    %6623 = vmatprep.subr.bf16.mxu0 %v5677
    %6624 = vmatpush1.bf16.msra.mxu0 %v5676
    %6625 = vmatprep.subr.bf16.mxu0 %v5684
    %6626 = vmatpush1.bf16.msra.mxu0 %v5683
    %6627 = vmatprep.subr.bf16.mxu0 %v5691
    %6628 = vmatpush1.bf16.msra.mxu0 %v5690
    %6629 = vmatprep.subr.bf16.mxu0 %v5698
    %6630 = vmatpush1.bf16.msra.mxu0 %v5697
    %6631 = vmatprep.subr.bf16.mxu0 %v5705
    %6632 = vmatpush1.bf16.msra.mxu0 %v5704
    %6633 = vmatprep.subr.bf16.mxu0 %v5712
    %6634 = vmatpush1.bf16.msra.mxu0 %v5711
    %6635 = vmatprep.subr.bf16.mxu0 %v5719
    %6636 = vmatpush1.bf16.msra.mxu0 %v5718
    %6637 = vmatprep.subr.bf16.mxu0 %v5726
    %6638 = vmatpush1.bf16.msra.mxu0 %v5725
    %6639 = vmatprep.mubr.bf16.mxu0 %v3544
    %6640 = vmatmul.mubr.bf16.gmra.mrb[0].mxu0 %v3543
    %v6641 = vpop.f32.mrb[0].mxu0
    %v6642 = vadd.f32 %v6601, %v6641
    %v6643 = vpop.f32.mrb[0].mxu0
    %v6644 = vadd.f32 %v6603, %v6643
    %v6645 = vpop.f32.mrb[0].mxu0
    %v6646 = vpop.f32.mrb[0].mxu0
    %6647 = vdwg.mxu0
    %6648 = vmatprep.subr.bf16.mxu0 %v5733
    %6649 = vmatpush1.bf16.msra.mxu0 %v5732
    %6650 = vmatprep.subr.bf16.mxu0 %v5740
    %6651 = vmatpush1.bf16.msra.mxu0 %v5739
    %6652 = vmatprep.subr.bf16.mxu0 %v5747
    %6653 = vmatpush1.bf16.msra.mxu0 %v5746
    %6654 = vmatprep.subr.bf16.mxu0 %v5754
    %6655 = vmatpush1.bf16.msra.mxu0 %v5753
    %6656 = vmatprep.subr.bf16.mxu0 %v5761
    %6657 = vmatpush1.bf16.msra.mxu0 %v5760
    %6658 = vmatprep.subr.bf16.mxu0 %v5768
    %6659 = vmatpush1.bf16.msra.mxu0 %v5767
    %6660 = vmatprep.subr.bf16.mxu0 %v5775
    %6661 = vmatpush1.bf16.msra.mxu0 %v5774
    %6662 = vmatprep.subr.bf16.mxu0 %v5782
    %6663 = vmatpush1.bf16.msra.mxu0 %v5781
    %6664 = vmatprep.subr.bf16.mxu0 %v5789
    %6665 = vmatpush1.bf16.msra.mxu0 %v5788
    %6666 = vmatprep.subr.bf16.mxu0 %v5796
    %6667 = vmatpush1.bf16.msra.mxu0 %v5795
    %6668 = vmatprep.subr.bf16.mxu0 %v5803
    %6669 = vmatpush1.bf16.msra.mxu0 %v5802
    %6670 = vmatprep.subr.bf16.mxu0 %v5810
    %6671 = vmatpush1.bf16.msra.mxu0 %v5809
    %6672 = vmatprep.subr.bf16.mxu0 %v5817
    %6673 = vmatpush1.bf16.msra.mxu0 %v5816
    %6674 = vmatprep.subr.bf16.mxu0 %v5824
    %6675 = vmatpush1.bf16.msra.mxu0 %v5823
    %6676 = vmatprep.subr.bf16.mxu0 %v5831
    %6677 = vmatpush1.bf16.msra.mxu0 %v5830
    %6678 = vmatprep.subr.bf16.mxu0 %v5838
    %6679 = vmatpush1.bf16.msra.mxu0 %v5837
    %6680 = vmatprep.mubr.bf16.mxu0 %v3546
    %6681 = vmatmul.mubr.bf16.gmra.mrb[0].mxu0 %v3545
    %v6682 = vpop.f32.mrb[0].mxu0
    %v6683 = vadd.f32 %v6642, %v6682
    %v6684 = vpop.f32.mrb[0].mxu0
    %v6685 = vadd.f32 %v6644, %v6684
    %v6686 = vpop.f32.mrb[0].mxu0
    %v6687 = vpop.f32.mrb[0].mxu0
    %6688 = vdwg.mxu0
    %6689 = vmatprep.subr.bf16.mxu0 %v5845
    %6690 = vmatpush1.bf16.msra.mxu0 %v5844
    %6691 = vmatprep.subr.bf16.mxu0 %v5852
    %6692 = vmatpush1.bf16.msra.mxu0 %v5851
    %6693 = vmatprep.subr.bf16.mxu0 %v5859
    %6694 = vmatpush1.bf16.msra.mxu0 %v5858
    %6695 = vmatprep.subr.bf16.mxu0 %v5866
    %6696 = vmatpush1.bf16.msra.mxu0 %v5865
    %6697 = vmatprep.subr.bf16.mxu0 %v5873
    %6698 = vmatpush1.bf16.msra.mxu0 %v5872
    %6699 = vmatprep.subr.bf16.mxu0 %v5880
    %6700 = vmatpush1.bf16.msra.mxu0 %v5879
    %6701 = vmatprep.subr.bf16.mxu0 %v5887
    %6702 = vmatpush1.bf16.msra.mxu0 %v5886
    %6703 = vmatprep.subr.bf16.mxu0 %v5894
    %6704 = vmatpush1.bf16.msra.mxu0 %v5893
    %6705 = vmatprep.subr.bf16.mxu0 %v5901
    %6706 = vmatpush1.bf16.msra.mxu0 %v5900
    %6707 = vmatprep.subr.bf16.mxu0 %v5908
    %6708 = vmatpush1.bf16.msra.mxu0 %v5907
    %6709 = vmatprep.subr.bf16.mxu0 %v5915
    %6710 = vmatpush1.bf16.msra.mxu0 %v5914
    %6711 = vmatprep.subr.bf16.mxu0 %v5922
    %6712 = vmatpush1.bf16.msra.mxu0 %v5921
    %6713 = vmatprep.subr.bf16.mxu0 %v5929
    %6714 = vmatpush1.bf16.msra.mxu0 %v5928
    %6715 = vmatprep.subr.bf16.mxu0 %v5936
    %6716 = vmatpush1.bf16.msra.mxu0 %v5935
    %6717 = vmatprep.subr.bf16.mxu0 %v5943
    %6718 = vmatpush1.bf16.msra.mxu0 %v5942
    %6719 = vmatprep.subr.bf16.mxu0 %v5950
    %6720 = vmatpush1.bf16.msra.mxu0 %v5949
    %6721 = vmatprep.mubr.bf16.mxu0 %v3548
    %6722 = vmatmul.mubr.bf16.gmra.mrb[0].mxu0 %v3547
    %v6723 = vpop.f32.mrb[0].mxu0
    %v6724 = vadd.f32 %v6683, %v6723
    %v6725 = vpop.f32.mrb[0].mxu0
    %v6726 = vadd.f32 %v6685, %v6725
    %v6727 = vpop.f32.mrb[0].mxu0
    %v6728 = vpop.f32.mrb[0].mxu0
    %6729 = vdwg.mxu0
    %6730 = vmatprep.subr.bf16.mxu0 %v5511
    %6731 = vmatpush1.bf16.msra.mxu0 %v5510
    %6732 = vmatprep.subr.bf16.mxu0 %v5518
    %6733 = vmatpush1.bf16.msra.mxu0 %v5517
    %6734 = vmatprep.subr.bf16.mxu0 %v5525
    %6735 = vmatpush1.bf16.msra.mxu0 %v5524
    %6736 = vmatprep.subr.bf16.mxu0 %v5532
    %6737 = vmatpush1.bf16.msra.mxu0 %v5531
    %6738 = vmatprep.subr.bf16.mxu0 %v5539
    %6739 = vmatpush1.bf16.msra.mxu0 %v5538
    %6740 = vmatprep.subr.bf16.mxu0 %v5546
    %6741 = vmatpush1.bf16.msra.mxu0 %v5545
    %6742 = vmatprep.subr.bf16.mxu0 %v5553
    %6743 = vmatpush1.bf16.msra.mxu0 %v5552
    %6744 = vmatprep.subr.bf16.mxu0 %v5560
    %6745 = vmatpush1.bf16.msra.mxu0 %v5559
    %6746 = vmatprep.subr.bf16.mxu0 %v5567
    %6747 = vmatpush1.bf16.msra.mxu0 %v5566
    %6748 = vmatprep.subr.bf16.mxu0 %v5574
    %6749 = vmatpush1.bf16.msra.mxu0 %v5573
    %6750 = vmatprep.subr.bf16.mxu0 %v5581
    %6751 = vmatpush1.bf16.msra.mxu0 %v5580
    %6752 = vmatprep.subr.bf16.mxu0 %v5588
    %6753 = vmatpush1.bf16.msra.mxu0 %v5587
    %6754 = vmatprep.subr.bf16.mxu0 %v5595
    %6755 = vmatpush1.bf16.msra.mxu0 %v5594
    %6756 = vmatprep.subr.bf16.mxu0 %v5602
    %6757 = vmatpush1.bf16.msra.mxu0 %v5601
    %6758 = vmatprep.subr.bf16.mxu0 %v5609
    %6759 = vmatpush1.bf16.msra.mxu0 %v5608
    %6760 = vmatprep.subr.bf16.mxu0 %v5616
    %6761 = vmatpush1.bf16.msra.mxu0 %v5615
    %6762 = vmatprep.mubr.bf16.mxu0 %v3542
    %6763 = vmatmul.mubr.bf16.gmra.mrb[0].mxu0 %v3541
    %v6764 = vpop.f32.mrb[0].mxu0
    %v6765 = vadd.f32 %v4082, %v6764
    %v6766 = vpop.f32.mrb[0].mxu0
    %v6767 = vadd.f32 %v4086, %v6766
    %v6768 = vpop.f32.mrb[0].mxu0
    %v6769 = vpop.f32.mrb[0].mxu0
    %6770 = vdwg.mxu0
    %6771 = vmatprep.subr.bf16.mxu0 %v5623
    %6772 = vmatpush1.bf16.msra.mxu0 %v5622
    %6773 = vmatprep.subr.bf16.mxu0 %v5630
    %6774 = vmatpush1.bf16.msra.mxu0 %v5629
    %6775 = vmatprep.subr.bf16.mxu0 %v5637
    %6776 = vmatpush1.bf16.msra.mxu0 %v5636
    %6777 = vmatprep.subr.bf16.mxu0 %v5644
    %6778 = vmatpush1.bf16.msra.mxu0 %v5643
    %6779 = vmatprep.subr.bf16.mxu0 %v5651
    %6780 = vmatpush1.bf16.msra.mxu0 %v5650
    %6781 = vmatprep.subr.bf16.mxu0 %v5658
    %6782 = vmatpush1.bf16.msra.mxu0 %v5657
    %6783 = vmatprep.subr.bf16.mxu0 %v5665
    %6784 = vmatpush1.bf16.msra.mxu0 %v5664
    %6785 = vmatprep.subr.bf16.mxu0 %v5672
    %6786 = vmatpush1.bf16.msra.mxu0 %v5671
    %6787 = vmatprep.subr.bf16.mxu0 %v5679
    %6788 = vmatpush1.bf16.msra.mxu0 %v5678
    %6789 = vmatprep.subr.bf16.mxu0 %v5686
    %6790 = vmatpush1.bf16.msra.mxu0 %v5685
    %6791 = vmatprep.subr.bf16.mxu0 %v5693
    %6792 = vmatpush1.bf16.msra.mxu0 %v5692
    %6793 = vmatprep.subr.bf16.mxu0 %v5700
    %6794 = vmatpush1.bf16.msra.mxu0 %v5699
    %6795 = vmatprep.subr.bf16.mxu0 %v5707
    %6796 = vmatpush1.bf16.msra.mxu0 %v5706
    %6797 = vmatprep.subr.bf16.mxu0 %v5714
    %6798 = vmatpush1.bf16.msra.mxu0 %v5713
    %6799 = vmatprep.subr.bf16.mxu0 %v5721
    %6800 = vmatpush1.bf16.msra.mxu0 %v5720
    %6801 = vmatprep.subr.bf16.mxu0 %v5728
    %6802 = vmatpush1.bf16.msra.mxu0 %v5727
    %6803 = vmatprep.mubr.bf16.mxu0 %v3544
    %6804 = vmatmul.mubr.bf16.gmra.mrb[0].mxu0 %v3543
    %v6805 = vpop.f32.mrb[0].mxu0
    %v6806 = vadd.f32 %v6765, %v6805
    %v6807 = vpop.f32.mrb[0].mxu0
    %v6808 = vadd.f32 %v6767, %v6807
    %v6809 = vpop.f32.mrb[0].mxu0
    %v6810 = vpop.f32.mrb[0].mxu0
    %6811 = vdwg.mxu0
    %6812 = vmatprep.subr.bf16.mxu0 %v5735
    %6813 = vmatpush1.bf16.msra.mxu0 %v5734
    %6814 = vmatprep.subr.bf16.mxu0 %v5742
    %6815 = vmatpush1.bf16.msra.mxu0 %v5741
    %6816 = vmatprep.subr.bf16.mxu0 %v5749
    %6817 = vmatpush1.bf16.msra.mxu0 %v5748
    %6818 = vmatprep.subr.bf16.mxu0 %v5756
    %6819 = vmatpush1.bf16.msra.mxu0 %v5755
    %6820 = vmatprep.subr.bf16.mxu0 %v5763
    %6821 = vmatpush1.bf16.msra.mxu0 %v5762
    %6822 = vmatprep.subr.bf16.mxu0 %v5770
    %6823 = vmatpush1.bf16.msra.mxu0 %v5769
    %6824 = vmatprep.subr.bf16.mxu0 %v5777
    %6825 = vmatpush1.bf16.msra.mxu0 %v5776
    %6826 = vmatprep.subr.bf16.mxu0 %v5784
    %6827 = vmatpush1.bf16.msra.mxu0 %v5783
    %6828 = vmatprep.subr.bf16.mxu0 %v5791
    %6829 = vmatpush1.bf16.msra.mxu0 %v5790
    %6830 = vmatprep.subr.bf16.mxu0 %v5798
    %6831 = vmatpush1.bf16.msra.mxu0 %v5797
    %6832 = vmatprep.subr.bf16.mxu0 %v5805
    %6833 = vmatpush1.bf16.msra.mxu0 %v5804
    %6834 = vmatprep.subr.bf16.mxu0 %v5812
    %6835 = vmatpush1.bf16.msra.mxu0 %v5811
    %6836 = vmatprep.subr.bf16.mxu0 %v5819
    %6837 = vmatpush1.bf16.msra.mxu0 %v5818
    %6838 = vmatprep.subr.bf16.mxu0 %v5826
    %6839 = vmatpush1.bf16.msra.mxu0 %v5825
    %6840 = vmatprep.subr.bf16.mxu0 %v5833
    %6841 = vmatpush1.bf16.msra.mxu0 %v5832
    %6842 = vmatprep.subr.bf16.mxu0 %v5840
    %6843 = vmatpush1.bf16.msra.mxu0 %v5839
    %6844 = vmatprep.mubr.bf16.mxu0 %v3546
    %6845 = vmatmul.mubr.bf16.gmra.mrb[0].mxu0 %v3545
    %v6846 = vpop.f32.mrb[0].mxu0
    %v6847 = vadd.f32 %v6806, %v6846
    %v6848 = vpop.f32.mrb[0].mxu0
    %v6849 = vadd.f32 %v6808, %v6848
    %v6850 = vpop.f32.mrb[0].mxu0
    %v6851 = vpop.f32.mrb[0].mxu0
    %6852 = vdwg.mxu0
    %6853 = vmatprep.subr.bf16.mxu0 %v5847
    %6854 = vmatpush1.bf16.msra.mxu0 %v5846
    %6855 = vmatprep.subr.bf16.mxu0 %v5854
    %6856 = vmatpush1.bf16.msra.mxu0 %v5853
    %6857 = vmatprep.subr.bf16.mxu0 %v5861
    %6858 = vmatpush1.bf16.msra.mxu0 %v5860
    %6859 = vmatprep.subr.bf16.mxu0 %v5868
    %6860 = vmatpush1.bf16.msra.mxu0 %v5867
    %6861 = vmatprep.subr.bf16.mxu0 %v5875
    %6862 = vmatpush1.bf16.msra.mxu0 %v5874
    %6863 = vmatprep.subr.bf16.mxu0 %v5882
    %6864 = vmatpush1.bf16.msra.mxu0 %v5881
    %6865 = vmatprep.subr.bf16.mxu0 %v5889
    %6866 = vmatpush1.bf16.msra.mxu0 %v5888
    %6867 = vmatprep.subr.bf16.mxu0 %v5896
    %6868 = vmatpush1.bf16.msra.mxu0 %v5895
    %6869 = vmatprep.subr.bf16.mxu0 %v5903
    %6870 = vmatpush1.bf16.msra.mxu0 %v5902
    %6871 = vmatprep.subr.bf16.mxu0 %v5910
    %6872 = vmatpush1.bf16.msra.mxu0 %v5909
    %6873 = vmatprep.subr.bf16.mxu0 %v5917
    %6874 = vmatpush1.bf16.msra.mxu0 %v5916
    %6875 = vmatprep.subr.bf16.mxu0 %v5924
    %6876 = vmatpush1.bf16.msra.mxu0 %v5923
    %6877 = vmatprep.subr.bf16.mxu0 %v5931
    %6878 = vmatpush1.bf16.msra.mxu0 %v5930
    %6879 = vmatprep.subr.bf16.mxu0 %v5938
    %6880 = vmatpush1.bf16.msra.mxu0 %v5937
    %6881 = vmatprep.subr.bf16.mxu0 %v5945
    %6882 = vmatpush1.bf16.msra.mxu0 %v5944
    %6883 = vmatprep.subr.bf16.mxu0 %v5952
    %6884 = vmatpush1.bf16.msra.mxu0 %v5951
    %6885 = vmatprep.mubr.bf16.mxu0 %v3548
    %6886 = vmatmul.mubr.bf16.gmra.mrb[0].mxu0 %v3547
    %v6887 = vpop.f32.mrb[0].mxu0
    %v6888 = vadd.f32 %v6847, %v6887
    %v6889 = vpop.f32.mrb[0].mxu0
    %v6890 = vadd.f32 %v6849, %v6889
    %v6891 = vpop.f32.mrb[0].mxu0
    %v6892 = vpop.f32.mrb[0].mxu0
    %6893 = vdwg.mxu0
    %6894 = vmatprep.subr.bf16.mxu0 0
    %6895 = vmatpush1.bf16.msra.mxu0 %v5512
    %6896 = vmatprep.subr.bf16.mxu0 0
    %6897 = vmatpush1.bf16.msra.mxu0 %v5519
    %6898 = vmatprep.subr.bf16.mxu0 0
    %6899 = vmatpush1.bf16.msra.mxu0 %v5526
    %6900 = vmatprep.subr.bf16.mxu0 0
    %6901 = vmatpush1.bf16.msra.mxu0 %v5533
    %6902 = vmatprep.subr.bf16.mxu0 0
    %6903 = vmatpush1.bf16.msra.mxu0 %v5540
    %6904 = vmatprep.subr.bf16.mxu0 0
    %6905 = vmatpush1.bf16.msra.mxu0 %v5547
    %6906 = vmatprep.subr.bf16.mxu0 0
    %6907 = vmatpush1.bf16.msra.mxu0 %v5554
    %6908 = vmatprep.subr.bf16.mxu0 0
    %6909 = vmatpush1.bf16.msra.mxu0 %v5561
    %6910 = vmatprep.subr.bf16.mxu0 0
    %6911 = vmatpush1.bf16.msra.mxu0 %v5568
    %6912 = vmatprep.subr.bf16.mxu0 0
    %6913 = vmatpush1.bf16.msra.mxu0 %v5575
    %6914 = vmatprep.subr.bf16.mxu0 0
    %6915 = vmatpush1.bf16.msra.mxu0 %v5582
    %6916 = vmatprep.subr.bf16.mxu0 0
    %6917 = vmatpush1.bf16.msra.mxu0 %v5589
    %6918 = vmatprep.subr.bf16.mxu0 0
    %6919 = vmatpush1.bf16.msra.mxu0 %v5596
    %6920 = vmatprep.subr.bf16.mxu0 0
    %6921 = vmatpush1.bf16.msra.mxu0 %v5603
    %6922 = vmatprep.subr.bf16.mxu0 0
    %6923 = vmatpush1.bf16.msra.mxu0 %v5610
    %6924 = vmatprep.subr.bf16.mxu0 0
    %6925 = vmatpush1.bf16.msra.mxu0 %v5617
    %6926 = vmatprep.mubr.bf16.mxu0 %v3542
    %6927 = vmatmul.mubr.bf16.gmra.mrb[0].mxu0 %v3541
    %v6928 = vpop.f32.mrb[0].mxu0
    %v6929 = vadd.f32 %v4090, %v6928
    %v6930 = vpop.f32.mrb[0].mxu0
    %v6931 = vpop.f32.mrb[0].mxu0
    %v6932 = vpop.f32.mrb[0].mxu0
    %6933 = vdwg.mxu0
    %6934 = vmatprep.subr.bf16.mxu0 0
    %6935 = vmatpush1.bf16.msra.mxu0 %v5624
    %6936 = vmatprep.subr.bf16.mxu0 0
    %6937 = vmatpush1.bf16.msra.mxu0 %v5631
    %6938 = vmatprep.subr.bf16.mxu0 0
    %6939 = vmatpush1.bf16.msra.mxu0 %v5638
    %6940 = vmatprep.subr.bf16.mxu0 0
    %6941 = vmatpush1.bf16.msra.mxu0 %v5645
    %6942 = vmatprep.subr.bf16.mxu0 0
    %6943 = vmatpush1.bf16.msra.mxu0 %v5652
    %6944 = vmatprep.subr.bf16.mxu0 0
    %6945 = vmatpush1.bf16.msra.mxu0 %v5659
    %6946 = vmatprep.subr.bf16.mxu0 0
    %6947 = vmatpush1.bf16.msra.mxu0 %v5666
    %6948 = vmatprep.subr.bf16.mxu0 0
    %6949 = vmatpush1.bf16.msra.mxu0 %v5673
    %6950 = vmatprep.subr.bf16.mxu0 0
    %6951 = vmatpush1.bf16.msra.mxu0 %v5680
    %6952 = vmatprep.subr.bf16.mxu0 0
    %6953 = vmatpush1.bf16.msra.mxu0 %v5687
    %6954 = vmatprep.subr.bf16.mxu0 0
    %6955 = vmatpush1.bf16.msra.mxu0 %v5694
    %6956 = vmatprep.subr.bf16.mxu0 0
    %6957 = vmatpush1.bf16.msra.mxu0 %v5701
    %6958 = vmatprep.subr.bf16.mxu0 0
    %6959 = vmatpush1.bf16.msra.mxu0 %v5708
    %6960 = vmatprep.subr.bf16.mxu0 0
    %6961 = vmatpush1.bf16.msra.mxu0 %v5715
    %6962 = vmatprep.subr.bf16.mxu0 0
    %6963 = vmatpush1.bf16.msra.mxu0 %v5722
    %6964 = vmatprep.subr.bf16.mxu0 0
    %6965 = vmatpush1.bf16.msra.mxu0 %v5729
    %6966 = vmatprep.mubr.bf16.mxu0 %v3544
    %6967 = vmatmul.mubr.bf16.gmra.mrb[0].mxu0 %v3543
    %v6968 = vpop.f32.mrb[0].mxu0
    %v6969 = vadd.f32 %v6929, %v6968
    %v6970 = vpop.f32.mrb[0].mxu0
    %v6971 = vpop.f32.mrb[0].mxu0
    %v6972 = vpop.f32.mrb[0].mxu0
    %6973 = vdwg.mxu0
    %6974 = vmatprep.subr.bf16.mxu0 0
    %6975 = vmatpush1.bf16.msra.mxu0 %v5736
    %6976 = vmatprep.subr.bf16.mxu0 0
    %6977 = vmatpush1.bf16.msra.mxu0 %v5743
    %6978 = vmatprep.subr.bf16.mxu0 0
    %6979 = vmatpush1.bf16.msra.mxu0 %v5750
    %6980 = vmatprep.subr.bf16.mxu0 0
    %6981 = vmatpush1.bf16.msra.mxu0 %v5757
    %6982 = vmatprep.subr.bf16.mxu0 0
    %6983 = vmatpush1.bf16.msra.mxu0 %v5764
    %6984 = vmatprep.subr.bf16.mxu0 0
    %6985 = vmatpush1.bf16.msra.mxu0 %v5771
    %6986 = vmatprep.subr.bf16.mxu0 0
    %6987 = vmatpush1.bf16.msra.mxu0 %v5778
    %6988 = vmatprep.subr.bf16.mxu0 0
    %6989 = vmatpush1.bf16.msra.mxu0 %v5785
    %6990 = vmatprep.subr.bf16.mxu0 0
    %6991 = vmatpush1.bf16.msra.mxu0 %v5792
    %6992 = vmatprep.subr.bf16.mxu0 0
    %6993 = vmatpush1.bf16.msra.mxu0 %v5799
    %6994 = vmatprep.subr.bf16.mxu0 0
    %6995 = vmatpush1.bf16.msra.mxu0 %v5806
    %6996 = vmatprep.subr.bf16.mxu0 0
    %6997 = vmatpush1.bf16.msra.mxu0 %v5813
    %6998 = vmatprep.subr.bf16.mxu0 0
    %6999 = vmatpush1.bf16.msra.mxu0 %v5820
    %7000 = vmatprep.subr.bf16.mxu0 0
    %7001 = vmatpush1.bf16.msra.mxu0 %v5827
    %7002 = vmatprep.subr.bf16.mxu0 0
    %7003 = vmatpush1.bf16.msra.mxu0 %v5834
    %7004 = vmatprep.subr.bf16.mxu0 0
    %7005 = vmatpush1.bf16.msra.mxu0 %v5841
    %7006 = vmatprep.mubr.bf16.mxu0 %v3546
    %7007 = vmatmul.mubr.bf16.gmra.mrb[0].mxu0 %v3545
    %v7008 = vpop.f32.mrb[0].mxu0
    %v7009 = vadd.f32 %v6969, %v7008
    %v7010 = vpop.f32.mrb[0].mxu0
    %v7011 = vpop.f32.mrb[0].mxu0
    %v7012 = vpop.f32.mrb[0].mxu0
    %7013 = vdwg.mxu0
    %7014 = vmatprep.subr.bf16.mxu0 0
    %7015 = vmatpush1.bf16.msra.mxu0 %v5848
    %7016 = vmatprep.subr.bf16.mxu0 0
    %7017 = vmatpush1.bf16.msra.mxu0 %v5855
    %7018 = vmatprep.subr.bf16.mxu0 0
    %7019 = vmatpush1.bf16.msra.mxu0 %v5862
    %7020 = vmatprep.subr.bf16.mxu0 0
    %7021 = vmatpush1.bf16.msra.mxu0 %v5869
    %7022 = vmatprep.subr.bf16.mxu0 0
    %7023 = vmatpush1.bf16.msra.mxu0 %v5876
    %7024 = vmatprep.subr.bf16.mxu0 0
    %7025 = vmatpush1.bf16.msra.mxu0 %v5883
    %7026 = vmatprep.subr.bf16.mxu0 0
    %7027 = vmatpush1.bf16.msra.mxu0 %v5890
    %7028 = vmatprep.subr.bf16.mxu0 0
    %7029 = vmatpush1.bf16.msra.mxu0 %v5897
    %7030 = vmatprep.subr.bf16.mxu0 0
    %7031 = vmatpush1.bf16.msra.mxu0 %v5904
    %7032 = vmatprep.subr.bf16.mxu0 0
    %7033 = vmatpush1.bf16.msra.mxu0 %v5911
    %7034 = vmatprep.subr.bf16.mxu0 0
    %7035 = vmatpush1.bf16.msra.mxu0 %v5918
    %7036 = vmatprep.subr.bf16.mxu0 0
    %7037 = vmatpush1.bf16.msra.mxu0 %v5925
    %7038 = vmatprep.subr.bf16.mxu0 0
    %7039 = vmatpush1.bf16.msra.mxu0 %v5932
    %7040 = vmatprep.subr.bf16.mxu0 0
    %7041 = vmatpush1.bf16.msra.mxu0 %v5939
    %7042 = vmatprep.subr.bf16.mxu0 0
    %7043 = vmatpush1.bf16.msra.mxu0 %v5946
    %7044 = vmatprep.subr.bf16.mxu0 0
    %7045 = vmatpush1.bf16.msra.mxu0 %v5953
    %7046 = vmatprep.mubr.bf16.mxu0 %v3548
    %7047 = vmatmul.mubr.bf16.gmra.mrb[0].mxu0 %v3547
    %v7048 = vpop.f32.mrb[0].mxu0
    %v7049 = vadd.f32 %v7009, %v7048
    %v7050 = vpop.f32.mrb[0].mxu0
    %v7051 = vpop.f32.mrb[0].mxu0
    %v7052 = vpop.f32.mrb[0].mxu0
    %7053 = vdwg.mxu0
    %v7054 = vtanh.pop %v6560
    %v7055 = vtanh.pop %v6562
    %v7056 = vtanh.pop %v6724
    %v7057 = vtanh.pop %v6726
    %v7058 = vtanh.pop %v6888
    %v7059 = vtanh.pop %v6890
    %v7060 = vtanh.pop %v7049
    %7061 = vst [vmem:[%s18] sm:$0xff] %v7054
    %7062 = vst [vmem:[%s18 + $0x8] sm:$0xff] %v7055
    %7063 = vst [vmem:[%s18 + $0x10] sm:$0xff] %v7056
    %7064 = vst [vmem:[%s18 + $0x18] sm:$0xff] %v7057
    %7065 = vst [vmem:[%s18 + $0x20] sm:$0xff] %v7058
    %7066 = vst [vmem:[%s18 + $0x28] sm:$0xff] %v7059
    %7067 = vst [vmem:[%s18 + $0x30] sm:$0xff] %v7060
    // Predicated region
    $region146: #{generator_forward.1} parent=1 // pred_check
      _
    $region147: #{generator_forward.1} parent=1 // pred_check_branch
      %7069 = sbr.rel (0) target = $region149
    $region148: #{generator_forward.1} parent=1 // pred_region
      _
    $region149: #{generator_forward.1} parent=1 // pred_fallthru
      _
    // Predicated region
    $region150: #{generator_forward.1} parent=1 // pred_check
      _
    $region151: #{generator_forward.1} parent=1 // pred_check_branch
      %7071 = sbr.rel (0) target = $region153
    $region152: #{generator_forward.1} parent=1 // pred_region
      _
    $region153: #{generator_forward.1} parent=1 // pred_fallthru
      _
    %7072 = vsyncpa [#allocation3], 1
    %7073 = vsyncpa [#allocation7], 1
    %7074 = vsyncpa [#allocation10], 1
    %7075 = vsyncpa [#allocation13], 1
    %7076 = vsyncpa [#allocation16], 1
    %7077 = vsyncpa [#allocation19], 1
    %7078 = vsyncpa [#allocation22], 1
    %7079 = vsyncpa [#allocation25], 1
    %7080 = vsyncpa [#allocation28], 1
    %7081 = vsyncpa [#allocation4], 1

</llo_original>
